<compile_context>
chip_gen: v6e
topology: v6e:2x2x1
jax: 0.10.0
libtpu: 0.0.40
codegen_flags: <defaults>
</compile_context>

<pallas_src>
import jax
import jax.numpy as jnp
from jax.experimental import pallas as pl
from jax.experimental.pallas import tpu as pltpu

EPS = 1e-5  # nn.BatchNorm2d default


# --------------------------------------------------------------------------
# shared conv helper (runs inside kernels)
# --------------------------------------------------------------------------
def _conv3x3_acc(xp, w_ref, xw_ref):
    """3x3 / stride-1 conv of one zero-padded image via 3 deep-K matmuls.

    xp     : (H+2, W+2, C)  f32 value (zero-padded input)
    w_ref  : (3, 3*C, Cout) bf16 ref, w_ref[dy][dx*C + ci, co] = W[co, ci, dy, dx]
    xw_ref : (H+2, W, 3*C)  f32 VMEM scratch (width-im2col strip)
    returns (H*W, Cout) f32 accumulator.
    """
    Hp, Wp, C = xp.shape
    H, W = Hp - 2, Wp - 2
    Cout = w_ref.shape[-1]

    # width-im2col: xw[h, w, dx*C + c] = xp[h, w+dx, c]
    # (the only shift-relayout copies; 3 total instead of 9 per-tap slices)
    for dx in range(3):
        xw_ref[:, :, dx * C:(dx + 1) * C] = xp[:, dx:dx + W, :]

    acc = jnp.zeros((H * W, Cout), jnp.float32)
    for dy in range(3):
        # height shift = cheap outer-dim slice; K = 3*C per matmul
        xs = xw_ref[dy:dy + H, :, :].reshape(H * W, 3 * C).astype(jnp.bfloat16)
        acc = acc + jnp.dot(xs, w_ref[dy], preferred_element_type=jnp.float32)
    return acc


# --------------------------------------------------------------------------
# kernels
# --------------------------------------------------------------------------
def conv_stats_kernel(xp_ref, w_ref, y_ref, s_ref, ss_ref, xw_ref):
    """conv1 of one image + per-image partial BN sums."""
    _, H, W, Cout = y_ref.shape
    xpf = xp_ref[0].astype(jnp.float32)                 # (H+2, W+2, Cin)
    acc = _conv3x3_acc(xpf, w_ref, xw_ref)              # (H*W, Cout) f32
    s_ref[...] = jnp.sum(acc, axis=0).reshape(1, 1, Cout)
    ss_ref[...] = jnp.sum(acc * acc, axis=0).reshape(1, 1, Cout)
    y_ref[...] = acc.reshape(1, H, W, Cout).astype(y_ref.dtype)


def bn_relu_conv_stats_kernel(y1_ref, sc_ref, sh_ref, w_ref,
                              y2_ref, s_ref, ss_ref, xp2_ref, xw_ref):
    """BN1(scale/shift) + ReLU + fused zero-pad + conv2 + partial BN sums."""
    _, H, W, C = y1_ref.shape
    Cout = w_ref.shape[-1]

    a = y1_ref[0].astype(jnp.float32)                   # (H, W, C)
    a = a * sc_ref[...].reshape(1, 1, C) + sh_ref[...].reshape(1, 1, C)
    a = jnp.maximum(a, 0.0)

    # fused zero padding for conv2 (no padded HBM copy of the intermediate)
    xp2_ref[...] = jnp.zeros(xp2_ref.shape, xp2_ref.dtype)
    xp2_ref[1:H + 1, 1:W + 1, :] = a

    acc = _conv3x3_acc(xp2_ref[...], w_ref, xw_ref)     # (H*W, Cout) f32
    s_ref[...] = jnp.sum(acc, axis=0).reshape(1, 1, Cout)
    ss_ref[...] = jnp.sum(acc * acc, axis=0).reshape(1, 1, Cout)
    y2_ref[...] = acc.reshape(1, H, W, Cout).astype(y2_ref.dtype)


def bn_add_relu_kernel(y2_ref, res_ref, sc_ref, sh_ref, o_ref):
    """BN2(scale/shift) + residual add + ReLU."""
    C = o_ref.shape[-1]
    a = y2_ref[...].astype(jnp.float32)
    out = a * sc_ref[...].reshape(1, 1, 1, C) + sh_ref[...].reshape(1, 1, 1, C)
    out = out + res_ref[...]
    o_ref[...] = jnp.maximum(out, 0.0)


# --------------------------------------------------------------------------
# wrapper
# --------------------------------------------------------------------------
@jax.jit
def basic_block(x_nchw, w1, g1, b1, w2, g2, b2):
    """BasicBlock.forward (stride=1, downsample=None).  x_nchw: (N, C, H, W)."""
    x = jnp.transpose(x_nchw, (0, 2, 3, 1)).astype(jnp.float32)   # NHWC (residual)
    N, H, W, Cin = x.shape
    planes = w1.shape[0]
    if Cin != planes:
        raise NotImplementedError("identity path requires inplanes == planes")

    def prep_w(w):
        # (Cout, Cin, 3, 3) OIHW -> HWIO -> (3[dy], 3*Cin [dx-major], Cout), bf16
        w_hwio = jnp.transpose(w, (2, 3, 1, 0)).astype(jnp.bfloat16)
        return w_hwio.reshape(3, 3 * w.shape[1], w.shape[0])

    w1p, w2p = prep_w(w1), prep_w(w2)

    # Zero-pad the conv1 input once and cast the matmul operand to bf16
    # (halves HBM read traffic).  conv2's padding is fused inside kernel 2.
    # TODO(synk): fuse this pad into kernel 1 via halo index_maps as well.
    xp = jnp.pad(x, ((0, 0), (1, 1), (1, 1), (0, 0))).astype(jnp.bfloat16)

    cparams = pltpu.CompilerParams(
        dimension_semantics=("parallel",),     # shards images across TCs on v7x
        vmem_limit_bytes=32 * 1024 * 1024,
    )

    act_spec = lambda c: pl.BlockSpec((1, H, W, c), lambda n: (n, 0, 0, 0))
    stat_spec = lambda c: pl.BlockSpec((1, 1, c), lambda n: (n, 0, 0))
    vec_spec = lambda c: pl.BlockSpec((1, c), lambda n: (0, 0))
    w_spec = lambda ci, co: pl.BlockSpec((3, 3 * ci, co), lambda n: (0, 0, 0))

    # ---- kernel 1: conv1 + per-image partial BN sums ------------------------
    y1, s1, ss1 = pl.pallas_call(
        conv_stats_kernel,
        grid=(N,),
        in_specs=[pl.BlockSpec((1, H + 2, W + 2, Cin), lambda n: (n, 0, 0, 0)),
                  w_spec(Cin, planes)],
        out_specs=[act_spec(planes), stat_spec(planes), stat_spec(planes)],
        out_shape=[jax.ShapeDtypeStruct((N, H, W, planes), jnp.bfloat16),
                   jax.ShapeDtypeStruct((N, 1, planes), jnp.float32),
                   jax.ShapeDtypeStruct((N, 1, planes), jnp.float32)],
        scratch_shapes=[pltpu.VMEM((H + 2, W, 3 * Cin), jnp.float32)],
        compiler_params=cparams,
    )(xp, w1p)

    # ---- tiny JAX glue: reduce partial sums -> BN scale/shift ---------------
    M = N * H * W

    def bn_affine(s, ss, gamma, beta):
        tot = jnp.sum(s.reshape(N, -1), axis=0)
        totsq = jnp.sum(ss.reshape(N, -1), axis=0)
        mean = tot / M
        var = totsq / M - mean * mean          # biased variance (training mode)
        scale = gamma.astype(jnp.float32) * jax.lax.rsqrt(var + EPS)
        shift = beta.astype(jnp.float32) - mean * scale
        return scale.reshape(1, -1), shift.reshape(1, -1)

    sc1, sh1 = bn_affine(s1, ss1, g1, b1)

    # ---- kernel 2: BN1 + ReLU + (in-kernel pad) conv2 + partial BN sums -----
    y2, s2, ss2 = pl.pallas_call(
        bn_relu_conv_stats_kernel,
        grid=(N,),
        in_specs=[act_spec(planes), vec_spec(planes), vec_spec(planes),
                  w_spec(planes, planes)],
        out_specs=[act_spec(planes), stat_spec(planes), stat_spec(planes)],
        out_shape=[jax.ShapeDtypeStruct((N, H, W, planes), jnp.bfloat16),
                   jax.ShapeDtypeStruct((N, 1, planes), jnp.float32),
                   jax.ShapeDtypeStruct((N, 1, planes), jnp.float32)],
        scratch_shapes=[pltpu.VMEM((H + 2, W + 2, planes), jnp.float32),
                        pltpu.VMEM((H + 2, W, 3 * planes), jnp.float32)],
        compiler_params=cparams,
    )(y1, sc1, sh1, w2p)

    sc2, sh2 = bn_affine(s2, ss2, g2, b2)

    # ---- kernel 3: BN2 + residual add + ReLU --------------------------------
    out = pl.pallas_call(
        bn_add_relu_kernel,
        grid=(N,),
        in_specs=[act_spec(planes), act_spec(planes),
                  vec_spec(planes), vec_spec(planes)],
        out_specs=act_spec(planes),
        out_shape=jax.ShapeDtypeStruct((N, H, W, planes), jnp.float32),
        compiler_params=cparams,
    )(y2, x, sc2, sh2)

    return jnp.transpose(out, (0, 3, 1, 2))               # NHWC -> NCHW


# ----------------------- pure-JAX reference (for checking) -----------------
def _ref_basic_block(x, w1, g1, b1, w2, g2, b2):
    def conv(x, w):
        return jax.lax.conv_general_dilated(
            x, w, window_strides=(1, 1), padding=((1, 1), (1, 1)),
            dimension_numbers=('NCHW', 'OIHW', 'NCHW'))

    def bn(x, g, b):
        mean = x.mean(axis=(0, 2, 3), keepdims=True)
        var = ((x - mean) ** 2).mean(axis=(0, 2, 3), keepdims=True)
        xhat = (x - mean) / jnp.sqrt(var + EPS)
        return xhat * g.reshape(1, -1, 1, 1) + b.reshape(1, -1, 1, 1)

    out = jax.nn.relu(bn(conv(x, w1), g1, b1))
    out = bn(conv(out, w2), g2, b2) + x
    return jax.nn.relu(out)


if __name__ == "__main__":
    key = jax.random.PRNGKey(0)
    kx, k1, k2, k3, k4, k5, k6 = jax.random.split(key, 7)

    N, C, H, W = 2, 4, 16, 16          # inplanes = planes = 4, stride = 1
    planes = C

    x = jax.random.normal(kx, (N, C, H, W), jnp.float32)
    w1 = 0.1 * jax.random.normal(k1, (planes, C, 3, 3), jnp.float32)
    w2 = 0.1 * jax.random.normal(k2, (planes, planes, 3, 3), jnp.float32)
    g1 = 1.0 + 0.1 * jax.random.normal(k3, (planes,), jnp.float32)
    b1 = 0.1 * jax.random.normal(k4, (planes,), jnp.float32)
    g2 = 1.0 + 0.1 * jax.random.normal(k5, (planes,), jnp.float32)
    b2 = 0.1 * jax.random.normal(k6, (planes,), jnp.float32)

    out = jax.block_until_ready(basic_block(x, w1, g1, b1, w2, g2, b2))
    ref = _ref_basic_block(x, w1, g1, b1, w2, g2, b2)

    assert out.shape == (N, C, H, W)
    err = float(jnp.max(jnp.abs(out - ref)))
    # bf16 matmul operands / bf16 intermediate activations -> looser tolerance
    # than the pure-f32 version (see perf review).
    assert jnp.allclose(out, ref, atol=5e-2, rtol=5e-2), f"max err {err}"

    print("KERNEL_OK")
</pallas_src>

<mosaic_0001>
module attributes {stable_mosaic.version = 11 : i64} {
  func.func @conv_stats_kernel(%arg0: i32, %arg1: memref<1x18x18x4xbf16, #tpu.memory_space<vmem>>, %arg2: memref<3x12x4xbf16, #tpu.memory_space<vmem>>, %arg3: memref<1x16x16x4xbf16, #tpu.memory_space<vmem>>, %arg4: memref<1x1x4xf32, #tpu.memory_space<vmem>>, %arg5: memref<1x1x4xf32, #tpu.memory_space<vmem>>, %arg6: memref<18x16x12xf32, #tpu.memory_space<vmem>>) attributes {dimension_semantics = [#tpu.dimension_semantics<parallel>], iteration_bounds = array<i64: 2>, scalar_prefetch = 0 : i64, scratch_operands = 1 : i64, tpu.core_type = #tpu.core_type<tc>, window_params = [{transform_indices = @transform_0, window_bounds = array<i64: 1, 18, 18, 4>}, {pipeline_mode = #tpu.pipeline_mode<synchronous>, transform_indices = @transform_1, window_bounds = array<i64: 3, 12, 4>}, {transform_indices = @transform_2, window_bounds = array<i64: 1, 16, 16, 4>}, {transform_indices = @transform_3, window_bounds = array<i64: 1, 1, 4>}, {transform_indices = @transform_4, window_bounds = array<i64: 1, 1, 4>}]} {
    %c0 = arith.constant 0 : index
    %c0_0 = arith.constant 0 : index
    %c0_1 = arith.constant 0 : index
    %c0_2 = arith.constant 0 : index
    %0 = vector.load %arg1[%c0, %c0_0, %c0_1, %c0_2] : memref<1x18x18x4xbf16, #tpu.memory_space<vmem>>, vector<1x18x18x4xbf16>
    %1 = vector.shape_cast %0 : vector<1x18x18x4xbf16> to vector<18x18x4xbf16>
    %2 = arith.extf %1 : vector<18x18x4xbf16> to vector<18x18x4xf32>
    %3 = vector.extract_strided_slice %2 {offsets = [0, 0, 0], sizes = [18, 16, 4], strides = [1, 1, 1]} : vector<18x18x4xf32> to vector<18x16x4xf32>
    %c0_3 = arith.constant 0 : index
    %c0_4 = arith.constant 0 : index
    %c0_5 = arith.constant 0 : index
    %4 = vector.load %arg6[%c0_3, %c0_4, %c0_5] : memref<18x16x12xf32, #tpu.memory_space<vmem>>, vector<18x16x4xf32>
    tpu.vector_store %arg6[%c0_3, %c0_4, %c0_5], %3 {strides = array<i32>} : memref<18x16x12xf32, #tpu.memory_space<vmem>>, vector<18x16x4xf32>,
    %5 = vector.extract_strided_slice %2 {offsets = [0, 1, 0], sizes = [18, 16, 4], strides = [1, 1, 1]} : vector<18x18x4xf32> to vector<18x16x4xf32>
    %c0_6 = arith.constant 0 : index
    %c0_7 = arith.constant 0 : index
    %c4 = arith.constant 4 : index
    %6 = vector.load %arg6[%c0_6, %c0_7, %c4] : memref<18x16x12xf32, #tpu.memory_space<vmem>>, vector<18x16x4xf32>
    tpu.vector_store %arg6[%c0_6, %c0_7, %c4], %5 {strides = array<i32>} : memref<18x16x12xf32, #tpu.memory_space<vmem>>, vector<18x16x4xf32>,
    %7 = vector.extract_strided_slice %2 {offsets = [0, 2, 0], sizes = [18, 16, 4], strides = [1, 1, 1]} : vector<18x18x4xf32> to vector<18x16x4xf32>
    %c0_8 = arith.constant 0 : index
    %c0_9 = arith.constant 0 : index
    %c8 = arith.constant 8 : index
    %8 = vector.load %arg6[%c0_8, %c0_9, %c8] : memref<18x16x12xf32, #tpu.memory_space<vmem>>, vector<18x16x4xf32>
    tpu.vector_store %arg6[%c0_8, %c0_9, %c8], %7 {strides = array<i32>} : memref<18x16x12xf32, #tpu.memory_space<vmem>>, vector<18x16x4xf32>,
    %cst = arith.constant 0.000000e+00 : f32
    %9 = vector.broadcast %cst : f32 to vector<256x4xf32>
    %c0_10 = arith.constant 0 : index
    %c0_11 = arith.constant 0 : index
    %c0_12 = arith.constant 0 : index
    %10 = vector.load %arg6[%c0_10, %c0_11, %c0_12] : memref<18x16x12xf32, #tpu.memory_space<vmem>>, vector<16x16x12xf32>
    %11 = vector.shape_cast %10 : vector<16x16x12xf32> to vector<256x12xf32>
    %12 = arith.truncf %11 : vector<256x12xf32> to vector<256x12xbf16>
    %c0_13 = arith.constant 0 : index
    %c0_14 = arith.constant 0 : index
    %c0_15 = arith.constant 0 : index
    %13 = vector.load %arg2[%c0_13, %c0_14, %c0_15] : memref<3x12x4xbf16, #tpu.memory_space<vmem>>, vector<1x12x4xbf16>
    %14 = vector.shape_cast %13 : vector<1x12x4xbf16> to vector<12x4xbf16>
    %cst_16 = arith.constant dense<0.000000e+00> : vector<256x4xf32>
    %15 = tpu.matmul %12, %14, %cst_16 {dimension_numbers = #tpu.dot_dimension_numbers<[1], [0], [0], [1], [0, 0, 1, 1], [], []>} : vector<256x12xbf16>, vector<12x4xbf16>, vector<256x4xf32> -> vector<256x4xf32>
    %16 = arith.addf %9, %15 : vector<256x4xf32>
    %c1 = arith.constant 1 : index
    %c0_17 = arith.constant 0 : index
    %c0_18 = arith.constant 0 : index
    %17 = vector.load %arg6[%c1, %c0_17, %c0_18] : memref<18x16x12xf32, #tpu.memory_space<vmem>>, vector<16x16x12xf32>
    %18 = vector.shape_cast %17 : vector<16x16x12xf32> to vector<256x12xf32>
    %19 = arith.truncf %18 : vector<256x12xf32> to vector<256x12xbf16>
    %c1_19 = arith.constant 1 : index
    %c0_20 = arith.constant 0 : index
    %c0_21 = arith.constant 0 : index
    %20 = vector.load %arg2[%c1_19, %c0_20, %c0_21] : memref<3x12x4xbf16, #tpu.memory_space<vmem>>, vector<1x12x4xbf16>
    %21 = vector.shape_cast %20 : vector<1x12x4xbf16> to vector<12x4xbf16>
    %cst_22 = arith.constant dense<0.000000e+00> : vector<256x4xf32>
    %22 = tpu.matmul %19, %21, %cst_22 {dimension_numbers = #tpu.dot_dimension_numbers<[1], [0], [0], [1], [0, 0, 1, 1], [], []>} : vector<256x12xbf16>, vector<12x4xbf16>, vector<256x4xf32> -> vector<256x4xf32>
    %23 = arith.addf %16, %22 : vector<256x4xf32>
    %c2 = arith.constant 2 : index
    %c0_23 = arith.constant 0 : index
    %c0_24 = arith.constant 0 : index
    %24 = vector.load %arg6[%c2, %c0_23, %c0_24] : memref<18x16x12xf32, #tpu.memory_space<vmem>>, vector<16x16x12xf32>
    %25 = vector.shape_cast %24 : vector<16x16x12xf32> to vector<256x12xf32>
    %26 = arith.truncf %25 : vector<256x12xf32> to vector<256x12xbf16>
    %c2_25 = arith.constant 2 : index
    %c0_26 = arith.constant 0 : index
    %c0_27 = arith.constant 0 : index
    %27 = vector.load %arg2[%c2_25, %c0_26, %c0_27] : memref<3x12x4xbf16, #tpu.memory_space<vmem>>, vector<1x12x4xbf16>
    %28 = vector.shape_cast %27 : vector<1x12x4xbf16> to vector<12x4xbf16>
    %cst_28 = arith.constant dense<0.000000e+00> : vector<256x4xf32>
    %29 = tpu.matmul %26, %28, %cst_28 {dimension_numbers = #tpu.dot_dimension_numbers<[1], [0], [0], [1], [0, 0, 1, 1], [], []>} : vector<256x12xbf16>, vector<12x4xbf16>, vector<256x4xf32> -> vector<256x4xf32>
    %30 = arith.addf %23, %29 : vector<256x4xf32>
    %cst_29 = arith.constant dense<0.000000e+00> : vector<4xf32>
    %31 = vector.multi_reduction <add>, %30, %cst_29 [0] : vector<256x4xf32> to vector<4xf32>
    %32 = vector.shape_cast %31 : vector<4xf32> to vector<1x1x4xf32>
    %c0_30 = arith.constant 0 : index
    %c0_31 = arith.constant 0 : index
    %c0_32 = arith.constant 0 : index
    %33 = vector.load %arg4[%c0_30, %c0_31, %c0_32] : memref<1x1x4xf32, #tpu.memory_space<vmem>>, vector<1x1x4xf32>
    tpu.vector_store %arg4[%c0_30, %c0_31, %c0_32], %32 {strides = array<i32>} : memref<1x1x4xf32, #tpu.memory_space<vmem>>, vector<1x1x4xf32>,
    %34 = arith.mulf %30, %30 : vector<256x4xf32>
    %cst_33 = arith.constant dense<0.000000e+00> : vector<4xf32>
    %35 = vector.multi_reduction <add>, %34, %cst_33 [0] : vector<256x4xf32> to vector<4xf32>
    %36 = vector.shape_cast %35 : vector<4xf32> to vector<1x1x4xf32>
    %c0_34 = arith.constant 0 : index
    %c0_35 = arith.constant 0 : index
    %c0_36 = arith.constant 0 : index
    %37 = vector.load %arg5[%c0_34, %c0_35, %c0_36] : memref<1x1x4xf32, #tpu.memory_space<vmem>>, vector<1x1x4xf32>
    tpu.vector_store %arg5[%c0_34, %c0_35, %c0_36], %36 {strides = array<i32>} : memref<1x1x4xf32, #tpu.memory_space<vmem>>, vector<1x1x4xf32>,
    %38 = vector.shape_cast %30 : vector<256x4xf32> to vector<1x16x16x4xf32>
    %39 = arith.truncf %38 : vector<1x16x16x4xf32> to vector<1x16x16x4xbf16>
    %c0_37 = arith.constant 0 : index
    %c0_38 = arith.constant 0 : index
    %c0_39 = arith.constant 0 : index
    %c0_40 = arith.constant 0 : index
    %40 = vector.load %arg3[%c0_37, %c0_38, %c0_39, %c0_40] : memref<1x16x16x4xbf16, #tpu.memory_space<vmem>>, vector<1x16x16x4xbf16>
    tpu.vector_store %arg3[%c0_37, %c0_38, %c0_39, %c0_40], %39 {strides = array<i32>} : memref<1x16x16x4xbf16, #tpu.memory_space<vmem>>, vector<1x16x16x4xbf16>,
    return
  }
  func.func @transform_0(%arg0: i32) -> (i32, i32, i32, i32) {
    %c0_i32 = arith.constant 0 : i32
    %c0_i32_0 = arith.constant 0 : i32
    %c0_i32_1 = arith.constant 0 : i32
    %c0_i32_2 = arith.constant 0 : i32
    return %arg0, %c0_i32, %c0_i32_0, %c0_i32_1 : i32, i32, i32, i32
  }
  func.func @transform_1(%arg0: i32) -> (i32, i32, i32) {
    %c0_i32 = arith.constant 0 : i32
    %c0_i32_0 = arith.constant 0 : i32
    %c0_i32_1 = arith.constant 0 : i32
    %c0_i32_2 = arith.constant 0 : i32
    return %c0_i32, %c0_i32_0, %c0_i32_1 : i32, i32, i32
  }
  func.func @transform_2(%arg0: i32) -> (i32, i32, i32, i32) {
    %c0_i32 = arith.constant 0 : i32
    %c0_i32_0 = arith.constant 0 : i32
    %c0_i32_1 = arith.constant 0 : i32
    %c0_i32_2 = arith.constant 0 : i32
    return %arg0, %c0_i32, %c0_i32_0, %c0_i32_1 : i32, i32, i32, i32
  }
  func.func @transform_3(%arg0: i32) -> (i32, i32, i32) {
    %c0_i32 = arith.constant 0 : i32
    %c0_i32_0 = arith.constant 0 : i32
    %c0_i32_1 = arith.constant 0 : i32
    return %arg0, %c0_i32, %c0_i32_0 : i32, i32, i32
  }
  func.func @transform_4(%arg0: i32) -> (i32, i32, i32) {
    %c0_i32 = arith.constant 0 : i32
    %c0_i32_0 = arith.constant 0 : i32
    %c0_i32_1 = arith.constant 0 : i32
    return %arg0, %c0_i32, %c0_i32_0 : i32, i32, i32
  }
}

module attributes {stable_mosaic.version = 11 : i64} {
  func.func @bn_add_relu_kernel(%arg0: i32, %arg1: memref<1x16x16x4xbf16, #tpu.memory_space<vmem>>, %arg2: memref<1x16x16x4xf32, #tpu.memory_space<vmem>>, %arg3: memref<1x4xf32, #tpu.memory_space<vmem>>, %arg4: memref<1x4xf32, #tpu.memory_space<vmem>>, %arg5: memref<1x16x16x4xf32, #tpu.memory_space<vmem>>) attributes {dimension_semantics = [#tpu.dimension_semantics<parallel>], iteration_bounds = array<i64: 2>, scalar_prefetch = 0 : i64, scratch_operands = 0 : i64, tpu.core_type = #tpu.core_type<tc>, window_params = [{transform_indices = @transform_0, window_bounds = array<i64: 1, 16, 16, 4>}, {transform_indices = @transform_1, window_bounds = array<i64: 1, 16, 16, 4>}, {pipeline_mode = #tpu.pipeline_mode<synchronous>, transform_indices = @transform_2, window_bounds = array<i64: 1, 4>}, {pipeline_mode = #tpu.pipeline_mode<synchronous>, transform_indices = @transform_3, window_bounds = array<i64: 1, 4>}, {transform_indices = @transform_4, window_bounds = array<i64: 1, 16, 16, 4>}]} {
    %c0 = arith.constant 0 : index
    %c0_0 = arith.constant 0 : index
    %c0_1 = arith.constant 0 : index
    %c0_2 = arith.constant 0 : index
    %0 = vector.load %arg1[%c0, %c0_0, %c0_1, %c0_2] : memref<1x16x16x4xbf16, #tpu.memory_space<vmem>>, vector<1x16x16x4xbf16>
    %1 = arith.extf %0 : vector<1x16x16x4xbf16> to vector<1x16x16x4xf32>
    %c0_3 = arith.constant 0 : index
    %c0_4 = arith.constant 0 : index
    %2 = vector.load %arg3[%c0_3, %c0_4] : memref<1x4xf32, #tpu.memory_space<vmem>>, vector<1x4xf32>
    %3 = vector.shape_cast %2 : vector<1x4xf32> to vector<1x1x1x4xf32>
    %4 = vector.broadcast %3 : vector<1x1x1x4xf32> to vector<1x16x16x4xf32>
    %5 = arith.mulf %1, %4 : vector<1x16x16x4xf32>
    %c0_5 = arith.constant 0 : index
    %c0_6 = arith.constant 0 : index
    %6 = vector.load %arg4[%c0_5, %c0_6] : memref<1x4xf32, #tpu.memory_space<vmem>>, vector<1x4xf32>
    %7 = vector.shape_cast %6 : vector<1x4xf32> to vector<1x1x1x4xf32>
    %8 = vector.broadcast %7 : vector<1x1x1x4xf32> to vector<1x16x16x4xf32>
    %9 = arith.addf %5, %8 : vector<1x16x16x4xf32>
    %c0_7 = arith.constant 0 : index
    %c0_8 = arith.constant 0 : index
    %c0_9 = arith.constant 0 : index
    %c0_10 = arith.constant 0 : index
    %10 = vector.load %arg2[%c0_7, %c0_8, %c0_9, %c0_10] : memref<1x16x16x4xf32, #tpu.memory_space<vmem>>, vector<1x16x16x4xf32>
    %11 = arith.addf %9, %10 : vector<1x16x16x4xf32>
    %cst = arith.constant 0.000000e+00 : f32
    %12 = vector.broadcast %cst : f32 to vector<1x16x16x4xf32>
    %13 = arith.maximumf %11, %12 : vector<1x16x16x4xf32>
    %c0_11 = arith.constant 0 : index
    %c0_12 = arith.constant 0 : index
    %c0_13 = arith.constant 0 : index
    %c0_14 = arith.constant 0 : index
    %14 = vector.load %arg5[%c0_11, %c0_12, %c0_13, %c0_14] : memref<1x16x16x4xf32, #tpu.memory_space<vmem>>, vector<1x16x16x4xf32>
    tpu.vector_store %arg5[%c0_11, %c0_12, %c0_13, %c0_14], %13 {strides = array<i32>} : memref<1x16x16x4xf32, #tpu.memory_space<vmem>>, vector<1x16x16x4xf32>,
    return
  }
  func.func @transform_0(%arg0: i32) -> (i32, i32, i32, i32) {
    %c0_i32 = arith.constant 0 : i32
    %c0_i32_0 = arith.constant 0 : i32
    %c0_i32_1 = arith.constant 0 : i32
    %c0_i32_2 = arith.constant 0 : i32
    return %arg0, %c0_i32, %c0_i32_0, %c0_i32_1 : i32, i32, i32, i32
  }
  func.func @transform_1(%arg0: i32) -> (i32, i32, i32, i32) {
    %c0_i32 = arith.constant 0 : i32
    %c0_i32_0 = arith.constant 0 : i32
    %c0_i32_1 = arith.constant 0 : i32
    %c0_i32_2 = arith.constant 0 : i32
    return %arg0, %c0_i32, %c0_i32_0, %c0_i32_1 : i32, i32, i32, i32
  }
  func.func @transform_2(%arg0: i32) -> (i32, i32) {
    %c0_i32 = arith.constant 0 : i32
    %c0_i32_0 = arith.constant 0 : i32
    %c0_i32_1 = arith.constant 0 : i32
    return %c0_i32, %c0_i32_0 : i32, i32
  }
  func.func @transform_3(%arg0: i32) -> (i32, i32) {
    %c0_i32 = arith.constant 0 : i32
    %c0_i32_0 = arith.constant 0 : i32
    %c0_i32_1 = arith.constant 0 : i32
    return %c0_i32, %c0_i32_0 : i32, i32
  }
  func.func @transform_4(%arg0: i32) -> (i32, i32, i32, i32) {
    %c0_i32 = arith.constant 0 : i32
    %c0_i32_0 = arith.constant 0 : i32
    %c0_i32_1 = arith.constant 0 : i32
    %c0_i32_2 = arith.constant 0 : i32
    return %arg0, %c0_i32, %c0_i32_0, %c0_i32_1 : i32, i32, i32, i32
  }
}

module attributes {stable_mosaic.version = 11 : i64} {
  func.func @bn_relu_conv_stats_kernel(%arg0: i32, %arg1: memref<1x16x16x4xbf16, #tpu.memory_space<vmem>>, %arg2: memref<1x4xf32, #tpu.memory_space<vmem>>, %arg3: memref<1x4xf32, #tpu.memory_space<vmem>>, %arg4: memref<3x12x4xbf16, #tpu.memory_space<vmem>>, %arg5: memref<1x16x16x4xbf16, #tpu.memory_space<vmem>>, %arg6: memref<1x1x4xf32, #tpu.memory_space<vmem>>, %arg7: memref<1x1x4xf32, #tpu.memory_space<vmem>>, %arg8: memref<18x18x4xf32, #tpu.memory_space<vmem>>, %arg9: memref<18x16x12xf32, #tpu.memory_space<vmem>>) attributes {dimension_semantics = [#tpu.dimension_semantics<parallel>], iteration_bounds = array<i64: 2>, scalar_prefetch = 0 : i64, scratch_operands = 2 : i64, tpu.core_type = #tpu.core_type<tc>, window_params = [{transform_indices = @transform_0, window_bounds = array<i64: 1, 16, 16, 4>}, {pipeline_mode = #tpu.pipeline_mode<synchronous>, transform_indices = @transform_1, window_bounds = array<i64: 1, 4>}, {pipeline_mode = #tpu.pipeline_mode<synchronous>, transform_indices = @transform_2, window_bounds = array<i64: 1, 4>}, {pipeline_mode = #tpu.pipeline_mode<synchronous>, transform_indices = @transform_3, window_bounds = array<i64: 3, 12, 4>}, {transform_indices = @transform_4, window_bounds = array<i64: 1, 16, 16, 4>}, {transform_indices = @transform_5, window_bounds = array<i64: 1, 1, 4>}, {transform_indices = @transform_6, window_bounds = array<i64: 1, 1, 4>}]} {
    %c0 = arith.constant 0 : index
    %c0_0 = arith.constant 0 : index
    %c0_1 = arith.constant 0 : index
    %c0_2 = arith.constant 0 : index
    %0 = vector.load %arg1[%c0, %c0_0, %c0_1, %c0_2] : memref<1x16x16x4xbf16, #tpu.memory_space<vmem>>, vector<1x16x16x4xbf16>
    %1 = vector.shape_cast %0 : vector<1x16x16x4xbf16> to vector<16x16x4xbf16>
    %2 = arith.extf %1 : vector<16x16x4xbf16> to vector<16x16x4xf32>
    %c0_3 = arith.constant 0 : index
    %c0_4 = arith.constant 0 : index
    %3 = vector.load %arg2[%c0_3, %c0_4] : memref<1x4xf32, #tpu.memory_space<vmem>>, vector<1x4xf32>
    %4 = vector.shape_cast %3 : vector<1x4xf32> to vector<1x1x4xf32>
    %5 = vector.broadcast %4 : vector<1x1x4xf32> to vector<16x16x4xf32>
    %6 = arith.mulf %2, %5 : vector<16x16x4xf32>
    %c0_5 = arith.constant 0 : index
    %c0_6 = arith.constant 0 : index
    %7 = vector.load %arg3[%c0_5, %c0_6] : memref<1x4xf32, #tpu.memory_space<vmem>>, vector<1x4xf32>
    %8 = vector.shape_cast %7 : vector<1x4xf32> to vector<1x1x4xf32>
    %9 = vector.broadcast %8 : vector<1x1x4xf32> to vector<16x16x4xf32>
    %10 = arith.addf %6, %9 : vector<16x16x4xf32>
    %cst = arith.constant 0.000000e+00 : f32
    %11 = vector.broadcast %cst : f32 to vector<16x16x4xf32>
    %12 = arith.maximumf %10, %11 : vector<16x16x4xf32>
    %cst_7 = arith.constant 0.000000e+00 : f32
    %13 = vector.broadcast %cst_7 : f32 to vector<18x18x4xf32>
    %c0_8 = arith.constant 0 : index
    %c0_9 = arith.constant 0 : index
    %c0_10 = arith.constant 0 : index
    %14 = vector.load %arg8[%c0_8, %c0_9, %c0_10] : memref<18x18x4xf32, #tpu.memory_space<vmem>>, vector<18x18x4xf32>
    tpu.vector_store %arg8[%c0_8, %c0_9, %c0_10], %13 {strides = array<i32>} : memref<18x18x4xf32, #tpu.memory_space<vmem>>, vector<18x18x4xf32>,
    %c1 = arith.constant 1 : index
    %c1_11 = arith.constant 1 : index
    %c0_12 = arith.constant 0 : index
    %15 = vector.load %arg8[%c1, %c1_11, %c0_12] : memref<18x18x4xf32, #tpu.memory_space<vmem>>, vector<16x16x4xf32>
    tpu.vector_store %arg8[%c1, %c1_11, %c0_12], %12 {strides = array<i32>} : memref<18x18x4xf32, #tpu.memory_space<vmem>>, vector<16x16x4xf32>,
    %c0_13 = arith.constant 0 : index
    %c0_14 = arith.constant 0 : index
    %c0_15 = arith.constant 0 : index
    %16 = vector.load %arg8[%c0_13, %c0_14, %c0_15] : memref<18x18x4xf32, #tpu.memory_space<vmem>>, vector<18x18x4xf32>
    %17 = vector.extract_strided_slice %16 {offsets = [0, 0, 0], sizes = [18, 16, 4], strides = [1, 1, 1]} : vector<18x18x4xf32> to vector<18x16x4xf32>
    %c0_16 = arith.constant 0 : index
    %c0_17 = arith.constant 0 : index
    %c0_18 = arith.constant 0 : index
    %18 = vector.load %arg9[%c0_16, %c0_17, %c0_18] : memref<18x16x12xf32, #tpu.memory_space<vmem>>, vector<18x16x4xf32>
    tpu.vector_store %arg9[%c0_16, %c0_17, %c0_18], %17 {strides = array<i32>} : memref<18x16x12xf32, #tpu.memory_space<vmem>>, vector<18x16x4xf32>,
    %19 = vector.extract_strided_slice %16 {offsets = [0, 1, 0], sizes = [18, 16, 4], strides = [1, 1, 1]} : vector<18x18x4xf32> to vector<18x16x4xf32>
    %c0_19 = arith.constant 0 : index
    %c0_20 = arith.constant 0 : index
    %c4 = arith.constant 4 : index
    %20 = vector.load %arg9[%c0_19, %c0_20, %c4] : memref<18x16x12xf32, #tpu.memory_space<vmem>>, vector<18x16x4xf32>
    tpu.vector_store %arg9[%c0_19, %c0_20, %c4], %19 {strides = array<i32>} : memref<18x16x12xf32, #tpu.memory_space<vmem>>, vector<18x16x4xf32>,
    %21 = vector.extract_strided_slice %16 {offsets = [0, 2, 0], sizes = [18, 16, 4], strides = [1, 1, 1]} : vector<18x18x4xf32> to vector<18x16x4xf32>
    %c0_21 = arith.constant 0 : index
    %c0_22 = arith.constant 0 : index
    %c8 = arith.constant 8 : index
    %22 = vector.load %arg9[%c0_21, %c0_22, %c8] : memref<18x16x12xf32, #tpu.memory_space<vmem>>, vector<18x16x4xf32>
    tpu.vector_store %arg9[%c0_21, %c0_22, %c8], %21 {strides = array<i32>} : memref<18x16x12xf32, #tpu.memory_space<vmem>>, vector<18x16x4xf32>,
    %cst_23 = arith.constant 0.000000e+00 : f32
    %23 = vector.broadcast %cst_23 : f32 to vector<256x4xf32>
    %c0_24 = arith.constant 0 : index
    %c0_25 = arith.constant 0 : index
    %c0_26 = arith.constant 0 : index
    %24 = vector.load %arg9[%c0_24, %c0_25, %c0_26] : memref<18x16x12xf32, #tpu.memory_space<vmem>>, vector<16x16x12xf32>
    %25 = vector.shape_cast %24 : vector<16x16x12xf32> to vector<256x12xf32>
    %26 = arith.truncf %25 : vector<256x12xf32> to vector<256x12xbf16>
    %c0_27 = arith.constant 0 : index
    %c0_28 = arith.constant 0 : index
    %c0_29 = arith.constant 0 : index
    %27 = vector.load %arg4[%c0_27, %c0_28, %c0_29] : memref<3x12x4xbf16, #tpu.memory_space<vmem>>, vector<1x12x4xbf16>
    %28 = vector.shape_cast %27 : vector<1x12x4xbf16> to vector<12x4xbf16>
    %cst_30 = arith.constant dense<0.000000e+00> : vector<256x4xf32>
    %29 = tpu.matmul %26, %28, %cst_30 {dimension_numbers = #tpu.dot_dimension_numbers<[1], [0], [0], [1], [0, 0, 1, 1], [], []>} : vector<256x12xbf16>, vector<12x4xbf16>, vector<256x4xf32> -> vector<256x4xf32>
    %30 = arith.addf %23, %29 : vector<256x4xf32>
    %c1_31 = arith.constant 1 : index
    %c0_32 = arith.constant 0 : index
    %c0_33 = arith.constant 0 : index
    %31 = vector.load %arg9[%c1_31, %c0_32, %c0_33] : memref<18x16x12xf32, #tpu.memory_space<vmem>>, vector<16x16x12xf32>
    %32 = vector.shape_cast %31 : vector<16x16x12xf32> to vector<256x12xf32>
    %33 = arith.truncf %32 : vector<256x12xf32> to vector<256x12xbf16>
    %c1_34 = arith.constant 1 : index
    %c0_35 = arith.constant 0 : index
    %c0_36 = arith.constant 0 : index
    %34 = vector.load %arg4[%c1_34, %c0_35, %c0_36] : memref<3x12x4xbf16, #tpu.memory_space<vmem>>, vector<1x12x4xbf16>
    %35 = vector.shape_cast %34 : vector<1x12x4xbf16> to vector<12x4xbf16>
    %cst_37 = arith.constant dense<0.000000e+00> : vector<256x4xf32>
    %36 = tpu.matmul %33, %35, %cst_37 {dimension_numbers = #tpu.dot_dimension_numbers<[1], [0], [0], [1], [0, 0, 1, 1], [], []>} : vector<256x12xbf16>, vector<12x4xbf16>, vector<256x4xf32> -> vector<256x4xf32>
    %37 = arith.addf %30, %36 : vector<256x4xf32>
    %c2 = arith.constant 2 : index
    %c0_38 = arith.constant 0 : index
    %c0_39 = arith.constant 0 : index
    %38 = vector.load %arg9[%c2, %c0_38, %c0_39] : memref<18x16x12xf32, #tpu.memory_space<vmem>>, vector<16x16x12xf32>
    %39 = vector.shape_cast %38 : vector<16x16x12xf32> to vector<256x12xf32>
    %40 = arith.truncf %39 : vector<256x12xf32> to vector<256x12xbf16>
    %c2_40 = arith.constant 2 : index
    %c0_41 = arith.constant 0 : index
    %c0_42 = arith.constant 0 : index
    %41 = vector.load %arg4[%c2_40, %c0_41, %c0_42] : memref<3x12x4xbf16, #tpu.memory_space<vmem>>, vector<1x12x4xbf16>
    %42 = vector.shape_cast %41 : vector<1x12x4xbf16> to vector<12x4xbf16>
    %cst_43 = arith.constant dense<0.000000e+00> : vector<256x4xf32>
    %43 = tpu.matmul %40, %42, %cst_43 {dimension_numbers = #tpu.dot_dimension_numbers<[1], [0], [0], [1], [0, 0, 1, 1], [], []>} : vector<256x12xbf16>, vector<12x4xbf16>, vector<256x4xf32> -> vector<256x4xf32>
    %44 = arith.addf %37, %43 : vector<256x4xf32>
    %cst_44 = arith.constant dense<0.000000e+00> : vector<4xf32>
    %45 = vector.multi_reduction <add>, %44, %cst_44 [0] : vector<256x4xf32> to vector<4xf32>
    %46 = vector.shape_cast %45 : vector<4xf32> to vector<1x1x4xf32>
    %c0_45 = arith.constant 0 : index
    %c0_46 = arith.constant 0 : index
    %c0_47 = arith.constant 0 : index
    %47 = vector.load %arg6[%c0_45, %c0_46, %c0_47] : memref<1x1x4xf32, #tpu.memory_space<vmem>>, vector<1x1x4xf32>
    tpu.vector_store %arg6[%c0_45, %c0_46, %c0_47], %46 {strides = array<i32>} : memref<1x1x4xf32, #tpu.memory_space<vmem>>, vector<1x1x4xf32>,
    %48 = arith.mulf %44, %44 : vector<256x4xf32>
    %cst_48 = arith.constant dense<0.000000e+00> : vector<4xf32>
    %49 = vector.multi_reduction <add>, %48, %cst_48 [0] : vector<256x4xf32> to vector<4xf32>
    %50 = vector.shape_cast %49 : vector<4xf32> to vector<1x1x4xf32>
    %c0_49 = arith.constant 0 : index
    %c0_50 = arith.constant 0 : index
    %c0_51 = arith.constant 0 : index
    %51 = vector.load %arg7[%c0_49, %c0_50, %c0_51] : memref<1x1x4xf32, #tpu.memory_space<vmem>>, vector<1x1x4xf32>
    tpu.vector_store %arg7[%c0_49, %c0_50, %c0_51], %50 {strides = array<i32>} : memref<1x1x4xf32, #tpu.memory_space<vmem>>, vector<1x1x4xf32>,
    %52 = vector.shape_cast %44 : vector<256x4xf32> to vector<1x16x16x4xf32>
    %53 = arith.truncf %52 : vector<1x16x16x4xf32> to vector<1x16x16x4xbf16>
    %c0_52 = arith.constant 0 : index
    %c0_53 = arith.constant 0 : index
    %c0_54 = arith.constant 0 : index
    %c0_55 = arith.constant 0 : index
    %54 = vector.load %arg5[%c0_52, %c0_53, %c0_54, %c0_55] : memref<1x16x16x4xbf16, #tpu.memory_space<vmem>>, vector<1x16x16x4xbf16>
    tpu.vector_store %arg5[%c0_52, %c0_53, %c0_54, %c0_55], %53 {strides = array<i32>} : memref<1x16x16x4xbf16, #tpu.memory_space<vmem>>, vector<1x16x16x4xbf16>,
    return
  }
  func.func @transform_0(%arg0: i32) -> (i32, i32, i32, i32) {
    %c0_i32 = arith.constant 0 : i32
    %c0_i32_0 = arith.constant 0 : i32
    %c0_i32_1 = arith.constant 0 : i32
    %c0_i32_2 = arith.constant 0 : i32
    return %arg0, %c0_i32, %c0_i32_0, %c0_i32_1 : i32, i32, i32, i32
  }
  func.func @transform_1(%arg0: i32) -> (i32, i32) {
    %c0_i32 = arith.constant 0 : i32
    %c0_i32_0 = arith.constant 0 : i32
    %c0_i32_1 = arith.constant 0 : i32
    return %c0_i32, %c0_i32_0 : i32, i32
  }
  func.func @transform_2(%arg0: i32) -> (i32, i32) {
    %c0_i32 = arith.constant 0 : i32
    %c0_i32_0 = arith.constant 0 : i32
    %c0_i32_1 = arith.constant 0 : i32
    return %c0_i32, %c0_i32_0 : i32, i32
  }
  func.func @transform_3(%arg0: i32) -> (i32, i32, i32) {
    %c0_i32 = arith.constant 0 : i32
    %c0_i32_0 = arith.constant 0 : i32
    %c0_i32_1 = arith.constant 0 : i32
    %c0_i32_2 = arith.constant 0 : i32
    return %c0_i32, %c0_i32_0, %c0_i32_1 : i32, i32, i32
  }
  func.func @transform_4(%arg0: i32) -> (i32, i32, i32, i32) {
    %c0_i32 = arith.constant 0 : i32
    %c0_i32_0 = arith.constant 0 : i32
    %c0_i32_1 = arith.constant 0 : i32
    %c0_i32_2 = arith.constant 0 : i32
    return %arg0, %c0_i32, %c0_i32_0, %c0_i32_1 : i32, i32, i32, i32
  }
  func.func @transform_5(%arg0: i32) -> (i32, i32, i32) {
    %c0_i32 = arith.constant 0 : i32
    %c0_i32_0 = arith.constant 0 : i32
    %c0_i32_1 = arith.constant 0 : i32
    return %arg0, %c0_i32, %c0_i32_0 : i32, i32, i32
  }
  func.func @transform_6(%arg0: i32) -> (i32, i32, i32) {
    %c0_i32 = arith.constant 0 : i32
    %c0_i32_0 = arith.constant 0 : i32
    %c0_i32_1 = arith.constant 0 : i32
    return %arg0, %c0_i32, %c0_i32_0 : i32, i32, i32
  }
}

</mosaic_0001>

<llo_original>
// kernel: basic_block.5
$region0: #{basic_block.5}
  #allocation0 [shape = 'u32[]', space=smem, size = 0x4, offset = 0x4, fixed_abs, tag = 'smem constant byte address 0x4 - core index']
  #allocation1 [shape = 'u32[144,128]{1,0:T(1,128)}', space=vmem, size = 0x12000, scoped, tag = 'internal scratch']
  %s0 = inlined_call_operand.vmem [shape: bf16[2,16,16,4], index: 0, kind: input, shape index: {}]
  %s1 = inlined_call_operand.vmem [shape: f32[2,16,16,4], index: 1, kind: input, shape index: {}]
  %s2 = inlined_call_operand.vmem [shape: f32[1,4], index: 2, kind: input, shape index: {}]
  %s3 = inlined_call_operand.vmem [shape: f32[1,4], index: 3, kind: input, shape index: {}]
  %s4 = inlined_call_operand.vmem [shape: f32[2,16,16,4], index: 4, kind: output, shape index: {}]
  %s5 = sld [smem:[#allocation0]]
  $region49: #{basic_block.5} parent=0
    _
  %s7 = ssub.s32 1, %s5
  %s8 = scalar_select 0, %s7, %s5
  loop: start=0, step=1, limit=4
  $region2: #{basic_block.5} parent=0 // loop_pre_header
    _
  $region3: #{basic_block.5} parent=0 // loop_header
    %s10 = sphi 0, %s14
    %p11 = scmp.ge.s32.totalorder %s10, 4
    %s20 = sphi 0, %s22
    %s23 = sphi 0, %s20
    %s24 = sphi 0, %s23
    %s40 = sphi 0, %s24
    %s46 = sphi 0, %s48
    %s49 = sphi 0, %s46
    %s50 = sphi 0, %s49
    %s66 = sphi 0, %s50
    %s70 = sphi 0, %s70
    %s72 = sphi 0, %s70
    %s73 = sphi 0, %s72
    %s87 = sphi 0, %s73
    %s91 = sphi 0, %s91
    %s93 = sphi 0, %s91
    %s94 = sphi 0, %s93
    %s108 = sphi 0, %s94
    %s114 = sphi 0, %s116
    %s117 = sphi 0, %s114
    %s118 = sphi 0, %s117
    %s134 = sphi 0, %s118
  $region4: #{basic_block.5} parent=0 // loop_header_branch
    %13 = sbr.rel (%p11) target = $region8
  $region5: #{basic_block.5} parent=0 // loop_body
    %s15 = ssub.s32 %s10, 1
    %s16 = ssub.s32 %s10, 2
    %s17 = sadd.s32 %s10, 1
    %s18 = ssub.s32 %s10, %s17
    %p19 = scmp.eq.s32.totalorder %s18, 0
    %s21 = sadd.s32 %s20, 1
    %s22 = scalar_select %p19, %s20, %s21
    %p25 = pneg %p19
    %p26 = scmp.eq.s32.totalorder %s10, 1
    %p27 = por %p25, %p26
    %p28 = scmp.ne.s32.totalorder %s20, %s23
    %p29 = scmp.eq.s32.totalorder %s10, 0
    %p30 = por %p28, %p29
    %p31 = scmp.ne.s32.totalorder %s20, %s23
    %p32 = scmp.eq.s32.totalorder %s15, 1
    %p33 = por %p31, %p32
    %p34 = scmp.ne.s32.totalorder %s23, %s24
    %p35 = scmp.eq.s32.totalorder %s15, 0
    %p36 = por %p34, %p35
    %p37 = scmp.ne.s32.totalorder %s23, %s24
    %p38 = scmp.eq.s32.totalorder %s16, 1
    %p39 = por %p37, %p38
    %p41 = scmp.ne.s32.totalorder %s24, %s40
    %p42 = scmp.eq.s32.totalorder %s16, 0
    %p43 = por %p41, %p42
    %s44 = ssub.s32 %s10, %s17
    %p45 = scmp.eq.s32.totalorder %s44, 0
    %s47 = sadd.s32 %s46, 1
    %s48 = scalar_select %p45, %s46, %s47
    %p51 = pneg %p45
    %p52 = scmp.eq.s32.totalorder %s10, 1
    %p53 = por %p51, %p52
    %p54 = scmp.ne.s32.totalorder %s46, %s49
    %p55 = scmp.eq.s32.totalorder %s10, 0
    %p56 = por %p54, %p55
    %p57 = scmp.ne.s32.totalorder %s46, %s49
    %p58 = scmp.eq.s32.totalorder %s15, 1
    %p59 = por %p57, %p58
    %p60 = scmp.ne.s32.totalorder %s49, %s50
    %p61 = scmp.eq.s32.totalorder %s15, 0
    %p62 = por %p60, %p61
    %p63 = scmp.ne.s32.totalorder %s49, %s50
    %p64 = scmp.eq.s32.totalorder %s16, 1
    %p65 = por %p63, %p64
    %p67 = scmp.ne.s32.totalorder %s50, %s66
    %p68 = scmp.eq.s32.totalorder %s16, 0
    %p69 = por %p67, %p68
    %s71 = sadd.s32 %s70, 1
    %p74 = scmp.eq.s32.totalorder %s10, 1
    %p75 = scmp.ne.s32.totalorder %s70, %s72
    %p76 = scmp.eq.s32.totalorder %s10, 0
    %p77 = por %p75, %p76
    %p78 = scmp.ne.s32.totalorder %s70, %s72
    %p79 = scmp.eq.s32.totalorder %s15, 1
    %p80 = por %p78, %p79
    %p81 = scmp.ne.s32.totalorder %s72, %s73
    %p82 = scmp.eq.s32.totalorder %s15, 0
    %p83 = por %p81, %p82
    %p84 = scmp.ne.s32.totalorder %s72, %s73
    %p85 = scmp.eq.s32.totalorder %s16, 1
    %p86 = por %p84, %p85
    %p88 = scmp.ne.s32.totalorder %s73, %s87
    %p89 = scmp.eq.s32.totalorder %s16, 0
    %p90 = por %p88, %p89
    %s92 = sadd.s32 %s91, 1
    %p95 = scmp.eq.s32.totalorder %s10, 1
    %p96 = scmp.ne.s32.totalorder %s91, %s93
    %p97 = scmp.eq.s32.totalorder %s10, 0
    %p98 = por %p96, %p97
    %p99 = scmp.ne.s32.totalorder %s91, %s93
    %p100 = scmp.eq.s32.totalorder %s15, 1
    %p101 = por %p99, %p100
    %p102 = scmp.ne.s32.totalorder %s93, %s94
    %p103 = scmp.eq.s32.totalorder %s15, 0
    %p104 = por %p102, %p103
    %p105 = scmp.ne.s32.totalorder %s93, %s94
    %p106 = scmp.eq.s32.totalorder %s16, 1
    %p107 = por %p105, %p106
    %p109 = scmp.ne.s32.totalorder %s94, %s108
    %p110 = scmp.eq.s32.totalorder %s16, 0
    %p111 = por %p109, %p110
    %s112 = ssub.s32 %s10, %s17
    %p113 = scmp.eq.s32.totalorder %s112, 0
    %s115 = sadd.s32 %s114, 1
    %s116 = scalar_select %p113, %s114, %s115
    %p119 = pneg %p113
    %p120 = scmp.eq.s32.totalorder %s10, 1
    %p121 = por %p119, %p120
    %p122 = scmp.ne.s32.totalorder %s114, %s117
    %p123 = scmp.eq.s32.totalorder %s10, 0
    %p124 = por %p122, %p123
    %p125 = scmp.ne.s32.totalorder %s114, %s117
    %p126 = scmp.eq.s32.totalorder %s15, 1
    %p127 = por %p125, %p126
    %p128 = scmp.ne.s32.totalorder %s117, %s118
    %p129 = scmp.eq.s32.totalorder %s15, 0
    %p130 = por %p128, %p129
    %p131 = scmp.ne.s32.totalorder %s117, %s118
    %p132 = scmp.eq.s32.totalorder %s16, 1
    %p133 = por %p131, %p132
    %p135 = scmp.ne.s32.totalorder %s118, %s134
    %p136 = scmp.eq.s32.totalorder %s16, 0
    %p137 = por %p135, %p136
    %p138 = scmp.le.s32.totalorder 1, %s10
    %p139 = scmp.lt.s32.totalorder %s10, 3
    %p140 = pnand %p138, %p139
    %p141 = pneg %p140
    // Predicated region
    $region9: #{basic_block.5} parent=5 // pred_check
      _
    $region10: #{basic_block.5} parent=5 // pred_check_branch
      %143 = sbr.rel (%p140) target = $region12
    $region11: #{basic_block.5} parent=5 // pred_region
      %s144 = ssub.s32 %s10, 1
      // Predicated region
      $region13: #{basic_block.5} parent=11 // pred_check
        %p145 = pneg %p83
      $region14: #{basic_block.5} parent=11 // pred_check_branch
        %147 = sbr.rel (%p145) target = $region16
      $region15: #{basic_block.5} parent=11 // pred_region
        _
      $region16: #{basic_block.5} parent=11 // pred_fallthru
        _
      // Predicated region
      $region17: #{basic_block.5} parent=11 // pred_check
        %p148 = pneg %p104
      $region18: #{basic_block.5} parent=11 // pred_check_branch
        %150 = sbr.rel (%p148) target = $region20
      $region19: #{basic_block.5} parent=11 // pred_region
        _
      $region20: #{basic_block.5} parent=11 // pred_fallthru
        _
    $region12: #{basic_block.5} parent=5 // pred_fallthru
      _
    %p151 = scmp.lt.s32.totalorder %s10, 2
    // Predicated region
    $region21: #{basic_block.5} parent=5 // pred_check
      %p152 = pneg %p151
    $region22: #{basic_block.5} parent=5 // pred_check_branch
      %154 = sbr.rel (%p152) target = $region24
    $region23: #{basic_block.5} parent=5 // pred_region
      // Predicated region
      $region25: #{basic_block.5} parent=23 // pred_check
        %p155 = pneg %p30
      $region26: #{basic_block.5} parent=23 // pred_check_branch
        %157 = sbr.rel (%p155) target = $region28
      $region27: #{basic_block.5} parent=23 // pred_region
        %p158 = scmp.lt.s32.totalorder %s10, 1
        %s159 = scalar_select %p158, %s10, 1
        %s160 = smul.addr %s159, 32
        %s161 = smul.addr %s160, 4
        %s162 = scalar_lea.vmem %s0, %s161
      $region28: #{basic_block.5} parent=23 // pred_fallthru
        _
      // Predicated region
      $region29: #{basic_block.5} parent=23 // pred_check
        %p163 = pneg %p56
      $region30: #{basic_block.5} parent=23 // pred_check_branch
        %165 = sbr.rel (%p163) target = $region32
      $region31: #{basic_block.5} parent=23 // pred_region
        %p166 = scmp.lt.s32.totalorder %s10, 1
        %s167 = scalar_select %p166, %s10, 1
        %s168 = smul.addr %s167, 32
        %s169 = smul.addr %s168, 8
        %s170 = scalar_lea.vmem %s1, %s169
      $region32: #{basic_block.5} parent=23 // pred_fallthru
        _
    $region24: #{basic_block.5} parent=5 // pred_fallthru
      _
    %p171 = scmp.le.s32.totalorder 1, %s10
    %p172 = scmp.lt.s32.totalorder %s10, 3
    %p173 = pnand %p171, %p172
    %p174 = pneg %p173
    // Predicated region
    $region33: #{basic_block.5} parent=5 // pred_check
      _
    $region34: #{basic_block.5} parent=5 // pred_check_branch
      %176 = sbr.rel (%p173) target = $region36
    $region35: #{basic_block.5} parent=5 // pred_region
      %s177 = ssub.s32 %s10, 1
      %p178 = scmp.lt.s32.totalorder %s15, 1
      %s179 = scalar_select %p178, %s15, 1
      %s180 = smul.addr %s179, 32
      %s181 = smul.addr %s180, 4
      %s182 = scalar_lea.vmem %s0, %s181
      %p183 = pneg %p36
      %p184 = pneg %p33
      %p185 = scmp.lt.s32.totalorder %s15, 1
      %s186 = scalar_select %p185, %s15, 1
      %s187 = smul.addr %s186, 32
      %s188 = smul.addr %s187, 8
      %s189 = scalar_lea.vmem %s1, %s188
      %p190 = pneg %p62
      %p191 = pneg %p59
      %p192 = pneg %p83
      %p193 = pneg %p80
      %p194 = pneg %p104
      %p195 = pneg %p101
      %p196 = pneg %p130
      %p197 = pneg %p127
      %p198 = scmp.lt.s32.totalorder %s15, 1
      %s199 = scalar_select %p198, %s15, 1
      %s200 = smul.addr %s199, 32
      %s201 = smul.addr %s200, 8
      %s202 = scalar_lea.vmem %s4, %s201
      %p203 = scmp.lt.s32.totalorder %s15, 1
      %s204 = scalar_select %p203, %s15, 1
      %s205 = smul.addr %s204, 32
      %s206 = smul.addr %s205, 4
      %s207 = scalar_lea.vmem %s0, %s206
      %p208 = scmp.lt.s32.totalorder %s15, 1
      %s209 = scalar_select %p208, %s15, 1
      %s210 = smul.addr %s209, 32
      %s211 = smul.addr %s210, 8
      %s212 = scalar_lea.vmem %s1, %s211
      %p213 = scmp.lt.s32.totalorder %s15, 1
      %s214 = scalar_select %p213, %s15, 1
      %s215 = smul.addr %s214, 32
      %s216 = smul.addr %s215, 8
      %s217 = scalar_lea.vmem %s4, %s216
      %v218 = vld [vmem:[%s207] sm:$0xf]
      %v219 = vld [vmem:[%s207 + $0x4] sm:$0xf]
      %v220 = vld [vmem:[%s207 + $0x8] sm:$0xf]
      %v221 = vld [vmem:[%s207 + $0xc] sm:$0xf]
      %v222 = vld [vmem:[%s207 + $0x10] sm:$0xf]
      %v223 = vld [vmem:[%s207 + $0x14] sm:$0xf]
      %v224 = vld [vmem:[%s207 + $0x18] sm:$0xf]
      %v225 = vld [vmem:[%s207 + $0x1c] sm:$0xf]
      %v226 = vld [vmem:[%s207 + $0x20] sm:$0xf]
      %v227 = vld [vmem:[%s207 + $0x24] sm:$0xf]
      %v228 = vld [vmem:[%s207 + $0x28] sm:$0xf]
      %v229 = vld [vmem:[%s207 + $0x2c] sm:$0xf]
      %v230 = vld [vmem:[%s207 + $0x30] sm:$0xf]
      %v231 = vld [vmem:[%s207 + $0x34] sm:$0xf]
      %v232 = vld [vmem:[%s207 + $0x38] sm:$0xf]
      %v233 = vld [vmem:[%s207 + $0x3c] sm:$0xf]
      %v234 = vld [vmem:[%s207 + $0x40] sm:$0xf]
      %v235 = vld [vmem:[%s207 + $0x44] sm:$0xf]
      %v236 = vld [vmem:[%s207 + $0x48] sm:$0xf]
      %v237 = vld [vmem:[%s207 + $0x4c] sm:$0xf]
      %v238 = vld [vmem:[%s207 + $0x50] sm:$0xf]
      %v239 = vld [vmem:[%s207 + $0x54] sm:$0xf]
      %v240 = vld [vmem:[%s207 + $0x58] sm:$0xf]
      %v241 = vld [vmem:[%s207 + $0x5c] sm:$0xf]
      %v242 = vld [vmem:[%s207 + $0x60] sm:$0xf]
      %v243 = vld [vmem:[%s207 + $0x64] sm:$0xf]
      %v244 = vld [vmem:[%s207 + $0x68] sm:$0xf]
      %v245 = vld [vmem:[%s207 + $0x6c] sm:$0xf]
      %v246 = vld [vmem:[%s207 + $0x70] sm:$0xf]
      %v247 = vld [vmem:[%s207 + $0x74] sm:$0xf]
      %v248 = vld [vmem:[%s207 + $0x78] sm:$0xf]
      %v249 = vld [vmem:[%s207 + $0x7c] sm:$0xf]
      %v250 = vunpack.c.l.bf16 %v218
      %v251 = vunpack.c.l.bf16 %v219
      %v252 = vunpack.c.l.bf16 %v220
      %v253 = vunpack.c.l.bf16 %v221
      %v254 = vunpack.c.l.bf16 %v222
      %v255 = vunpack.c.l.bf16 %v223
      %v256 = vunpack.c.l.bf16 %v224
      %v257 = vunpack.c.l.bf16 %v225
      %v258 = vunpack.c.l.bf16 %v226
      %v259 = vunpack.c.l.bf16 %v227
      %v260 = vunpack.c.l.bf16 %v228
      %v261 = vunpack.c.l.bf16 %v229
      %v262 = vunpack.c.l.bf16 %v230
      %v263 = vunpack.c.l.bf16 %v231
      %v264 = vunpack.c.l.bf16 %v232
      %v265 = vunpack.c.l.bf16 %v233
      %v266 = vunpack.c.l.bf16 %v234
      %v267 = vunpack.c.l.bf16 %v235
      %v268 = vunpack.c.l.bf16 %v236
      %v269 = vunpack.c.l.bf16 %v237
      %v270 = vunpack.c.l.bf16 %v238
      %v271 = vunpack.c.l.bf16 %v239
      %v272 = vunpack.c.l.bf16 %v240
      %v273 = vunpack.c.l.bf16 %v241
      %v274 = vunpack.c.l.bf16 %v242
      %v275 = vunpack.c.l.bf16 %v243
      %v276 = vunpack.c.l.bf16 %v244
      %v277 = vunpack.c.l.bf16 %v245
      %v278 = vunpack.c.l.bf16 %v246
      %v279 = vunpack.c.l.bf16 %v247
      %v280 = vunpack.c.l.bf16 %v248
      %v281 = vunpack.c.l.bf16 %v249
      %v282 = vld [vmem:[%s2] sm:$0x1]
      %v284 = vlaneseq
      %v285 = vshrl.u32 %v284, 7
      %v286 = vsub.s32 0, %v285
      %v287 = vrot.slane %v282, %v286
      %v289 = vmul.f32 %v250, %v287
      %v290 = vmul.f32 %v251, %v287
      %v291 = vmul.f32 %v252, %v287
      %v292 = vmul.f32 %v253, %v287
      %v293 = vmul.f32 %v254, %v287
      %v294 = vmul.f32 %v255, %v287
      %v295 = vmul.f32 %v256, %v287
      %v296 = vmul.f32 %v257, %v287
      %v297 = vmul.f32 %v258, %v287
      %v298 = vmul.f32 %v259, %v287
      %v299 = vmul.f32 %v260, %v287
      %v300 = vmul.f32 %v261, %v287
      %v301 = vmul.f32 %v262, %v287
      %v302 = vmul.f32 %v263, %v287
      %v303 = vmul.f32 %v264, %v287
      %v304 = vmul.f32 %v265, %v287
      %v305 = vmul.f32 %v266, %v287
      %v306 = vmul.f32 %v267, %v287
      %v307 = vmul.f32 %v268, %v287
      %v308 = vmul.f32 %v269, %v287
      %v309 = vmul.f32 %v270, %v287
      %v310 = vmul.f32 %v271, %v287
      %v311 = vmul.f32 %v272, %v287
      %v312 = vmul.f32 %v273, %v287
      %v313 = vmul.f32 %v274, %v287
      %v314 = vmul.f32 %v275, %v287
      %v315 = vmul.f32 %v276, %v287
      %v316 = vmul.f32 %v277, %v287
      %v317 = vmul.f32 %v278, %v287
      %v318 = vmul.f32 %v279, %v287
      %v319 = vmul.f32 %v280, %v287
      %v320 = vmul.f32 %v281, %v287
      %v321 = vld [vmem:[%s3] sm:$0x1]
      %v323 = vlaneseq
      %v324 = vshrl.u32 %v323, 7
      %v325 = vsub.s32 0, %v324
      %v326 = vrot.slane %v321, %v325
      %v328 = vadd.f32 %v289, %v326
      %v329 = vadd.f32 %v290, %v326
      %v330 = vadd.f32 %v291, %v326
      %v331 = vadd.f32 %v292, %v326
      %v332 = vadd.f32 %v293, %v326
      %v333 = vadd.f32 %v294, %v326
      %v334 = vadd.f32 %v295, %v326
      %v335 = vadd.f32 %v296, %v326
      %v336 = vadd.f32 %v297, %v326
      %v337 = vadd.f32 %v298, %v326
      %v338 = vadd.f32 %v299, %v326
      %v339 = vadd.f32 %v300, %v326
      %v340 = vadd.f32 %v301, %v326
      %v341 = vadd.f32 %v302, %v326
      %v342 = vadd.f32 %v303, %v326
      %v343 = vadd.f32 %v304, %v326
      %v344 = vadd.f32 %v305, %v326
      %v345 = vadd.f32 %v306, %v326
      %v346 = vadd.f32 %v307, %v326
      %v347 = vadd.f32 %v308, %v326
      %v348 = vadd.f32 %v309, %v326
      %v349 = vadd.f32 %v310, %v326
      %v350 = vadd.f32 %v311, %v326
      %v351 = vadd.f32 %v312, %v326
      %v352 = vadd.f32 %v313, %v326
      %v353 = vadd.f32 %v314, %v326
      %v354 = vadd.f32 %v315, %v326
      %v355 = vadd.f32 %v316, %v326
      %v356 = vadd.f32 %v317, %v326
      %v357 = vadd.f32 %v318, %v326
      %v358 = vadd.f32 %v319, %v326
      %v359 = vadd.f32 %v320, %v326
      %v360 = vld [vmem:[%s212] sm:$0xff]
      %v361 = vld [vmem:[%s212 + $0x8] sm:$0xff]
      %v362 = vld [vmem:[%s212 + $0x10] sm:$0xff]
      %v363 = vld [vmem:[%s212 + $0x18] sm:$0xff]
      %v364 = vld [vmem:[%s212 + $0x20] sm:$0xff]
      %v365 = vld [vmem:[%s212 + $0x28] sm:$0xff]
      %v366 = vld [vmem:[%s212 + $0x30] sm:$0xff]
      %v367 = vld [vmem:[%s212 + $0x38] sm:$0xff]
      %v368 = vld [vmem:[%s212 + $0x40] sm:$0xff]
      %v369 = vld [vmem:[%s212 + $0x48] sm:$0xff]
      %v370 = vld [vmem:[%s212 + $0x50] sm:$0xff]
      %v371 = vld [vmem:[%s212 + $0x58] sm:$0xff]
      %v372 = vld [vmem:[%s212 + $0x60] sm:$0xff]
      %v373 = vld [vmem:[%s212 + $0x68] sm:$0xff]
      %v374 = vld [vmem:[%s212 + $0x70] sm:$0xff]
      %v375 = vld [vmem:[%s212 + $0x78] sm:$0xff]
      %v376 = vld [vmem:[%s212 + $0x80] sm:$0xff]
      %v377 = vld [vmem:[%s212 + $0x88] sm:$0xff]
      %v378 = vld [vmem:[%s212 + $0x90] sm:$0xff]
      %v379 = vld [vmem:[%s212 + $0x98] sm:$0xff]
      %v380 = vld [vmem:[%s212 + $0xa0] sm:$0xff]
      %v381 = vld [vmem:[%s212 + $0xa8] sm:$0xff]
      %v382 = vld [vmem:[%s212 + $0xb0] sm:$0xff]
      %v383 = vld [vmem:[%s212 + $0xb8] sm:$0xff]
      %v384 = vld [vmem:[%s212 + $0xc0] sm:$0xff]
      %v385 = vld [vmem:[%s212 + $0xc8] sm:$0xff]
      %v386 = vld [vmem:[%s212 + $0xd0] sm:$0xff]
      %v387 = vld [vmem:[%s212 + $0xd8] sm:$0xff]
      %v388 = vld [vmem:[%s212 + $0xe0] sm:$0xff]
      %v389 = vld [vmem:[%s212 + $0xe8] sm:$0xff]
      %v390 = vld [vmem:[%s212 + $0xf0] sm:$0xff]
      %v391 = vld [vmem:[%s212 + $0xf8] sm:$0xff]
      %v392 = vadd.f32 %v328, %v360
      %v393 = vadd.f32 %v329, %v361
      %v394 = vadd.f32 %v330, %v362
      %v395 = vadd.f32 %v331, %v363
      %v396 = vadd.f32 %v332, %v364
      %v397 = vadd.f32 %v333, %v365
      %v398 = vadd.f32 %v334, %v366
      %v399 = vadd.f32 %v335, %v367
      %v400 = vadd.f32 %v336, %v368
      %v401 = vadd.f32 %v337, %v369
      %v402 = vadd.f32 %v338, %v370
      %v403 = vadd.f32 %v339, %v371
      %v404 = vadd.f32 %v340, %v372
      %v405 = vadd.f32 %v341, %v373
      %v406 = vadd.f32 %v342, %v374
      %v407 = vadd.f32 %v343, %v375
      %v408 = vadd.f32 %v344, %v376
      %v409 = vadd.f32 %v345, %v377
      %v410 = vadd.f32 %v346, %v378
      %v411 = vadd.f32 %v347, %v379
      %v412 = vadd.f32 %v348, %v380
      %v413 = vadd.f32 %v349, %v381
      %v414 = vadd.f32 %v350, %v382
      %v415 = vadd.f32 %v351, %v383
      %v416 = vadd.f32 %v352, %v384
      %v417 = vadd.f32 %v353, %v385
      %v418 = vadd.f32 %v354, %v386
      %v419 = vadd.f32 %v355, %v387
      %v420 = vadd.f32 %v356, %v388
      %v421 = vadd.f32 %v357, %v389
      %v422 = vadd.f32 %v358, %v390
      %v423 = vadd.f32 %v359, %v391
      %v424 = vmax.f32 %v392, 0.0
      %v425 = vmax.f32 %v393, 0.0
      %v426 = vmax.f32 %v394, 0.0
      %v427 = vmax.f32 %v395, 0.0
      %v428 = vmax.f32 %v396, 0.0
      %v429 = vmax.f32 %v397, 0.0
      %v430 = vmax.f32 %v398, 0.0
      %v431 = vmax.f32 %v399, 0.0
      %v432 = vmax.f32 %v400, 0.0
      %v433 = vmax.f32 %v401, 0.0
      %v434 = vmax.f32 %v402, 0.0
      %v435 = vmax.f32 %v403, 0.0
      %v436 = vmax.f32 %v404, 0.0
      %v437 = vmax.f32 %v405, 0.0
      %v438 = vmax.f32 %v406, 0.0
      %v439 = vmax.f32 %v407, 0.0
      %v440 = vmax.f32 %v408, 0.0
      %v441 = vmax.f32 %v409, 0.0
      %v442 = vmax.f32 %v410, 0.0
      %v443 = vmax.f32 %v411, 0.0
      %v444 = vmax.f32 %v412, 0.0
      %v445 = vmax.f32 %v413, 0.0
      %v446 = vmax.f32 %v414, 0.0
      %v447 = vmax.f32 %v415, 0.0
      %v448 = vmax.f32 %v416, 0.0
      %v449 = vmax.f32 %v417, 0.0
      %v450 = vmax.f32 %v418, 0.0
      %v451 = vmax.f32 %v419, 0.0
      %v452 = vmax.f32 %v420, 0.0
      %v453 = vmax.f32 %v421, 0.0
      %v454 = vmax.f32 %v422, 0.0
      %v455 = vmax.f32 %v423, 0.0
      %vm456 = vcmask 31744
      %457 = vst.msk [vmem:[%s217] sm:$0xff] %vm456, %v424
      %458 = vst.msk [vmem:[%s217 + $0x8] sm:$0xff] %vm456, %v425
      %459 = vst.msk [vmem:[%s217 + $0x10] sm:$0xff] %vm456, %v426
      %460 = vst.msk [vmem:[%s217 + $0x18] sm:$0xff] %vm456, %v427
      %461 = vst.msk [vmem:[%s217 + $0x20] sm:$0xff] %vm456, %v428
      %462 = vst.msk [vmem:[%s217 + $0x28] sm:$0xff] %vm456, %v429
      %463 = vst.msk [vmem:[%s217 + $0x30] sm:$0xff] %vm456, %v430
      %464 = vst.msk [vmem:[%s217 + $0x38] sm:$0xff] %vm456, %v431
      %465 = vst.msk [vmem:[%s217 + $0x40] sm:$0xff] %vm456, %v432
      %466 = vst.msk [vmem:[%s217 + $0x48] sm:$0xff] %vm456, %v433
      %467 = vst.msk [vmem:[%s217 + $0x50] sm:$0xff] %vm456, %v434
      %468 = vst.msk [vmem:[%s217 + $0x58] sm:$0xff] %vm456, %v435
      %469 = vst.msk [vmem:[%s217 + $0x60] sm:$0xff] %vm456, %v436
      %470 = vst.msk [vmem:[%s217 + $0x68] sm:$0xff] %vm456, %v437
      %471 = vst.msk [vmem:[%s217 + $0x70] sm:$0xff] %vm456, %v438
      %472 = vst.msk [vmem:[%s217 + $0x78] sm:$0xff] %vm456, %v439
      %473 = vst.msk [vmem:[%s217 + $0x80] sm:$0xff] %vm456, %v440
      %474 = vst.msk [vmem:[%s217 + $0x88] sm:$0xff] %vm456, %v441
      %475 = vst.msk [vmem:[%s217 + $0x90] sm:$0xff] %vm456, %v442
      %476 = vst.msk [vmem:[%s217 + $0x98] sm:$0xff] %vm456, %v443
      %477 = vst.msk [vmem:[%s217 + $0xa0] sm:$0xff] %vm456, %v444
      %478 = vst.msk [vmem:[%s217 + $0xa8] sm:$0xff] %vm456, %v445
      %479 = vst.msk [vmem:[%s217 + $0xb0] sm:$0xff] %vm456, %v446
      %480 = vst.msk [vmem:[%s217 + $0xb8] sm:$0xff] %vm456, %v447
      %481 = vst.msk [vmem:[%s217 + $0xc0] sm:$0xff] %vm456, %v448
      %482 = vst.msk [vmem:[%s217 + $0xc8] sm:$0xff] %vm456, %v449
      %483 = vst.msk [vmem:[%s217 + $0xd0] sm:$0xff] %vm456, %v450
      %484 = vst.msk [vmem:[%s217 + $0xd8] sm:$0xff] %vm456, %v451
      %485 = vst.msk [vmem:[%s217 + $0xe0] sm:$0xff] %vm456, %v452
      %486 = vst.msk [vmem:[%s217 + $0xe8] sm:$0xff] %vm456, %v453
      %487 = vst.msk [vmem:[%s217 + $0xf0] sm:$0xff] %vm456, %v454
      %488 = vst.msk [vmem:[%s217 + $0xf8] sm:$0xff] %vm456, %v455
      %p489 = scmp.lt.s32.totalorder %s15, 1
      %s490 = scalar_select %p489, %s15, 1
      %s491 = smul.addr %s490, 32
      %s492 = smul.addr %s491, 8
      %s493 = scalar_lea.vmem %s4, %s492
      // Predicated region
      $region37: #{basic_block.5} parent=35 // pred_check
        %p494 = pneg %p127
      $region38: #{basic_block.5} parent=35 // pred_check_branch
        %496 = sbr.rel (%p494) target = $region40
      $region39: #{basic_block.5} parent=35 // pred_region
        _
      $region40: #{basic_block.5} parent=35 // pred_fallthru
        _
    $region36: #{basic_block.5} parent=5 // pred_fallthru
      _
    %p497 = scmp.le.s32.totalorder 2, %s10
    // Predicated region
    $region41: #{basic_block.5} parent=5 // pred_check
      %p498 = pneg %p497
    $region42: #{basic_block.5} parent=5 // pred_check_branch
      %500 = sbr.rel (%p498) target = $region44
    $region43: #{basic_block.5} parent=5 // pred_region
      %s501 = ssub.s32 %s10, 2
      // Predicated region
      $region45: #{basic_block.5} parent=43 // pred_check
        %p502 = pneg %p133
      $region46: #{basic_block.5} parent=43 // pred_check_branch
        %504 = sbr.rel (%p502) target = $region48
      $region47: #{basic_block.5} parent=43 // pred_region
        %p505 = scmp.lt.s32.totalorder %s16, 1
        %s506 = scalar_select %p505, %s16, 1
        %s507 = smul.addr %s506, 32
        %s508 = smul.addr %s507, 8
        %s509 = scalar_lea.vmem %s4, %s508
      $region48: #{basic_block.5} parent=43 // pred_fallthru
        _
    $region44: #{basic_block.5} parent=5 // pred_fallthru
      _
  $region6: #{basic_block.5} parent=0 // loop_footer
    %s14 = sadd.s32 1, %s10
  $region7: #{basic_block.5} parent=0 // loop_footer_branch
    %9 = sbr.rel target = $region3
  $region8: #{basic_block.5} parent=0 // loop_exit
    _

// kernel: basic_block.3
$region0: #{basic_block.3}
  #allocation0 [shape = 'u32[]', space=smem, size = 0x4, offset = 0x4, fixed_abs, tag = 'smem constant byte address 0x4 - core index']
  #allocation1 [shape = 'u32[144,128]{1,0:T(1,128)}', space=vmem, size = 0x12000, scoped, tag = 'internal scratch']
  #allocation2 [shape = 'f32[18,16,12]{2,1,0:T(8,128)}', space=vmem, size = 0x24000, scoped, tag = 'scratch operand']
  %s0 = inlined_call_operand.vmem [shape: bf16[2,18,18,4], index: 0, kind: input, shape index: {}]
  %s1 = inlined_call_operand.vmem [shape: bf16[3,12,4], index: 1, kind: input, shape index: {}]
  %s2 = inlined_call_operand.vmem [shape: bf16[2,16,16,4], index: 2, kind: output, shape index: {0}]
  %s3 = inlined_call_operand.vmem [shape: f32[2,1,4], index: 3, kind: output, shape index: {1}]
  %s4 = inlined_call_operand.vmem [shape: f32[2,1,4], index: 4, kind: output, shape index: {2}]
  %5 = xla_tuple %s2, %s3, %s4
  %s6 = sld [smem:[#allocation0]]
  $region57: #{basic_block.3} parent=0
    _
  %s8 = ssub.s32 1, %s6
  %s9 = scalar_select 0, %s8, %s6
  loop: start=0, step=1, limit=4
  $region2: #{basic_block.3} parent=0 // loop_pre_header
    _
  $region3: #{basic_block.3} parent=0 // loop_header
    %s11 = sphi 0, %s15
    %p12 = scmp.ge.s32.totalorder %s11, 4
    %s21 = sphi 0, %s23
    %s24 = sphi 0, %s21
    %s25 = sphi 0, %s24
    %s41 = sphi 0, %s25
    %s45 = sphi 0, %s45
    %s47 = sphi 0, %s45
    %s48 = sphi 0, %s47
    %s62 = sphi 0, %s48
    %s68 = sphi 0, %s70
    %s71 = sphi 0, %s68
    %s72 = sphi 0, %s71
    %s88 = sphi 0, %s72
    %s94 = sphi 0, %s96
    %s97 = sphi 0, %s94
    %s98 = sphi 0, %s97
    %s114 = sphi 0, %s98
    %s120 = sphi 0, %s122
    %s123 = sphi 0, %s120
    %s124 = sphi 0, %s123
    %s140 = sphi 0, %s124
  $region4: #{basic_block.3} parent=0 // loop_header_branch
    %14 = sbr.rel (%p12) target = $region8
  $region5: #{basic_block.3} parent=0 // loop_body
    %s16 = ssub.s32 %s11, 1
    %s17 = ssub.s32 %s11, 2
    %s18 = sadd.s32 %s11, 1
    %s19 = ssub.s32 %s11, %s18
    %p20 = scmp.eq.s32.totalorder %s19, 0
    %s22 = sadd.s32 %s21, 1
    %s23 = scalar_select %p20, %s21, %s22
    %p26 = pneg %p20
    %p27 = scmp.eq.s32.totalorder %s11, 1
    %p28 = por %p26, %p27
    %p29 = scmp.ne.s32.totalorder %s21, %s24
    %p30 = scmp.eq.s32.totalorder %s11, 0
    %p31 = por %p29, %p30
    %p32 = scmp.ne.s32.totalorder %s21, %s24
    %p33 = scmp.eq.s32.totalorder %s16, 1
    %p34 = por %p32, %p33
    %p35 = scmp.ne.s32.totalorder %s24, %s25
    %p36 = scmp.eq.s32.totalorder %s16, 0
    %p37 = por %p35, %p36
    %p38 = scmp.ne.s32.totalorder %s24, %s25
    %p39 = scmp.eq.s32.totalorder %s17, 1
    %p40 = por %p38, %p39
    %p42 = scmp.ne.s32.totalorder %s25, %s41
    %p43 = scmp.eq.s32.totalorder %s17, 0
    %p44 = por %p42, %p43
    %s46 = sadd.s32 %s45, 1
    %p49 = scmp.eq.s32.totalorder %s11, 1
    %p50 = scmp.ne.s32.totalorder %s45, %s47
    %p51 = scmp.eq.s32.totalorder %s11, 0
    %p52 = por %p50, %p51
    %p53 = scmp.ne.s32.totalorder %s45, %s47
    %p54 = scmp.eq.s32.totalorder %s16, 1
    %p55 = por %p53, %p54
    %p56 = scmp.ne.s32.totalorder %s47, %s48
    %p57 = scmp.eq.s32.totalorder %s16, 0
    %p58 = por %p56, %p57
    %p59 = scmp.ne.s32.totalorder %s47, %s48
    %p60 = scmp.eq.s32.totalorder %s17, 1
    %p61 = por %p59, %p60
    %p63 = scmp.ne.s32.totalorder %s48, %s62
    %p64 = scmp.eq.s32.totalorder %s17, 0
    %p65 = por %p63, %p64
    %s66 = ssub.s32 %s11, %s18
    %p67 = scmp.eq.s32.totalorder %s66, 0
    %s69 = sadd.s32 %s68, 1
    %s70 = scalar_select %p67, %s68, %s69
    %p73 = pneg %p67
    %p74 = scmp.eq.s32.totalorder %s11, 1
    %p75 = por %p73, %p74
    %p76 = scmp.ne.s32.totalorder %s68, %s71
    %p77 = scmp.eq.s32.totalorder %s11, 0
    %p78 = por %p76, %p77
    %p79 = scmp.ne.s32.totalorder %s68, %s71
    %p80 = scmp.eq.s32.totalorder %s16, 1
    %p81 = por %p79, %p80
    %p82 = scmp.ne.s32.totalorder %s71, %s72
    %p83 = scmp.eq.s32.totalorder %s16, 0
    %p84 = por %p82, %p83
    %p85 = scmp.ne.s32.totalorder %s71, %s72
    %p86 = scmp.eq.s32.totalorder %s17, 1
    %p87 = por %p85, %p86
    %p89 = scmp.ne.s32.totalorder %s72, %s88
    %p90 = scmp.eq.s32.totalorder %s17, 0
    %p91 = por %p89, %p90
    %s92 = ssub.s32 %s11, %s18
    %p93 = scmp.eq.s32.totalorder %s92, 0
    %s95 = sadd.s32 %s94, 1
    %s96 = scalar_select %p93, %s94, %s95
    %p99 = pneg %p93
    %p100 = scmp.eq.s32.totalorder %s11, 1
    %p101 = por %p99, %p100
    %p102 = scmp.ne.s32.totalorder %s94, %s97
    %p103 = scmp.eq.s32.totalorder %s11, 0
    %p104 = por %p102, %p103
    %p105 = scmp.ne.s32.totalorder %s94, %s97
    %p106 = scmp.eq.s32.totalorder %s16, 1
    %p107 = por %p105, %p106
    %p108 = scmp.ne.s32.totalorder %s97, %s98
    %p109 = scmp.eq.s32.totalorder %s16, 0
    %p110 = por %p108, %p109
    %p111 = scmp.ne.s32.totalorder %s97, %s98
    %p112 = scmp.eq.s32.totalorder %s17, 1
    %p113 = por %p111, %p112
    %p115 = scmp.ne.s32.totalorder %s98, %s114
    %p116 = scmp.eq.s32.totalorder %s17, 0
    %p117 = por %p115, %p116
    %s118 = ssub.s32 %s11, %s18
    %p119 = scmp.eq.s32.totalorder %s118, 0
    %s121 = sadd.s32 %s120, 1
    %s122 = scalar_select %p119, %s120, %s121
    %p125 = pneg %p119
    %p126 = scmp.eq.s32.totalorder %s11, 1
    %p127 = por %p125, %p126
    %p128 = scmp.ne.s32.totalorder %s120, %s123
    %p129 = scmp.eq.s32.totalorder %s11, 0
    %p130 = por %p128, %p129
    %p131 = scmp.ne.s32.totalorder %s120, %s123
    %p132 = scmp.eq.s32.totalorder %s16, 1
    %p133 = por %p131, %p132
    %p134 = scmp.ne.s32.totalorder %s123, %s124
    %p135 = scmp.eq.s32.totalorder %s16, 0
    %p136 = por %p134, %p135
    %p137 = scmp.ne.s32.totalorder %s123, %s124
    %p138 = scmp.eq.s32.totalorder %s17, 1
    %p139 = por %p137, %p138
    %p141 = scmp.ne.s32.totalorder %s124, %s140
    %p142 = scmp.eq.s32.totalorder %s17, 0
    %p143 = por %p141, %p142
    %p144 = scmp.le.s32.totalorder 1, %s11
    %p145 = scmp.lt.s32.totalorder %s11, 3
    %p146 = pnand %p144, %p145
    %p147 = pneg %p146
    // Predicated region
    $region9: #{basic_block.3} parent=5 // pred_check
      _
    $region10: #{basic_block.3} parent=5 // pred_check_branch
      %149 = sbr.rel (%p146) target = $region12
    $region11: #{basic_block.3} parent=5 // pred_region
      %s150 = ssub.s32 %s11, 1
      // Predicated region
      $region13: #{basic_block.3} parent=11 // pred_check
        %p151 = pneg %p58
      $region14: #{basic_block.3} parent=11 // pred_check_branch
        %153 = sbr.rel (%p151) target = $region16
      $region15: #{basic_block.3} parent=11 // pred_region
        _
      $region16: #{basic_block.3} parent=11 // pred_fallthru
        _
    $region12: #{basic_block.3} parent=5 // pred_fallthru
      _
    %p154 = scmp.lt.s32.totalorder %s11, 2
    // Predicated region
    $region17: #{basic_block.3} parent=5 // pred_check
      %p155 = pneg %p154
    $region18: #{basic_block.3} parent=5 // pred_check_branch
      %157 = sbr.rel (%p155) target = $region20
    $region19: #{basic_block.3} parent=5 // pred_region
      // Predicated region
      $region21: #{basic_block.3} parent=19 // pred_check
        %p158 = pneg %p31
      $region22: #{basic_block.3} parent=19 // pred_check_branch
        %160 = sbr.rel (%p158) target = $region24
      $region23: #{basic_block.3} parent=19 // pred_region
        %p161 = scmp.lt.s32.totalorder %s11, 1
        %s162 = scalar_select %p161, %s11, 1
        %s163 = smul.addr %s162, 54
        %s164 = smul.addr %s163, 4
        %s165 = scalar_lea.vmem %s0, %s164
      $region24: #{basic_block.3} parent=19 // pred_fallthru
        _
    $region20: #{basic_block.3} parent=5 // pred_fallthru
      _
    %p166 = scmp.le.s32.totalorder 1, %s11
    %p167 = scmp.lt.s32.totalorder %s11, 3
    %p168 = pnand %p166, %p167
    %p169 = pneg %p168
    // Predicated region
    $region25: #{basic_block.3} parent=5 // pred_check
      _
    $region26: #{basic_block.3} parent=5 // pred_check_branch
      %171 = sbr.rel (%p168) target = $region28
    $region27: #{basic_block.3} parent=5 // pred_region
      %s172 = ssub.s32 %s11, 1
      %p173 = scmp.lt.s32.totalorder %s16, 1
      %s174 = scalar_select %p173, %s16, 1
      %s175 = smul.addr %s174, 54
      %s176 = smul.addr %s175, 4
      %s177 = scalar_lea.vmem %s0, %s176
      %p178 = pneg %p37
      %p179 = pneg %p34
      %p180 = pneg %p58
      %p181 = pneg %p55
      %p182 = pneg %p84
      %p183 = pneg %p81
      %p184 = scmp.lt.s32.totalorder %s16, 1
      %s185 = scalar_select %p184, %s16, 1
      %s186 = smul.addr %s185, 32
      %s187 = smul.addr %s186, 4
      %s188 = scalar_lea.vmem %s2, %s187
      %p189 = pneg %p110
      %p190 = pneg %p107
      %p191 = scmp.lt.s32.totalorder %s16, 1
      %s192 = scalar_select %p191, %s16, 1
      %s193 = scalar_lea.vmem %s3, %s192
      %p194 = pneg %p136
      %p195 = pneg %p133
      %p196 = scmp.lt.s32.totalorder %s16, 1
      %s197 = scalar_select %p196, %s16, 1
      %s198 = scalar_lea.vmem %s4, %s197
      %p199 = scmp.lt.s32.totalorder %s16, 1
      %s200 = scalar_select %p199, %s16, 1
      %s201 = smul.addr %s200, 54
      %s202 = smul.addr %s201, 4
      %s203 = scalar_lea.vmem %s0, %s202
      %p204 = scmp.lt.s32.totalorder %s16, 1
      %s205 = scalar_select %p204, %s16, 1
      %s206 = smul.addr %s205, 32
      %s207 = smul.addr %s206, 4
      %s208 = scalar_lea.vmem %s2, %s207
      %p209 = scmp.lt.s32.totalorder %s16, 1
      %s210 = scalar_select %p209, %s16, 1
      %s211 = scalar_lea.vmem %s3, %s210
      %p212 = scmp.lt.s32.totalorder %s16, 1
      %s213 = scalar_select %p212, %s16, 1
      %s214 = scalar_lea.vmem %s4, %s213
      %v216 = vld [vmem:[%s203] sm:$0xf]
      %v217 = vld [vmem:[%s203 + $0x4] sm:$0xf]
      %v218 = vld [vmem:[%s203 + $0x8] sm:$0x1]
      %v219 = vld [vmem:[%s203 + $0xc] sm:$0xf]
      %v220 = vld [vmem:[%s203 + $0x10] sm:$0xf]
      %v221 = vld [vmem:[%s203 + $0x14] sm:$0x1]
      %v222 = vld [vmem:[%s203 + $0x18] sm:$0xf]
      %v223 = vld [vmem:[%s203 + $0x1c] sm:$0xf]
      %v224 = vld [vmem:[%s203 + $0x20] sm:$0x1]
      %v225 = vld [vmem:[%s203 + $0x24] sm:$0xf]
      %v226 = vld [vmem:[%s203 + $0x28] sm:$0xf]
      %v227 = vld [vmem:[%s203 + $0x2c] sm:$0x1]
      %v228 = vld [vmem:[%s203 + $0x30] sm:$0xf]
      %v229 = vld [vmem:[%s203 + $0x34] sm:$0xf]
      %v230 = vld [vmem:[%s203 + $0x38] sm:$0x1]
      %v231 = vld [vmem:[%s203 + $0x3c] sm:$0xf]
      %v232 = vld [vmem:[%s203 + $0x40] sm:$0xf]
      %v233 = vld [vmem:[%s203 + $0x44] sm:$0x1]
      %v234 = vld [vmem:[%s203 + $0x48] sm:$0xf]
      %v235 = vld [vmem:[%s203 + $0x4c] sm:$0xf]
      %v236 = vld [vmem:[%s203 + $0x50] sm:$0x1]
      %v237 = vld [vmem:[%s203 + $0x54] sm:$0xf]
      %v238 = vld [vmem:[%s203 + $0x58] sm:$0xf]
      %v239 = vld [vmem:[%s203 + $0x5c] sm:$0x1]
      %v240 = vld [vmem:[%s203 + $0x60] sm:$0xf]
      %v241 = vld [vmem:[%s203 + $0x64] sm:$0xf]
      %v242 = vld [vmem:[%s203 + $0x68] sm:$0x1]
      %v243 = vld [vmem:[%s203 + $0x6c] sm:$0xf]
      %v244 = vld [vmem:[%s203 + $0x70] sm:$0xf]
      %v245 = vld [vmem:[%s203 + $0x74] sm:$0x1]
      %v246 = vld [vmem:[%s203 + $0x78] sm:$0xf]
      %v247 = vld [vmem:[%s203 + $0x7c] sm:$0xf]
      %v248 = vld [vmem:[%s203 + $0x80] sm:$0x1]
      %v249 = vld [vmem:[%s203 + $0x84] sm:$0xf]
      %v250 = vld [vmem:[%s203 + $0x88] sm:$0xf]
      %v251 = vld [vmem:[%s203 + $0x8c] sm:$0x1]
      %v252 = vld [vmem:[%s203 + $0x90] sm:$0xf]
      %v253 = vld [vmem:[%s203 + $0x94] sm:$0xf]
      %v254 = vld [vmem:[%s203 + $0x98] sm:$0x1]
      %v255 = vld [vmem:[%s203 + $0x9c] sm:$0xf]
      %v256 = vld [vmem:[%s203 + $0xa0] sm:$0xf]
      %v257 = vld [vmem:[%s203 + $0xa4] sm:$0x1]
      %v258 = vld [vmem:[%s203 + $0xa8] sm:$0xf]
      %v259 = vld [vmem:[%s203 + $0xac] sm:$0xf]
      %v260 = vld [vmem:[%s203 + $0xb0] sm:$0x1]
      %v261 = vld [vmem:[%s203 + $0xb4] sm:$0xf]
      %v262 = vld [vmem:[%s203 + $0xb8] sm:$0xf]
      %v263 = vld [vmem:[%s203 + $0xbc] sm:$0x1]
      %v264 = vld [vmem:[%s203 + $0xc0] sm:$0xf]
      %v265 = vld [vmem:[%s203 + $0xc4] sm:$0xf]
      %v266 = vld [vmem:[%s203 + $0xc8] sm:$0x1]
      %v267 = vld [vmem:[%s203 + $0xcc] sm:$0xf]
      %v268 = vld [vmem:[%s203 + $0xd0] sm:$0xf]
      %v269 = vld [vmem:[%s203 + $0xd4] sm:$0x1]
      %v270 = vunpack.c.l.bf16 %v216
      %v271 = vunpack.c.l.bf16 %v217
      %v272 = vunpack.c.l.bf16 %v218
      %v273 = vunpack.c.l.bf16 %v219
      %v274 = vunpack.c.l.bf16 %v220
      %v275 = vunpack.c.l.bf16 %v221
      %v276 = vunpack.c.l.bf16 %v222
      %v277 = vunpack.c.l.bf16 %v223
      %v278 = vunpack.c.l.bf16 %v224
      %v279 = vunpack.c.l.bf16 %v225
      %v280 = vunpack.c.l.bf16 %v226
      %v281 = vunpack.c.l.bf16 %v227
      %v282 = vunpack.c.l.bf16 %v228
      %v283 = vunpack.c.l.bf16 %v229
      %v284 = vunpack.c.l.bf16 %v230
      %v285 = vunpack.c.l.bf16 %v231
      %v286 = vunpack.c.l.bf16 %v232
      %v287 = vunpack.c.l.bf16 %v233
      %v288 = vunpack.c.l.bf16 %v234
      %v289 = vunpack.c.l.bf16 %v235
      %v290 = vunpack.c.l.bf16 %v236
      %v291 = vunpack.c.l.bf16 %v237
      %v292 = vunpack.c.l.bf16 %v238
      %v293 = vunpack.c.l.bf16 %v239
      %v294 = vunpack.c.l.bf16 %v240
      %v295 = vunpack.c.l.bf16 %v241
      %v296 = vunpack.c.l.bf16 %v242
      %v297 = vunpack.c.l.bf16 %v243
      %v298 = vunpack.c.l.bf16 %v244
      %v299 = vunpack.c.l.bf16 %v245
      %v300 = vunpack.c.l.bf16 %v246
      %v301 = vunpack.c.l.bf16 %v247
      %v302 = vunpack.c.l.bf16 %v248
      %v303 = vunpack.c.l.bf16 %v249
      %v304 = vunpack.c.l.bf16 %v250
      %v305 = vunpack.c.l.bf16 %v251
      %v306 = vunpack.c.l.bf16 %v252
      %v307 = vunpack.c.l.bf16 %v253
      %v308 = vunpack.c.l.bf16 %v254
      %v309 = vunpack.c.l.bf16 %v255
      %v310 = vunpack.c.l.bf16 %v256
      %v311 = vunpack.c.l.bf16 %v257
      %v312 = vunpack.c.l.bf16 %v258
      %v313 = vunpack.c.l.bf16 %v259
      %v314 = vunpack.c.l.bf16 %v260
      %v315 = vunpack.c.l.bf16 %v261
      %v316 = vunpack.c.l.bf16 %v262
      %v317 = vunpack.c.l.bf16 %v263
      %v318 = vunpack.c.l.bf16 %v264
      %v319 = vunpack.c.l.bf16 %v265
      %v320 = vunpack.c.l.bf16 %v266
      %v321 = vunpack.c.l.bf16 %v267
      %v322 = vunpack.c.l.bf16 %v268
      %v323 = vunpack.c.l.bf16 %v269
      %vm324 = vcmask 31744
      %325 = vst.msk [vmem:[#allocation2] sm:$0xff] %vm324, %v270
      %326 = vst.msk [vmem:[#allocation2 + $0x8] sm:$0xff] %vm324, %v271
      %327 = vst.msk [vmem:[#allocation2 + $0x10] sm:$0xff] %vm324, %v273
      %328 = vst.msk [vmem:[#allocation2 + $0x18] sm:$0xff] %vm324, %v274
      %329 = vst.msk [vmem:[#allocation2 + $0x20] sm:$0xff] %vm324, %v276
      %330 = vst.msk [vmem:[#allocation2 + $0x28] sm:$0xff] %vm324, %v277
      %331 = vst.msk [vmem:[#allocation2 + $0x30] sm:$0xff] %vm324, %v279
      %332 = vst.msk [vmem:[#allocation2 + $0x38] sm:$0xff] %vm324, %v280
      %333 = vst.msk [vmem:[#allocation2 + $0x40] sm:$0xff] %vm324, %v282
      %334 = vst.msk [vmem:[#allocation2 + $0x48] sm:$0xff] %vm324, %v283
      %335 = vst.msk [vmem:[#allocation2 + $0x50] sm:$0xff] %vm324, %v285
      %336 = vst.msk [vmem:[#allocation2 + $0x58] sm:$0xff] %vm324, %v286
      %337 = vst.msk [vmem:[#allocation2 + $0x60] sm:$0xff] %vm324, %v288
      %338 = vst.msk [vmem:[#allocation2 + $0x68] sm:$0xff] %vm324, %v289
      %339 = vst.msk [vmem:[#allocation2 + $0x70] sm:$0xff] %vm324, %v291
      %340 = vst.msk [vmem:[#allocation2 + $0x78] sm:$0xff] %vm324, %v292
      %341 = vst.msk [vmem:[#allocation2 + $0x80] sm:$0xff] %vm324, %v294
      %342 = vst.msk [vmem:[#allocation2 + $0x88] sm:$0xff] %vm324, %v295
      %343 = vst.msk [vmem:[#allocation2 + $0x90] sm:$0xff] %vm324, %v297
      %344 = vst.msk [vmem:[#allocation2 + $0x98] sm:$0xff] %vm324, %v298
      %345 = vst.msk [vmem:[#allocation2 + $0xa0] sm:$0xff] %vm324, %v300
      %346 = vst.msk [vmem:[#allocation2 + $0xa8] sm:$0xff] %vm324, %v301
      %347 = vst.msk [vmem:[#allocation2 + $0xb0] sm:$0xff] %vm324, %v303
      %348 = vst.msk [vmem:[#allocation2 + $0xb8] sm:$0xff] %vm324, %v304
      %349 = vst.msk [vmem:[#allocation2 + $0xc0] sm:$0xff] %vm324, %v306
      %350 = vst.msk [vmem:[#allocation2 + $0xc8] sm:$0xff] %vm324, %v307
      %351 = vst.msk [vmem:[#allocation2 + $0xd0] sm:$0xff] %vm324, %v309
      %352 = vst.msk [vmem:[#allocation2 + $0xd8] sm:$0xff] %vm324, %v310
      %353 = vst.msk [vmem:[#allocation2 + $0xe0] sm:$0xff] %vm324, %v312
      %354 = vst.msk [vmem:[#allocation2 + $0xe8] sm:$0xff] %vm324, %v313
      %355 = vst.msk [vmem:[#allocation2 + $0xf0] sm:$0xff] %vm324, %v315
      %356 = vst.msk [vmem:[#allocation2 + $0xf8] sm:$0xff] %vm324, %v316
      %357 = vst.msk [vmem:[#allocation2 + $0x100] sm:$0xff] %vm324, %v318
      %358 = vst.msk [vmem:[#allocation2 + $0x108] sm:$0xff] %vm324, %v319
      %359 = vst.msk [vmem:[#allocation2 + $0x110] sm:$0xff] %vm324, %v321
      %360 = vst.msk [vmem:[#allocation2 + $0x118] sm:$0xff] %vm324, %v322
      %415 = vrot.lane.b32.xlu0 %v270, 4
      %v416 = vpop.permute.xlu0 %415
      %417 = vrot.lane.b32.xlu0 %v271, 4
      %v418 = vpop.permute.xlu0 %417
      %419 = vrot.lane.b32.xlu0 %v272, 4
      %v420 = vpop.permute.xlu0 %419
      %421 = vrot.lane.b32.xlu0 %v273, 4
      %v422 = vpop.permute.xlu0 %421
      %423 = vrot.lane.b32.xlu0 %v274, 4
      %v424 = vpop.permute.xlu0 %423
      %425 = vrot.lane.b32.xlu0 %v275, 4
      %v426 = vpop.permute.xlu0 %425
      %427 = vrot.lane.b32.xlu0 %v276, 4
      %v428 = vpop.permute.xlu0 %427
      %429 = vrot.lane.b32.xlu0 %v277, 4
      %v430 = vpop.permute.xlu0 %429
      %431 = vrot.lane.b32.xlu0 %v278, 4
      %v432 = vpop.permute.xlu0 %431
      %433 = vrot.lane.b32.xlu0 %v279, 4
      %v434 = vpop.permute.xlu0 %433
      %435 = vrot.lane.b32.xlu0 %v280, 4
      %v436 = vpop.permute.xlu0 %435
      %437 = vrot.lane.b32.xlu0 %v281, 4
      %v438 = vpop.permute.xlu0 %437
      %439 = vrot.lane.b32.xlu0 %v282, 4
      %v440 = vpop.permute.xlu0 %439
      %441 = vrot.lane.b32.xlu0 %v283, 4
      %v442 = vpop.permute.xlu0 %441
      %443 = vrot.lane.b32.xlu0 %v284, 4
      %v444 = vpop.permute.xlu0 %443
      %445 = vrot.lane.b32.xlu0 %v285, 4
      %v446 = vpop.permute.xlu0 %445
      %447 = vrot.lane.b32.xlu0 %v286, 4
      %v448 = vpop.permute.xlu0 %447
      %449 = vrot.lane.b32.xlu0 %v287, 4
      %v450 = vpop.permute.xlu0 %449
      %451 = vrot.lane.b32.xlu0 %v288, 4
      %v452 = vpop.permute.xlu0 %451
      %453 = vrot.lane.b32.xlu0 %v289, 4
      %v454 = vpop.permute.xlu0 %453
      %455 = vrot.lane.b32.xlu0 %v290, 4
      %v456 = vpop.permute.xlu0 %455
      %457 = vrot.lane.b32.xlu0 %v291, 4
      %v458 = vpop.permute.xlu0 %457
      %459 = vrot.lane.b32.xlu0 %v292, 4
      %v460 = vpop.permute.xlu0 %459
      %461 = vrot.lane.b32.xlu0 %v293, 4
      %v462 = vpop.permute.xlu0 %461
      %463 = vrot.lane.b32.xlu0 %v294, 4
      %v464 = vpop.permute.xlu0 %463
      %465 = vrot.lane.b32.xlu0 %v295, 4
      %v466 = vpop.permute.xlu0 %465
      %467 = vrot.lane.b32.xlu0 %v296, 4
      %v468 = vpop.permute.xlu0 %467
      %469 = vrot.lane.b32.xlu0 %v297, 4
      %v470 = vpop.permute.xlu0 %469
      %471 = vrot.lane.b32.xlu0 %v298, 4
      %v472 = vpop.permute.xlu0 %471
      %473 = vrot.lane.b32.xlu0 %v299, 4
      %v474 = vpop.permute.xlu0 %473
      %475 = vrot.lane.b32.xlu0 %v300, 4
      %v476 = vpop.permute.xlu0 %475
      %477 = vrot.lane.b32.xlu0 %v301, 4
      %v478 = vpop.permute.xlu0 %477
      %479 = vrot.lane.b32.xlu0 %v302, 4
      %v480 = vpop.permute.xlu0 %479
      %481 = vrot.lane.b32.xlu0 %v303, 4
      %v482 = vpop.permute.xlu0 %481
      %483 = vrot.lane.b32.xlu0 %v304, 4
      %v484 = vpop.permute.xlu0 %483
      %485 = vrot.lane.b32.xlu0 %v305, 4
      %v486 = vpop.permute.xlu0 %485
      %487 = vrot.lane.b32.xlu0 %v306, 4
      %v488 = vpop.permute.xlu0 %487
      %489 = vrot.lane.b32.xlu0 %v307, 4
      %v490 = vpop.permute.xlu0 %489
      %491 = vrot.lane.b32.xlu0 %v308, 4
      %v492 = vpop.permute.xlu0 %491
      %493 = vrot.lane.b32.xlu0 %v309, 4
      %v494 = vpop.permute.xlu0 %493
      %495 = vrot.lane.b32.xlu0 %v310, 4
      %v496 = vpop.permute.xlu0 %495
      %497 = vrot.lane.b32.xlu0 %v311, 4
      %v498 = vpop.permute.xlu0 %497
      %499 = vrot.lane.b32.xlu0 %v312, 4
      %v500 = vpop.permute.xlu0 %499
      %501 = vrot.lane.b32.xlu0 %v313, 4
      %v502 = vpop.permute.xlu0 %501
      %503 = vrot.lane.b32.xlu0 %v314, 4
      %v504 = vpop.permute.xlu0 %503
      %505 = vrot.lane.b32.xlu0 %v315, 4
      %v506 = vpop.permute.xlu0 %505
      %507 = vrot.lane.b32.xlu0 %v316, 4
      %v508 = vpop.permute.xlu0 %507
      %509 = vrot.lane.b32.xlu0 %v317, 4
      %v510 = vpop.permute.xlu0 %509
      %511 = vrot.lane.b32.xlu0 %v318, 4
      %v512 = vpop.permute.xlu0 %511
      %513 = vrot.lane.b32.xlu0 %v319, 4
      %v514 = vpop.permute.xlu0 %513
      %515 = vrot.lane.b32.xlu0 %v320, 4
      %v516 = vpop.permute.xlu0 %515
      %517 = vrot.lane.b32.xlu0 %v321, 4
      %v518 = vpop.permute.xlu0 %517
      %519 = vrot.lane.b32.xlu0 %v322, 4
      %v520 = vpop.permute.xlu0 %519
      %521 = vrot.lane.b32.xlu0 %v323, 4
      %v522 = vpop.permute.xlu0 %521
      %vm577 = vcmask 64545
      %578 = vst.msk [vmem:[#allocation2 - $0x1] sm:$0xfe] %vm577, %v416
      %vm579 = vcmask 64544
      %580 = vst.msk [vmem:[#allocation2 + $0x7] sm:$0xff] %vm579, %v418
      %vm581 = vcmask 57376
      %582 = vst.msk [vmem:[#allocation2 + $0xf] sm:$0x1] %vm581, %v420
      %583 = vst.msk [vmem:[#allocation2 + $0xf] sm:$0xfe] %vm577, %v422
      %584 = vst.msk [vmem:[#allocation2 + $0x17] sm:$0xff] %vm579, %v424
      %585 = vst.msk [vmem:[#allocation2 + $0x1f] sm:$0x1] %vm581, %v426
      %586 = vst.msk [vmem:[#allocation2 + $0x1f] sm:$0xfe] %vm577, %v428
      %587 = vst.msk [vmem:[#allocation2 + $0x27] sm:$0xff] %vm579, %v430
      %588 = vst.msk [vmem:[#allocation2 + $0x2f] sm:$0x1] %vm581, %v432
      %589 = vst.msk [vmem:[#allocation2 + $0x2f] sm:$0xfe] %vm577, %v434
      %590 = vst.msk [vmem:[#allocation2 + $0x37] sm:$0xff] %vm579, %v436
      %591 = vst.msk [vmem:[#allocation2 + $0x3f] sm:$0x1] %vm581, %v438
      %592 = vst.msk [vmem:[#allocation2 + $0x3f] sm:$0xfe] %vm577, %v440
      %593 = vst.msk [vmem:[#allocation2 + $0x47] sm:$0xff] %vm579, %v442
      %594 = vst.msk [vmem:[#allocation2 + $0x4f] sm:$0x1] %vm581, %v444
      %595 = vst.msk [vmem:[#allocation2 + $0x4f] sm:$0xfe] %vm577, %v446
      %596 = vst.msk [vmem:[#allocation2 + $0x57] sm:$0xff] %vm579, %v448
      %597 = vst.msk [vmem:[#allocation2 + $0x5f] sm:$0x1] %vm581, %v450
      %598 = vst.msk [vmem:[#allocation2 + $0x5f] sm:$0xfe] %vm577, %v452
      %599 = vst.msk [vmem:[#allocation2 + $0x67] sm:$0xff] %vm579, %v454
      %600 = vst.msk [vmem:[#allocation2 + $0x6f] sm:$0x1] %vm581, %v456
      %601 = vst.msk [vmem:[#allocation2 + $0x6f] sm:$0xfe] %vm577, %v458
      %602 = vst.msk [vmem:[#allocation2 + $0x77] sm:$0xff] %vm579, %v460
      %603 = vst.msk [vmem:[#allocation2 + $0x7f] sm:$0x1] %vm581, %v462
      %604 = vst.msk [vmem:[#allocation2 + $0x7f] sm:$0xfe] %vm577, %v464
      %605 = vst.msk [vmem:[#allocation2 + $0x87] sm:$0xff] %vm579, %v466
      %606 = vst.msk [vmem:[#allocation2 + $0x8f] sm:$0x1] %vm581, %v468
      %607 = vst.msk [vmem:[#allocation2 + $0x8f] sm:$0xfe] %vm577, %v470
      %608 = vst.msk [vmem:[#allocation2 + $0x97] sm:$0xff] %vm579, %v472
      %609 = vst.msk [vmem:[#allocation2 + $0x9f] sm:$0x1] %vm581, %v474
      %610 = vst.msk [vmem:[#allocation2 + $0x9f] sm:$0xfe] %vm577, %v476
      %611 = vst.msk [vmem:[#allocation2 + $0xa7] sm:$0xff] %vm579, %v478
      %612 = vst.msk [vmem:[#allocation2 + $0xaf] sm:$0x1] %vm581, %v480
      %613 = vst.msk [vmem:[#allocation2 + $0xaf] sm:$0xfe] %vm577, %v482
      %614 = vst.msk [vmem:[#allocation2 + $0xb7] sm:$0xff] %vm579, %v484
      %615 = vst.msk [vmem:[#allocation2 + $0xbf] sm:$0x1] %vm581, %v486
      %616 = vst.msk [vmem:[#allocation2 + $0xbf] sm:$0xfe] %vm577, %v488
      %617 = vst.msk [vmem:[#allocation2 + $0xc7] sm:$0xff] %vm579, %v490
      %618 = vst.msk [vmem:[#allocation2 + $0xcf] sm:$0x1] %vm581, %v492
      %619 = vst.msk [vmem:[#allocation2 + $0xcf] sm:$0xfe] %vm577, %v494
      %620 = vst.msk [vmem:[#allocation2 + $0xd7] sm:$0xff] %vm579, %v496
      %621 = vst.msk [vmem:[#allocation2 + $0xdf] sm:$0x1] %vm581, %v498
      %622 = vst.msk [vmem:[#allocation2 + $0xdf] sm:$0xfe] %vm577, %v500
      %623 = vst.msk [vmem:[#allocation2 + $0xe7] sm:$0xff] %vm579, %v502
      %624 = vst.msk [vmem:[#allocation2 + $0xef] sm:$0x1] %vm581, %v504
      %625 = vst.msk [vmem:[#allocation2 + $0xef] sm:$0xfe] %vm577, %v506
      %626 = vst.msk [vmem:[#allocation2 + $0xf7] sm:$0xff] %vm579, %v508
      %627 = vst.msk [vmem:[#allocation2 + $0xff] sm:$0x1] %vm581, %v510
      %628 = vst.msk [vmem:[#allocation2 + $0xff] sm:$0xfe] %vm577, %v512
      %629 = vst.msk [vmem:[#allocation2 + $0x107] sm:$0xff] %vm579, %v514
      %630 = vst.msk [vmem:[#allocation2 + $0x10f] sm:$0x1] %vm581, %v516
      %631 = vst.msk [vmem:[#allocation2 + $0x10f] sm:$0xfe] %vm577, %v518
      %632 = vst.msk [vmem:[#allocation2 + $0x117] sm:$0xff] %vm579, %v520
      %633 = vst.msk [vmem:[#allocation2 + $0x11f] sm:$0x1] %vm581, %v522
      %634 = vrot.lane.b32.xlu0 %v270, 8
      %v635 = vpop.permute.xlu0 %634
      %636 = vrot.lane.b32.xlu0 %v271, 8
      %v637 = vpop.permute.xlu0 %636
      %638 = vrot.lane.b32.xlu0 %v272, 8
      %v639 = vpop.permute.xlu0 %638
      %640 = vrot.lane.b32.xlu0 %v273, 8
      %v641 = vpop.permute.xlu0 %640
      %642 = vrot.lane.b32.xlu0 %v274, 8
      %v643 = vpop.permute.xlu0 %642
      %644 = vrot.lane.b32.xlu0 %v275, 8
      %v645 = vpop.permute.xlu0 %644
      %646 = vrot.lane.b32.xlu0 %v276, 8
      %v647 = vpop.permute.xlu0 %646
      %648 = vrot.lane.b32.xlu0 %v277, 8
      %v649 = vpop.permute.xlu0 %648
      %650 = vrot.lane.b32.xlu0 %v278, 8
      %v651 = vpop.permute.xlu0 %650
      %652 = vrot.lane.b32.xlu0 %v279, 8
      %v653 = vpop.permute.xlu0 %652
      %654 = vrot.lane.b32.xlu0 %v280, 8
      %v655 = vpop.permute.xlu0 %654
      %656 = vrot.lane.b32.xlu0 %v281, 8
      %v657 = vpop.permute.xlu0 %656
      %658 = vrot.lane.b32.xlu0 %v282, 8
      %v659 = vpop.permute.xlu0 %658
      %660 = vrot.lane.b32.xlu0 %v283, 8
      %v661 = vpop.permute.xlu0 %660
      %662 = vrot.lane.b32.xlu0 %v284, 8
      %v663 = vpop.permute.xlu0 %662
      %664 = vrot.lane.b32.xlu0 %v285, 8
      %v665 = vpop.permute.xlu0 %664
      %666 = vrot.lane.b32.xlu0 %v286, 8
      %v667 = vpop.permute.xlu0 %666
      %668 = vrot.lane.b32.xlu0 %v287, 8
      %v669 = vpop.permute.xlu0 %668
      %670 = vrot.lane.b32.xlu0 %v288, 8
      %v671 = vpop.permute.xlu0 %670
      %672 = vrot.lane.b32.xlu0 %v289, 8
      %v673 = vpop.permute.xlu0 %672
      %674 = vrot.lane.b32.xlu0 %v290, 8
      %v675 = vpop.permute.xlu0 %674
      %676 = vrot.lane.b32.xlu0 %v291, 8
      %v677 = vpop.permute.xlu0 %676
      %678 = vrot.lane.b32.xlu0 %v292, 8
      %v679 = vpop.permute.xlu0 %678
      %680 = vrot.lane.b32.xlu0 %v293, 8
      %v681 = vpop.permute.xlu0 %680
      %682 = vrot.lane.b32.xlu0 %v294, 8
      %v683 = vpop.permute.xlu0 %682
      %684 = vrot.lane.b32.xlu0 %v295, 8
      %v685 = vpop.permute.xlu0 %684
      %686 = vrot.lane.b32.xlu0 %v296, 8
      %v687 = vpop.permute.xlu0 %686
      %688 = vrot.lane.b32.xlu0 %v297, 8
      %v689 = vpop.permute.xlu0 %688
      %690 = vrot.lane.b32.xlu0 %v298, 8
      %v691 = vpop.permute.xlu0 %690
      %692 = vrot.lane.b32.xlu0 %v299, 8
      %v693 = vpop.permute.xlu0 %692
      %694 = vrot.lane.b32.xlu0 %v300, 8
      %v695 = vpop.permute.xlu0 %694
      %696 = vrot.lane.b32.xlu0 %v301, 8
      %v697 = vpop.permute.xlu0 %696
      %698 = vrot.lane.b32.xlu0 %v302, 8
      %v699 = vpop.permute.xlu0 %698
      %700 = vrot.lane.b32.xlu0 %v303, 8
      %v701 = vpop.permute.xlu0 %700
      %702 = vrot.lane.b32.xlu0 %v304, 8
      %v703 = vpop.permute.xlu0 %702
      %704 = vrot.lane.b32.xlu0 %v305, 8
      %v705 = vpop.permute.xlu0 %704
      %706 = vrot.lane.b32.xlu0 %v306, 8
      %v707 = vpop.permute.xlu0 %706
      %708 = vrot.lane.b32.xlu0 %v307, 8
      %v709 = vpop.permute.xlu0 %708
      %710 = vrot.lane.b32.xlu0 %v308, 8
      %v711 = vpop.permute.xlu0 %710
      %712 = vrot.lane.b32.xlu0 %v309, 8
      %v713 = vpop.permute.xlu0 %712
      %714 = vrot.lane.b32.xlu0 %v310, 8
      %v715 = vpop.permute.xlu0 %714
      %716 = vrot.lane.b32.xlu0 %v311, 8
      %v717 = vpop.permute.xlu0 %716
      %718 = vrot.lane.b32.xlu0 %v312, 8
      %v719 = vpop.permute.xlu0 %718
      %720 = vrot.lane.b32.xlu0 %v313, 8
      %v721 = vpop.permute.xlu0 %720
      %722 = vrot.lane.b32.xlu0 %v314, 8
      %v723 = vpop.permute.xlu0 %722
      %724 = vrot.lane.b32.xlu0 %v315, 8
      %v725 = vpop.permute.xlu0 %724
      %726 = vrot.lane.b32.xlu0 %v316, 8
      %v727 = vpop.permute.xlu0 %726
      %728 = vrot.lane.b32.xlu0 %v317, 8
      %v729 = vpop.permute.xlu0 %728
      %730 = vrot.lane.b32.xlu0 %v318, 8
      %v731 = vpop.permute.xlu0 %730
      %732 = vrot.lane.b32.xlu0 %v319, 8
      %v733 = vpop.permute.xlu0 %732
      %734 = vrot.lane.b32.xlu0 %v320, 8
      %v735 = vpop.permute.xlu0 %734
      %736 = vrot.lane.b32.xlu0 %v321, 8
      %v737 = vpop.permute.xlu0 %736
      %738 = vrot.lane.b32.xlu0 %v322, 8
      %v739 = vpop.permute.xlu0 %738
      %740 = vrot.lane.b32.xlu0 %v323, 8
      %v741 = vpop.permute.xlu0 %740
      %vm796 = vcmask 97346
      %797 = vst.msk [vmem:[#allocation2 - $0x2] sm:$0xfc] %vm796, %v635
      %vm798 = vcmask 97344
      %799 = vst.msk [vmem:[#allocation2 + $0x6] sm:$0xff] %vm798, %v637
      %vm800 = vcmask 91200
      %801 = vst.msk [vmem:[#allocation2 + $0xe] sm:$0x3] %vm800, %v639
      %802 = vst.msk [vmem:[#allocation2 + $0xe] sm:$0xfc] %vm796, %v641
      %803 = vst.msk [vmem:[#allocation2 + $0x16] sm:$0xff] %vm798, %v643
      %804 = vst.msk [vmem:[#allocation2 + $0x1e] sm:$0x3] %vm800, %v645
      %805 = vst.msk [vmem:[#allocation2 + $0x1e] sm:$0xfc] %vm796, %v647
      %806 = vst.msk [vmem:[#allocation2 + $0x26] sm:$0xff] %vm798, %v649
      %807 = vst.msk [vmem:[#allocation2 + $0x2e] sm:$0x3] %vm800, %v651
      %808 = vst.msk [vmem:[#allocation2 + $0x2e] sm:$0xfc] %vm796, %v653
      %809 = vst.msk [vmem:[#allocation2 + $0x36] sm:$0xff] %vm798, %v655
      %810 = vst.msk [vmem:[#allocation2 + $0x3e] sm:$0x3] %vm800, %v657
      %811 = vst.msk [vmem:[#allocation2 + $0x3e] sm:$0xfc] %vm796, %v659
      %812 = vst.msk [vmem:[#allocation2 + $0x46] sm:$0xff] %vm798, %v661
      %813 = vst.msk [vmem:[#allocation2 + $0x4e] sm:$0x3] %vm800, %v663
      %814 = vst.msk [vmem:[#allocation2 + $0x4e] sm:$0xfc] %vm796, %v665
      %815 = vst.msk [vmem:[#allocation2 + $0x56] sm:$0xff] %vm798, %v667
      %816 = vst.msk [vmem:[#allocation2 + $0x5e] sm:$0x3] %vm800, %v669
      %817 = vst.msk [vmem:[#allocation2 + $0x5e] sm:$0xfc] %vm796, %v671
      %818 = vst.msk [vmem:[#allocation2 + $0x66] sm:$0xff] %vm798, %v673
      %819 = vst.msk [vmem:[#allocation2 + $0x6e] sm:$0x3] %vm800, %v675
      %820 = vst.msk [vmem:[#allocation2 + $0x6e] sm:$0xfc] %vm796, %v677
      %821 = vst.msk [vmem:[#allocation2 + $0x76] sm:$0xff] %vm798, %v679
      %822 = vst.msk [vmem:[#allocation2 + $0x7e] sm:$0x3] %vm800, %v681
      %823 = vst.msk [vmem:[#allocation2 + $0x7e] sm:$0xfc] %vm796, %v683
      %824 = vst.msk [vmem:[#allocation2 + $0x86] sm:$0xff] %vm798, %v685
      %825 = vst.msk [vmem:[#allocation2 + $0x8e] sm:$0x3] %vm800, %v687
      %826 = vst.msk [vmem:[#allocation2 + $0x8e] sm:$0xfc] %vm796, %v689
      %827 = vst.msk [vmem:[#allocation2 + $0x96] sm:$0xff] %vm798, %v691
      %828 = vst.msk [vmem:[#allocation2 + $0x9e] sm:$0x3] %vm800, %v693
      %829 = vst.msk [vmem:[#allocation2 + $0x9e] sm:$0xfc] %vm796, %v695
      %830 = vst.msk [vmem:[#allocation2 + $0xa6] sm:$0xff] %vm798, %v697
      %831 = vst.msk [vmem:[#allocation2 + $0xae] sm:$0x3] %vm800, %v699
      %832 = vst.msk [vmem:[#allocation2 + $0xae] sm:$0xfc] %vm796, %v701
      %833 = vst.msk [vmem:[#allocation2 + $0xb6] sm:$0xff] %vm798, %v703
      %834 = vst.msk [vmem:[#allocation2 + $0xbe] sm:$0x3] %vm800, %v705
      %835 = vst.msk [vmem:[#allocation2 + $0xbe] sm:$0xfc] %vm796, %v707
      %836 = vst.msk [vmem:[#allocation2 + $0xc6] sm:$0xff] %vm798, %v709
      %837 = vst.msk [vmem:[#allocation2 + $0xce] sm:$0x3] %vm800, %v711
      %838 = vst.msk [vmem:[#allocation2 + $0xce] sm:$0xfc] %vm796, %v713
      %839 = vst.msk [vmem:[#allocation2 + $0xd6] sm:$0xff] %vm798, %v715
      %840 = vst.msk [vmem:[#allocation2 + $0xde] sm:$0x3] %vm800, %v717
      %841 = vst.msk [vmem:[#allocation2 + $0xde] sm:$0xfc] %vm796, %v719
      %842 = vst.msk [vmem:[#allocation2 + $0xe6] sm:$0xff] %vm798, %v721
      %843 = vst.msk [vmem:[#allocation2 + $0xee] sm:$0x3] %vm800, %v723
      %844 = vst.msk [vmem:[#allocation2 + $0xee] sm:$0xfc] %vm796, %v725
      %845 = vst.msk [vmem:[#allocation2 + $0xf6] sm:$0xff] %vm798, %v727
      %846 = vst.msk [vmem:[#allocation2 + $0xfe] sm:$0x3] %vm800, %v729
      %847 = vst.msk [vmem:[#allocation2 + $0xfe] sm:$0xfc] %vm796, %v731
      %848 = vst.msk [vmem:[#allocation2 + $0x106] sm:$0xff] %vm798, %v733
      %849 = vst.msk [vmem:[#allocation2 + $0x10e] sm:$0x3] %vm800, %v735
      %850 = vst.msk [vmem:[#allocation2 + $0x10e] sm:$0xfc] %vm796, %v737
      %851 = vst.msk [vmem:[#allocation2 + $0x116] sm:$0xff] %vm798, %v739
      %852 = vst.msk [vmem:[#allocation2 + $0x11e] sm:$0x3] %vm800, %v741
      %v853 = vld [vmem:[#allocation2] sm:$0xff]
      %v854 = vld [vmem:[#allocation2 + $0x8] sm:$0xff]
      %v855 = vld [vmem:[#allocation2 + $0x10] sm:$0xff]
      %v856 = vld [vmem:[#allocation2 + $0x18] sm:$0xff]
      %v857 = vld [vmem:[#allocation2 + $0x20] sm:$0xff]
      %v858 = vld [vmem:[#allocation2 + $0x28] sm:$0xff]
      %v859 = vld [vmem:[#allocation2 + $0x30] sm:$0xff]
      %v860 = vld [vmem:[#allocation2 + $0x38] sm:$0xff]
      %v861 = vld [vmem:[#allocation2 + $0x40] sm:$0xff]
      %v862 = vld [vmem:[#allocation2 + $0x48] sm:$0xff]
      %v863 = vld [vmem:[#allocation2 + $0x50] sm:$0xff]
      %v864 = vld [vmem:[#allocation2 + $0x58] sm:$0xff]
      %v865 = vld [vmem:[#allocation2 + $0x60] sm:$0xff]
      %v866 = vld [vmem:[#allocation2 + $0x68] sm:$0xff]
      %v867 = vld [vmem:[#allocation2 + $0x70] sm:$0xff]
      %v868 = vld [vmem:[#allocation2 + $0x78] sm:$0xff]
      %v869 = vld [vmem:[#allocation2 + $0x80] sm:$0xff]
      %v870 = vld [vmem:[#allocation2 + $0x88] sm:$0xff]
      %v871 = vld [vmem:[#allocation2 + $0x90] sm:$0xff]
      %v872 = vld [vmem:[#allocation2 + $0x98] sm:$0xff]
      %v873 = vld [vmem:[#allocation2 + $0xa0] sm:$0xff]
      %v874 = vld [vmem:[#allocation2 + $0xa8] sm:$0xff]
      %v875 = vld [vmem:[#allocation2 + $0xb0] sm:$0xff]
      %v876 = vld [vmem:[#allocation2 + $0xb8] sm:$0xff]
      %v877 = vld [vmem:[#allocation2 + $0xc0] sm:$0xff]
      %v878 = vld [vmem:[#allocation2 + $0xc8] sm:$0xff]
      %v879 = vld [vmem:[#allocation2 + $0xd0] sm:$0xff]
      %v880 = vld [vmem:[#allocation2 + $0xd8] sm:$0xff]
      %v881 = vld [vmem:[#allocation2 + $0xe0] sm:$0xff]
      %v882 = vld [vmem:[#allocation2 + $0xe8] sm:$0xff]
      %v883 = vld [vmem:[#allocation2 + $0xf0] sm:$0xff]
      %v884 = vld [vmem:[#allocation2 + $0xf8] sm:$0xff]
      %v885 = vpack.c.bf16 %v854, %v853
      %v886 = vpack.c.bf16 %v856, %v855
      %v887 = vpack.c.bf16 %v858, %v857
      %v888 = vpack.c.bf16 %v860, %v859
      %v889 = vpack.c.bf16 %v862, %v861
      %v890 = vpack.c.bf16 %v864, %v863
      %v891 = vpack.c.bf16 %v866, %v865
      %v892 = vpack.c.bf16 %v868, %v867
      %v893 = vpack.c.bf16 %v870, %v869
      %v894 = vpack.c.bf16 %v872, %v871
      %v895 = vpack.c.bf16 %v874, %v873
      %v896 = vpack.c.bf16 %v876, %v875
      %v897 = vpack.c.bf16 %v878, %v877
      %v898 = vpack.c.bf16 %v880, %v879
      %v899 = vpack.c.bf16 %v882, %v881
      %v900 = vpack.c.bf16 %v884, %v883
      %v901 = vld [vmem:[%s1] sm:$0xf]
      %v902 = vld [vmem:[%s1 + $0x4] sm:$0x3]
      %s903 = scalar_lea.vmem [#allocation2], 16
      %v904 = vld [vmem:[%s903] sm:$0xff]
      %v905 = vld [vmem:[%s903 + $0x8] sm:$0xff]
      %v906 = vld [vmem:[%s903 + $0x10] sm:$0xff]
      %v907 = vld [vmem:[%s903 + $0x18] sm:$0xff]
      %v908 = vld [vmem:[%s903 + $0x20] sm:$0xff]
      %v909 = vld [vmem:[%s903 + $0x28] sm:$0xff]
      %v910 = vld [vmem:[%s903 + $0x30] sm:$0xff]
      %v911 = vld [vmem:[%s903 + $0x38] sm:$0xff]
      %v912 = vld [vmem:[%s903 + $0x40] sm:$0xff]
      %v913 = vld [vmem:[%s903 + $0x48] sm:$0xff]
      %v914 = vld [vmem:[%s903 + $0x50] sm:$0xff]
      %v915 = vld [vmem:[%s903 + $0x58] sm:$0xff]
      %v916 = vld [vmem:[%s903 + $0x60] sm:$0xff]
      %v917 = vld [vmem:[%s903 + $0x68] sm:$0xff]
      %v918 = vld [vmem:[%s903 + $0x70] sm:$0xff]
      %v919 = vld [vmem:[%s903 + $0x78] sm:$0xff]
      %v920 = vld [vmem:[%s903 + $0x80] sm:$0xff]
      %v921 = vld [vmem:[%s903 + $0x88] sm:$0xff]
      %v922 = vld [vmem:[%s903 + $0x90] sm:$0xff]
      %v923 = vld [vmem:[%s903 + $0x98] sm:$0xff]
      %v924 = vld [vmem:[%s903 + $0xa0] sm:$0xff]
      %v925 = vld [vmem:[%s903 + $0xa8] sm:$0xff]
      %v926 = vld [vmem:[%s903 + $0xb0] sm:$0xff]
      %v927 = vld [vmem:[%s903 + $0xb8] sm:$0xff]
      %v928 = vld [vmem:[%s903 + $0xc0] sm:$0xff]
      %v929 = vld [vmem:[%s903 + $0xc8] sm:$0xff]
      %v930 = vld [vmem:[%s903 + $0xd0] sm:$0xff]
      %v931 = vld [vmem:[%s903 + $0xd8] sm:$0xff]
      %v932 = vld [vmem:[%s903 + $0xe0] sm:$0xff]
      %v933 = vld [vmem:[%s903 + $0xe8] sm:$0xff]
      %v934 = vld [vmem:[%s903 + $0xf0] sm:$0xff]
      %v935 = vld [vmem:[%s903 + $0xf8] sm:$0xff]
      %v936 = vpack.c.bf16 %v905, %v904
      %v937 = vpack.c.bf16 %v907, %v906
      %v938 = vpack.c.bf16 %v909, %v908
      %v939 = vpack.c.bf16 %v911, %v910
      %v940 = vpack.c.bf16 %v913, %v912
      %v941 = vpack.c.bf16 %v915, %v914
      %v942 = vpack.c.bf16 %v917, %v916
      %v943 = vpack.c.bf16 %v919, %v918
      %v944 = vpack.c.bf16 %v921, %v920
      %v945 = vpack.c.bf16 %v923, %v922
      %v946 = vpack.c.bf16 %v925, %v924
      %v947 = vpack.c.bf16 %v927, %v926
      %v948 = vpack.c.bf16 %v929, %v928
      %v949 = vpack.c.bf16 %v931, %v930
      %v950 = vpack.c.bf16 %v933, %v932
      %v951 = vpack.c.bf16 %v935, %v934
      %s952 = scalar_lea.vmem %s1, 8
      %v953 = vld [vmem:[%s952] sm:$0xf]
      %v954 = vld [vmem:[%s952 + $0x4] sm:$0x3]
      %v957 = vunpack.c.l.b16 %v953
      %v958 = vunpack.c.l.b16 %v954
      %v959 = vpack.c.b16 %v958, %v957
      %vm960 = vcmask 97280
      %v962 = vsel %vm960, %v936, 0
      %v965 = vsel %vm960, %v937, 0
      %v968 = vsel %vm960, %v938, 0
      %v971 = vsel %vm960, %v939, 0
      %v974 = vsel %vm960, %v940, 0
      %v977 = vsel %vm960, %v941, 0
      %v980 = vsel %vm960, %v942, 0
      %v983 = vsel %vm960, %v943, 0
      %v986 = vsel %vm960, %v944, 0
      %v989 = vsel %vm960, %v945, 0
      %v992 = vsel %vm960, %v946, 0
      %v995 = vsel %vm960, %v947, 0
      %v998 = vsel %vm960, %v948, 0
      %v1001 = vsel %vm960, %v949, 0
      %v1004 = vsel %vm960, %v950, 0
      %v1007 = vsel %vm960, %v951, 0
      %vm1009 = vcmask 1045504
      %v1011 = vsel %vm1009, %v959, 0
      %1013 = vmatprep.subr.bf16.mxu0 0
      %1014 = vmatpush1.bf16.msra.mxu0 0
      %1015 = vmatprep.subr.bf16.mxu0 0
      %1016 = vmatpush1.bf16.msra.mxu0 0
      %1017 = vmatprep.subr.bf16.mxu0 0
      %1018 = vmatpush1.bf16.msra.mxu0 0
      %1019 = vmatprep.subr.bf16.mxu0 0
      %1020 = vmatpush1.bf16.msra.mxu0 0
      %1021 = vmatprep.subr.bf16.mxu0 0
      %1022 = vmatpush1.bf16.msra.mxu0 0
      %1023 = vmatprep.subr.bf16.mxu0 0
      %1024 = vmatpush1.bf16.msra.mxu0 0
      %1025 = vmatprep.subr.bf16.mxu0 0
      %1026 = vmatpush1.bf16.msra.mxu0 0
      %1027 = vmatprep.subr.bf16.mxu0 0
      %1028 = vmatpush1.bf16.msra.mxu0 %v1011
      %1029 = vmatprep.subr.bf16.mxu0 0
      %1030 = vmatpush2.bf16.msra.mxu0 0
      %1031 = vmatprep.subr.bf16.mxu0 0
      %1032 = vmatpush2.bf16.msra.mxu0 0
      %1033 = vmatprep.subr.bf16.mxu0 0
      %1034 = vmatpush2.bf16.msra.mxu0 0
      %1035 = vmatprep.subr.bf16.mxu0 0
      %1036 = vmatpush2.bf16.msra.mxu0 0
      %1037 = vmatprep.subr.bf16.mxu0 0
      %1038 = vmatpush2.bf16.msra.mxu0 0
      %1039 = vmatprep.subr.bf16.mxu0 0
      %1040 = vmatpush2.bf16.msra.mxu0 0
      %1041 = vmatprep.subr.bf16.mxu0 0
      %1042 = vmatpush2.bf16.msra.mxu0 0
      %1043 = vmatprep.subr.bf16.mxu0 0
      %1044 = vmatpush2.bf16.msra.mxu0 0
      %1045 = vmatprep.mubr.bf16.mxu0 0
      %1046 = vmatmul.mubr.bf16.gmra.mxu0 %v962
      %v1047 = vpop.f32.mrf.mxu0
      %v1048 = vadd.f32 0.0, %v1047
      %v1049 = vpop.f32.mrf.mxu0
      %v1050 = vpop.f32.mrf.mxu0
      %v1051 = vadd.f32 0.0, %v1050
      %v1052 = vpop.f32.mrf.mxu0
      %1053 = vmatprep.mubr.bf16.mxu0 0
      %1054 = vmatmul.mubr.bf16.gmra.mxu0 %v965
      %v1055 = vpop.f32.mrf.mxu0
      %v1056 = vadd.f32 0.0, %v1055
      %v1057 = vpop.f32.mrf.mxu0
      %v1058 = vpop.f32.mrf.mxu0
      %v1059 = vadd.f32 0.0, %v1058
      %v1060 = vpop.f32.mrf.mxu0
      %1061 = vmatprep.mubr.bf16.mxu0 0
      %1062 = vmatmul.mubr.bf16.gmra.mxu0 %v968
      %v1063 = vpop.f32.mrf.mxu0
      %v1064 = vadd.f32 0.0, %v1063
      %v1065 = vpop.f32.mrf.mxu0
      %v1066 = vpop.f32.mrf.mxu0
      %v1067 = vadd.f32 0.0, %v1066
      %v1068 = vpop.f32.mrf.mxu0
      %1069 = vmatprep.mubr.bf16.mxu0 0
      %1070 = vmatmul.mubr.bf16.gmra.mxu0 %v971
      %v1071 = vpop.f32.mrf.mxu0
      %v1072 = vadd.f32 0.0, %v1071
      %v1073 = vpop.f32.mrf.mxu0
      %v1074 = vpop.f32.mrf.mxu0
      %v1075 = vadd.f32 0.0, %v1074
      %v1076 = vpop.f32.mrf.mxu0
      %1077 = vmatprep.mubr.bf16.mxu0 0
      %1078 = vmatmul.mubr.bf16.gmra.mxu0 %v974
      %v1079 = vpop.f32.mrf.mxu0
      %v1080 = vadd.f32 0.0, %v1079
      %v1081 = vpop.f32.mrf.mxu0
      %v1082 = vpop.f32.mrf.mxu0
      %v1083 = vadd.f32 0.0, %v1082
      %v1084 = vpop.f32.mrf.mxu0
      %1085 = vmatprep.mubr.bf16.mxu0 0
      %1086 = vmatmul.mubr.bf16.gmra.mxu0 %v977
      %v1087 = vpop.f32.mrf.mxu0
      %v1088 = vadd.f32 0.0, %v1087
      %v1089 = vpop.f32.mrf.mxu0
      %v1090 = vpop.f32.mrf.mxu0
      %v1091 = vadd.f32 0.0, %v1090
      %v1092 = vpop.f32.mrf.mxu0
      %1093 = vmatprep.mubr.bf16.mxu0 0
      %1094 = vmatmul.mubr.bf16.gmra.mxu0 %v980
      %v1095 = vpop.f32.mrf.mxu0
      %v1096 = vadd.f32 0.0, %v1095
      %v1097 = vpop.f32.mrf.mxu0
      %v1098 = vpop.f32.mrf.mxu0
      %v1099 = vadd.f32 0.0, %v1098
      %v1100 = vpop.f32.mrf.mxu0
      %1101 = vmatprep.mubr.bf16.mxu0 0
      %1102 = vmatmul.mubr.bf16.gmra.mxu0 %v983
      %v1103 = vpop.f32.mrf.mxu0
      %v1104 = vadd.f32 0.0, %v1103
      %v1105 = vpop.f32.mrf.mxu0
      %v1106 = vpop.f32.mrf.mxu0
      %v1107 = vadd.f32 0.0, %v1106
      %v1108 = vpop.f32.mrf.mxu0
      %1109 = vmatprep.mubr.bf16.mxu0 0
      %1110 = vmatmul.mubr.bf16.gmra.mxu0 %v986
      %v1111 = vpop.f32.mrf.mxu0
      %v1112 = vadd.f32 0.0, %v1111
      %v1113 = vpop.f32.mrf.mxu0
      %v1114 = vpop.f32.mrf.mxu0
      %v1115 = vadd.f32 0.0, %v1114
      %v1116 = vpop.f32.mrf.mxu0
      %1117 = vmatprep.mubr.bf16.mxu0 0
      %1118 = vmatmul.mubr.bf16.gmra.mxu0 %v989
      %v1119 = vpop.f32.mrf.mxu0
      %v1120 = vadd.f32 0.0, %v1119
      %v1121 = vpop.f32.mrf.mxu0
      %v1122 = vpop.f32.mrf.mxu0
      %v1123 = vadd.f32 0.0, %v1122
      %v1124 = vpop.f32.mrf.mxu0
      %1125 = vmatprep.mubr.bf16.mxu0 0
      %1126 = vmatmul.mubr.bf16.gmra.mxu0 %v992
      %v1127 = vpop.f32.mrf.mxu0
      %v1128 = vadd.f32 0.0, %v1127
      %v1129 = vpop.f32.mrf.mxu0
      %v1130 = vpop.f32.mrf.mxu0
      %v1131 = vadd.f32 0.0, %v1130
      %v1132 = vpop.f32.mrf.mxu0
      %1133 = vmatprep.mubr.bf16.mxu0 0
      %1134 = vmatmul.mubr.bf16.gmra.mxu0 %v995
      %v1135 = vpop.f32.mrf.mxu0
      %v1136 = vadd.f32 0.0, %v1135
      %v1137 = vpop.f32.mrf.mxu0
      %v1138 = vpop.f32.mrf.mxu0
      %v1139 = vadd.f32 0.0, %v1138
      %v1140 = vpop.f32.mrf.mxu0
      %1141 = vmatprep.mubr.bf16.mxu0 0
      %1142 = vmatmul.mubr.bf16.gmra.mxu0 %v998
      %v1143 = vpop.f32.mrf.mxu0
      %v1144 = vadd.f32 0.0, %v1143
      %v1145 = vpop.f32.mrf.mxu0
      %v1146 = vpop.f32.mrf.mxu0
      %v1147 = vadd.f32 0.0, %v1146
      %v1148 = vpop.f32.mrf.mxu0
      %1149 = vmatprep.mubr.bf16.mxu0 0
      %1150 = vmatmul.mubr.bf16.gmra.mxu0 %v1001
      %v1151 = vpop.f32.mrf.mxu0
      %v1152 = vadd.f32 0.0, %v1151
      %v1153 = vpop.f32.mrf.mxu0
      %v1154 = vpop.f32.mrf.mxu0
      %v1155 = vadd.f32 0.0, %v1154
      %v1156 = vpop.f32.mrf.mxu0
      %1157 = vmatprep.mubr.bf16.mxu0 0
      %1158 = vmatmul.mubr.bf16.gmra.mxu0 %v1004
      %v1159 = vpop.f32.mrf.mxu0
      %v1160 = vadd.f32 0.0, %v1159
      %v1161 = vpop.f32.mrf.mxu0
      %v1162 = vpop.f32.mrf.mxu0
      %v1163 = vadd.f32 0.0, %v1162
      %v1164 = vpop.f32.mrf.mxu0
      %1165 = vmatprep.mubr.bf16.mxu0 0
      %1166 = vmatmul.mubr.bf16.gmra.mxu0 %v1007
      %v1167 = vpop.f32.mrf.mxu0
      %v1168 = vadd.f32 0.0, %v1167
      %v1169 = vpop.f32.mrf.mxu0
      %v1170 = vpop.f32.mrf.mxu0
      %v1171 = vadd.f32 0.0, %v1170
      %v1172 = vpop.f32.mrf.mxu0
      %1173 = vdwg.mxu0
      %v1176 = vunpack.c.l.b16 %v901
      %v1177 = vunpack.c.l.b16 %v902
      %v1178 = vpack.c.b16 %v1177, %v1176
      %v1180 = vsel %vm960, %v885, 0
      %v1183 = vsel %vm960, %v886, 0
      %v1186 = vsel %vm960, %v887, 0
      %v1189 = vsel %vm960, %v888, 0
      %v1192 = vsel %vm960, %v889, 0
      %v1195 = vsel %vm960, %v890, 0
      %v1198 = vsel %vm960, %v891, 0
      %v1201 = vsel %vm960, %v892, 0
      %v1204 = vsel %vm960, %v893, 0
      %v1207 = vsel %vm960, %v894, 0
      %v1210 = vsel %vm960, %v895, 0
      %v1213 = vsel %vm960, %v896, 0
      %v1216 = vsel %vm960, %v897, 0
      %v1219 = vsel %vm960, %v898, 0
      %v1222 = vsel %vm960, %v899, 0
      %v1225 = vsel %vm960, %v900, 0
      %v1228 = vsel %vm1009, %v1178, 0
      %1230 = vmatprep.subr.bf16.mxu0 0
      %1231 = vmatpush1.bf16.msra.mxu0 0
      %1232 = vmatprep.subr.bf16.mxu0 0
      %1233 = vmatpush1.bf16.msra.mxu0 0
      %1234 = vmatprep.subr.bf16.mxu0 0
      %1235 = vmatpush1.bf16.msra.mxu0 0
      %1236 = vmatprep.subr.bf16.mxu0 0
      %1237 = vmatpush1.bf16.msra.mxu0 0
      %1238 = vmatprep.subr.bf16.mxu0 0
      %1239 = vmatpush1.bf16.msra.mxu0 0
      %1240 = vmatprep.subr.bf16.mxu0 0
      %1241 = vmatpush1.bf16.msra.mxu0 0
      %1242 = vmatprep.subr.bf16.mxu0 0
      %1243 = vmatpush1.bf16.msra.mxu0 0
      %1244 = vmatprep.subr.bf16.mxu0 0
      %1245 = vmatpush1.bf16.msra.mxu0 %v1228
      %1246 = vmatprep.subr.bf16.mxu0 0
      %1247 = vmatpush2.bf16.msra.mxu0 0
      %1248 = vmatprep.subr.bf16.mxu0 0
      %1249 = vmatpush2.bf16.msra.mxu0 0
      %1250 = vmatprep.subr.bf16.mxu0 0
      %1251 = vmatpush2.bf16.msra.mxu0 0
      %1252 = vmatprep.subr.bf16.mxu0 0
      %1253 = vmatpush2.bf16.msra.mxu0 0
      %1254 = vmatprep.subr.bf16.mxu0 0
      %1255 = vmatpush2.bf16.msra.mxu0 0
      %1256 = vmatprep.subr.bf16.mxu0 0
      %1257 = vmatpush2.bf16.msra.mxu0 0
      %1258 = vmatprep.subr.bf16.mxu0 0
      %1259 = vmatpush2.bf16.msra.mxu0 0
      %1260 = vmatprep.subr.bf16.mxu0 0
      %1261 = vmatpush2.bf16.msra.mxu0 0
      %1262 = vmatprep.mubr.bf16.mxu0 0
      %1263 = vmatmul.mubr.bf16.gmra.mxu0 %v1180
      %v1264 = vpop.f32.mrf.mxu0
      %v1265 = vadd.f32 %v1048, %v1264
      %v1266 = vpop.f32.mrf.mxu0
      %v1267 = vpop.f32.mrf.mxu0
      %v1268 = vadd.f32 %v1051, %v1267
      %v1269 = vpop.f32.mrf.mxu0
      %1270 = vmatprep.mubr.bf16.mxu0 0
      %1271 = vmatmul.mubr.bf16.gmra.mxu0 %v1183
      %v1272 = vpop.f32.mrf.mxu0
      %v1273 = vadd.f32 %v1056, %v1272
      %v1274 = vpop.f32.mrf.mxu0
      %v1275 = vpop.f32.mrf.mxu0
      %v1276 = vadd.f32 %v1059, %v1275
      %v1277 = vpop.f32.mrf.mxu0
      %1278 = vmatprep.mubr.bf16.mxu0 0
      %1279 = vmatmul.mubr.bf16.gmra.mxu0 %v1186
      %v1280 = vpop.f32.mrf.mxu0
      %v1281 = vadd.f32 %v1064, %v1280
      %v1282 = vpop.f32.mrf.mxu0
      %v1283 = vpop.f32.mrf.mxu0
      %v1284 = vadd.f32 %v1067, %v1283
      %v1285 = vpop.f32.mrf.mxu0
      %1286 = vmatprep.mubr.bf16.mxu0 0
      %1287 = vmatmul.mubr.bf16.gmra.mxu0 %v1189
      %v1288 = vpop.f32.mrf.mxu0
      %v1289 = vadd.f32 %v1072, %v1288
      %v1290 = vpop.f32.mrf.mxu0
      %v1291 = vpop.f32.mrf.mxu0
      %v1292 = vadd.f32 %v1075, %v1291
      %v1293 = vpop.f32.mrf.mxu0
      %1294 = vmatprep.mubr.bf16.mxu0 0
      %1295 = vmatmul.mubr.bf16.gmra.mxu0 %v1192
      %v1296 = vpop.f32.mrf.mxu0
      %v1297 = vadd.f32 %v1080, %v1296
      %v1298 = vpop.f32.mrf.mxu0
      %v1299 = vpop.f32.mrf.mxu0
      %v1300 = vadd.f32 %v1083, %v1299
      %v1301 = vpop.f32.mrf.mxu0
      %1302 = vmatprep.mubr.bf16.mxu0 0
      %1303 = vmatmul.mubr.bf16.gmra.mxu0 %v1195
      %v1304 = vpop.f32.mrf.mxu0
      %v1305 = vadd.f32 %v1088, %v1304
      %v1306 = vpop.f32.mrf.mxu0
      %v1307 = vpop.f32.mrf.mxu0
      %v1308 = vadd.f32 %v1091, %v1307
      %v1309 = vpop.f32.mrf.mxu0
      %1310 = vmatprep.mubr.bf16.mxu0 0
      %1311 = vmatmul.mubr.bf16.gmra.mxu0 %v1198
      %v1312 = vpop.f32.mrf.mxu0
      %v1313 = vadd.f32 %v1096, %v1312
      %v1314 = vpop.f32.mrf.mxu0
      %v1315 = vpop.f32.mrf.mxu0
      %v1316 = vadd.f32 %v1099, %v1315
      %v1317 = vpop.f32.mrf.mxu0
      %1318 = vmatprep.mubr.bf16.mxu0 0
      %1319 = vmatmul.mubr.bf16.gmra.mxu0 %v1201
      %v1320 = vpop.f32.mrf.mxu0
      %v1321 = vadd.f32 %v1104, %v1320
      %v1322 = vpop.f32.mrf.mxu0
      %v1323 = vpop.f32.mrf.mxu0
      %v1324 = vadd.f32 %v1107, %v1323
      %v1325 = vpop.f32.mrf.mxu0
      %1326 = vmatprep.mubr.bf16.mxu0 0
      %1327 = vmatmul.mubr.bf16.gmra.mxu0 %v1204
      %v1328 = vpop.f32.mrf.mxu0
      %v1329 = vadd.f32 %v1112, %v1328
      %v1330 = vpop.f32.mrf.mxu0
      %v1331 = vpop.f32.mrf.mxu0
      %v1332 = vadd.f32 %v1115, %v1331
      %v1333 = vpop.f32.mrf.mxu0
      %1334 = vmatprep.mubr.bf16.mxu0 0
      %1335 = vmatmul.mubr.bf16.gmra.mxu0 %v1207
      %v1336 = vpop.f32.mrf.mxu0
      %v1337 = vadd.f32 %v1120, %v1336
      %v1338 = vpop.f32.mrf.mxu0
      %v1339 = vpop.f32.mrf.mxu0
      %v1340 = vadd.f32 %v1123, %v1339
      %v1341 = vpop.f32.mrf.mxu0
      %1342 = vmatprep.mubr.bf16.mxu0 0
      %1343 = vmatmul.mubr.bf16.gmra.mxu0 %v1210
      %v1344 = vpop.f32.mrf.mxu0
      %v1345 = vadd.f32 %v1128, %v1344
      %v1346 = vpop.f32.mrf.mxu0
      %v1347 = vpop.f32.mrf.mxu0
      %v1348 = vadd.f32 %v1131, %v1347
      %v1349 = vpop.f32.mrf.mxu0
      %1350 = vmatprep.mubr.bf16.mxu0 0
      %1351 = vmatmul.mubr.bf16.gmra.mxu0 %v1213
      %v1352 = vpop.f32.mrf.mxu0
      %v1353 = vadd.f32 %v1136, %v1352
      %v1354 = vpop.f32.mrf.mxu0
      %v1355 = vpop.f32.mrf.mxu0
      %v1356 = vadd.f32 %v1139, %v1355
      %v1357 = vpop.f32.mrf.mxu0
      %1358 = vmatprep.mubr.bf16.mxu0 0
      %1359 = vmatmul.mubr.bf16.gmra.mxu0 %v1216
      %v1360 = vpop.f32.mrf.mxu0
      %v1361 = vadd.f32 %v1144, %v1360
      %v1362 = vpop.f32.mrf.mxu0
      %v1363 = vpop.f32.mrf.mxu0
      %v1364 = vadd.f32 %v1147, %v1363
      %v1365 = vpop.f32.mrf.mxu0
      %1366 = vmatprep.mubr.bf16.mxu0 0
      %1367 = vmatmul.mubr.bf16.gmra.mxu0 %v1219
      %v1368 = vpop.f32.mrf.mxu0
      %v1369 = vadd.f32 %v1152, %v1368
      %v1370 = vpop.f32.mrf.mxu0
      %v1371 = vpop.f32.mrf.mxu0
      %v1372 = vadd.f32 %v1155, %v1371
      %v1373 = vpop.f32.mrf.mxu0
      %1374 = vmatprep.mubr.bf16.mxu0 0
      %1375 = vmatmul.mubr.bf16.gmra.mxu0 %v1222
      %v1376 = vpop.f32.mrf.mxu0
      %v1377 = vadd.f32 %v1160, %v1376
      %v1378 = vpop.f32.mrf.mxu0
      %v1379 = vpop.f32.mrf.mxu0
      %v1380 = vadd.f32 %v1163, %v1379
      %v1381 = vpop.f32.mrf.mxu0
      %1382 = vmatprep.mubr.bf16.mxu0 0
      %1383 = vmatmul.mubr.bf16.gmra.mxu0 %v1225
      %v1384 = vpop.f32.mrf.mxu0
      %v1385 = vadd.f32 %v1168, %v1384
      %v1386 = vpop.f32.mrf.mxu0
      %v1387 = vpop.f32.mrf.mxu0
      %v1388 = vadd.f32 %v1171, %v1387
      %v1389 = vpop.f32.mrf.mxu0
      %1390 = vdwg.mxu0
      %s1391 = scalar_lea.vmem [#allocation2], 32
      %v1392 = vld [vmem:[%s1391] sm:$0xff]
      %v1393 = vld [vmem:[%s1391 + $0x8] sm:$0xff]
      %v1394 = vld [vmem:[%s1391 + $0x10] sm:$0xff]
      %v1395 = vld [vmem:[%s1391 + $0x18] sm:$0xff]
      %v1396 = vld [vmem:[%s1391 + $0x20] sm:$0xff]
      %v1397 = vld [vmem:[%s1391 + $0x28] sm:$0xff]
      %v1398 = vld [vmem:[%s1391 + $0x30] sm:$0xff]
      %v1399 = vld [vmem:[%s1391 + $0x38] sm:$0xff]
      %v1400 = vld [vmem:[%s1391 + $0x40] sm:$0xff]
      %v1401 = vld [vmem:[%s1391 + $0x48] sm:$0xff]
      %v1402 = vld [vmem:[%s1391 + $0x50] sm:$0xff]
      %v1403 = vld [vmem:[%s1391 + $0x58] sm:$0xff]
      %v1404 = vld [vmem:[%s1391 + $0x60] sm:$0xff]
      %v1405 = vld [vmem:[%s1391 + $0x68] sm:$0xff]
      %v1406 = vld [vmem:[%s1391 + $0x70] sm:$0xff]
      %v1407 = vld [vmem:[%s1391 + $0x78] sm:$0xff]
      %v1408 = vld [vmem:[%s1391 + $0x80] sm:$0xff]
      %v1409 = vld [vmem:[%s1391 + $0x88] sm:$0xff]
      %v1410 = vld [vmem:[%s1391 + $0x90] sm:$0xff]
      %v1411 = vld [vmem:[%s1391 + $0x98] sm:$0xff]
      %v1412 = vld [vmem:[%s1391 + $0xa0] sm:$0xff]
      %v1413 = vld [vmem:[%s1391 + $0xa8] sm:$0xff]
      %v1414 = vld [vmem:[%s1391 + $0xb0] sm:$0xff]
      %v1415 = vld [vmem:[%s1391 + $0xb8] sm:$0xff]
      %v1416 = vld [vmem:[%s1391 + $0xc0] sm:$0xff]
      %v1417 = vld [vmem:[%s1391 + $0xc8] sm:$0xff]
      %v1418 = vld [vmem:[%s1391 + $0xd0] sm:$0xff]
      %v1419 = vld [vmem:[%s1391 + $0xd8] sm:$0xff]
      %v1420 = vld [vmem:[%s1391 + $0xe0] sm:$0xff]
      %v1421 = vld [vmem:[%s1391 + $0xe8] sm:$0xff]
      %v1422 = vld [vmem:[%s1391 + $0xf0] sm:$0xff]
      %v1423 = vld [vmem:[%s1391 + $0xf8] sm:$0xff]
      %v1424 = vpack.c.bf16 %v1393, %v1392
      %v1425 = vpack.c.bf16 %v1395, %v1394
      %v1426 = vpack.c.bf16 %v1397, %v1396
      %v1427 = vpack.c.bf16 %v1399, %v1398
      %v1428 = vpack.c.bf16 %v1401, %v1400
      %v1429 = vpack.c.bf16 %v1403, %v1402
      %v1430 = vpack.c.bf16 %v1405, %v1404
      %v1431 = vpack.c.bf16 %v1407, %v1406
      %v1432 = vpack.c.bf16 %v1409, %v1408
      %v1433 = vpack.c.bf16 %v1411, %v1410
      %v1434 = vpack.c.bf16 %v1413, %v1412
      %v1435 = vpack.c.bf16 %v1415, %v1414
      %v1436 = vpack.c.bf16 %v1417, %v1416
      %v1437 = vpack.c.bf16 %v1419, %v1418
      %v1438 = vpack.c.bf16 %v1421, %v1420
      %v1439 = vpack.c.bf16 %v1423, %v1422
      %s1440 = scalar_lea.vmem %s1, 16
      %v1441 = vld [vmem:[%s1440] sm:$0xf]
      %v1442 = vld [vmem:[%s1440 + $0x4] sm:$0x3]
      %v1445 = vunpack.c.l.b16 %v1441
      %v1446 = vunpack.c.l.b16 %v1442
      %v1447 = vpack.c.b16 %v1446, %v1445
      %v1449 = vsel %vm960, %v1424, 0
      %v1452 = vsel %vm960, %v1425, 0
      %v1455 = vsel %vm960, %v1426, 0
      %v1458 = vsel %vm960, %v1427, 0
      %v1461 = vsel %vm960, %v1428, 0
      %v1464 = vsel %vm960, %v1429, 0
      %v1467 = vsel %vm960, %v1430, 0
      %v1470 = vsel %vm960, %v1431, 0
      %v1473 = vsel %vm960, %v1432, 0
      %v1476 = vsel %vm960, %v1433, 0
      %v1479 = vsel %vm960, %v1434, 0
      %v1482 = vsel %vm960, %v1435, 0
      %v1485 = vsel %vm960, %v1436, 0
      %v1488 = vsel %vm960, %v1437, 0
      %v1491 = vsel %vm960, %v1438, 0
      %v1494 = vsel %vm960, %v1439, 0
      %v1497 = vsel %vm1009, %v1447, 0
      %1499 = vmatprep.subr.bf16.mxu0 0
      %1500 = vmatpush1.bf16.msra.mxu0 0
      %1501 = vmatprep.subr.bf16.mxu0 0
      %1502 = vmatpush1.bf16.msra.mxu0 0
      %1503 = vmatprep.subr.bf16.mxu0 0
      %1504 = vmatpush1.bf16.msra.mxu0 0
      %1505 = vmatprep.subr.bf16.mxu0 0
      %1506 = vmatpush1.bf16.msra.mxu0 0
      %1507 = vmatprep.subr.bf16.mxu0 0
      %1508 = vmatpush1.bf16.msra.mxu0 0
      %1509 = vmatprep.subr.bf16.mxu0 0
      %1510 = vmatpush1.bf16.msra.mxu0 0
      %1511 = vmatprep.subr.bf16.mxu0 0
      %1512 = vmatpush1.bf16.msra.mxu0 0
      %1513 = vmatprep.subr.bf16.mxu0 0
      %1514 = vmatpush1.bf16.msra.mxu0 %v1497
      %1515 = vmatprep.subr.bf16.mxu0 0
      %1516 = vmatpush2.bf16.msra.mxu0 0
      %1517 = vmatprep.subr.bf16.mxu0 0
      %1518 = vmatpush2.bf16.msra.mxu0 0
      %1519 = vmatprep.subr.bf16.mxu0 0
      %1520 = vmatpush2.bf16.msra.mxu0 0
      %1521 = vmatprep.subr.bf16.mxu0 0
      %1522 = vmatpush2.bf16.msra.mxu0 0
      %1523 = vmatprep.subr.bf16.mxu0 0
      %1524 = vmatpush2.bf16.msra.mxu0 0
      %1525 = vmatprep.subr.bf16.mxu0 0
      %1526 = vmatpush2.bf16.msra.mxu0 0
      %1527 = vmatprep.subr.bf16.mxu0 0
      %1528 = vmatpush2.bf16.msra.mxu0 0
      %1529 = vmatprep.subr.bf16.mxu0 0
      %1530 = vmatpush2.bf16.msra.mxu0 0
      %1531 = vmatprep.mubr.bf16.mxu0 0
      %1532 = vmatmul.mubr.bf16.gmra.mxu0 %v1449
      %v1533 = vpop.f32.mrf.mxu0
      %v1534 = vadd.f32 0.0, %v1533
      %v1535 = vpop.f32.mrf.mxu0
      %v1536 = vpop.f32.mrf.mxu0
      %v1537 = vadd.f32 0.0, %v1536
      %v1538 = vpop.f32.mrf.mxu0
      %1539 = vmatprep.mubr.bf16.mxu0 0
      %1540 = vmatmul.mubr.bf16.gmra.mxu0 %v1452
      %v1541 = vpop.f32.mrf.mxu0
      %v1542 = vadd.f32 0.0, %v1541
      %v1543 = vpop.f32.mrf.mxu0
      %v1544 = vpop.f32.mrf.mxu0
      %v1545 = vadd.f32 0.0, %v1544
      %v1546 = vpop.f32.mrf.mxu0
      %1547 = vmatprep.mubr.bf16.mxu0 0
      %1548 = vmatmul.mubr.bf16.gmra.mxu0 %v1455
      %v1549 = vpop.f32.mrf.mxu0
      %v1550 = vadd.f32 0.0, %v1549
      %v1551 = vpop.f32.mrf.mxu0
      %v1552 = vpop.f32.mrf.mxu0
      %v1553 = vadd.f32 0.0, %v1552
      %v1554 = vpop.f32.mrf.mxu0
      %1555 = vmatprep.mubr.bf16.mxu0 0
      %1556 = vmatmul.mubr.bf16.gmra.mxu0 %v1458
      %v1557 = vpop.f32.mrf.mxu0
      %v1558 = vadd.f32 0.0, %v1557
      %v1559 = vpop.f32.mrf.mxu0
      %v1560 = vpop.f32.mrf.mxu0
      %v1561 = vadd.f32 0.0, %v1560
      %v1562 = vpop.f32.mrf.mxu0
      %1563 = vmatprep.mubr.bf16.mxu0 0
      %1564 = vmatmul.mubr.bf16.gmra.mxu0 %v1461
      %v1565 = vpop.f32.mrf.mxu0
      %v1566 = vadd.f32 0.0, %v1565
      %v1567 = vpop.f32.mrf.mxu0
      %v1568 = vpop.f32.mrf.mxu0
      %v1569 = vadd.f32 0.0, %v1568
      %v1570 = vpop.f32.mrf.mxu0
      %1571 = vmatprep.mubr.bf16.mxu0 0
      %1572 = vmatmul.mubr.bf16.gmra.mxu0 %v1464
      %v1573 = vpop.f32.mrf.mxu0
      %v1574 = vadd.f32 0.0, %v1573
      %v1575 = vpop.f32.mrf.mxu0
      %v1576 = vpop.f32.mrf.mxu0
      %v1577 = vadd.f32 0.0, %v1576
      %v1578 = vpop.f32.mrf.mxu0
      %1579 = vmatprep.mubr.bf16.mxu0 0
      %1580 = vmatmul.mubr.bf16.gmra.mxu0 %v1467
      %v1581 = vpop.f32.mrf.mxu0
      %v1582 = vadd.f32 0.0, %v1581
      %v1583 = vpop.f32.mrf.mxu0
      %v1584 = vpop.f32.mrf.mxu0
      %v1585 = vadd.f32 0.0, %v1584
      %v1586 = vpop.f32.mrf.mxu0
      %1587 = vmatprep.mubr.bf16.mxu0 0
      %1588 = vmatmul.mubr.bf16.gmra.mxu0 %v1470
      %v1589 = vpop.f32.mrf.mxu0
      %v1590 = vadd.f32 0.0, %v1589
      %v1591 = vpop.f32.mrf.mxu0
      %v1592 = vpop.f32.mrf.mxu0
      %v1593 = vadd.f32 0.0, %v1592
      %v1594 = vpop.f32.mrf.mxu0
      %1595 = vmatprep.mubr.bf16.mxu0 0
      %1596 = vmatmul.mubr.bf16.gmra.mxu0 %v1473
      %v1597 = vpop.f32.mrf.mxu0
      %v1598 = vadd.f32 0.0, %v1597
      %v1599 = vpop.f32.mrf.mxu0
      %v1600 = vpop.f32.mrf.mxu0
      %v1601 = vadd.f32 0.0, %v1600
      %v1602 = vpop.f32.mrf.mxu0
      %1603 = vmatprep.mubr.bf16.mxu0 0
      %1604 = vmatmul.mubr.bf16.gmra.mxu0 %v1476
      %v1605 = vpop.f32.mrf.mxu0
      %v1606 = vadd.f32 0.0, %v1605
      %v1607 = vpop.f32.mrf.mxu0
      %v1608 = vpop.f32.mrf.mxu0
      %v1609 = vadd.f32 0.0, %v1608
      %v1610 = vpop.f32.mrf.mxu0
      %1611 = vmatprep.mubr.bf16.mxu0 0
      %1612 = vmatmul.mubr.bf16.gmra.mxu0 %v1479
      %v1613 = vpop.f32.mrf.mxu0
      %v1614 = vadd.f32 0.0, %v1613
      %v1615 = vpop.f32.mrf.mxu0
      %v1616 = vpop.f32.mrf.mxu0
      %v1617 = vadd.f32 0.0, %v1616
      %v1618 = vpop.f32.mrf.mxu0
      %1619 = vmatprep.mubr.bf16.mxu0 0
      %1620 = vmatmul.mubr.bf16.gmra.mxu0 %v1482
      %v1621 = vpop.f32.mrf.mxu0
      %v1622 = vadd.f32 0.0, %v1621
      %v1623 = vpop.f32.mrf.mxu0
      %v1624 = vpop.f32.mrf.mxu0
      %v1625 = vadd.f32 0.0, %v1624
      %v1626 = vpop.f32.mrf.mxu0
      %1627 = vmatprep.mubr.bf16.mxu0 0
      %1628 = vmatmul.mubr.bf16.gmra.mxu0 %v1485
      %v1629 = vpop.f32.mrf.mxu0
      %v1630 = vadd.f32 0.0, %v1629
      %v1631 = vpop.f32.mrf.mxu0
      %v1632 = vpop.f32.mrf.mxu0
      %v1633 = vadd.f32 0.0, %v1632
      %v1634 = vpop.f32.mrf.mxu0
      %1635 = vmatprep.mubr.bf16.mxu0 0
      %1636 = vmatmul.mubr.bf16.gmra.mxu0 %v1488
      %v1637 = vpop.f32.mrf.mxu0
      %v1638 = vadd.f32 0.0, %v1637
      %v1639 = vpop.f32.mrf.mxu0
      %v1640 = vpop.f32.mrf.mxu0
      %v1641 = vadd.f32 0.0, %v1640
      %v1642 = vpop.f32.mrf.mxu0
      %1643 = vmatprep.mubr.bf16.mxu0 0
      %1644 = vmatmul.mubr.bf16.gmra.mxu0 %v1491
      %v1645 = vpop.f32.mrf.mxu0
      %v1646 = vadd.f32 0.0, %v1645
      %v1647 = vpop.f32.mrf.mxu0
      %v1648 = vpop.f32.mrf.mxu0
      %v1649 = vadd.f32 0.0, %v1648
      %v1650 = vpop.f32.mrf.mxu0
      %1651 = vmatprep.mubr.bf16.mxu0 0
      %1652 = vmatmul.mubr.bf16.gmra.mxu0 %v1494
      %v1653 = vpop.f32.mrf.mxu0
      %v1654 = vadd.f32 0.0, %v1653
      %v1655 = vpop.f32.mrf.mxu0
      %v1656 = vpop.f32.mrf.mxu0
      %v1657 = vadd.f32 0.0, %v1656
      %v1658 = vpop.f32.mrf.mxu0
      %1659 = vdwg.mxu0
      %v1660 = vadd.f32 %v1265, %v1534
      %v1661 = vadd.f32 %v1268, %v1537
      %v1662 = vadd.f32 %v1273, %v1542
      %v1663 = vadd.f32 %v1276, %v1545
      %v1664 = vadd.f32 %v1281, %v1550
      %v1665 = vadd.f32 %v1284, %v1553
      %v1666 = vadd.f32 %v1289, %v1558
      %v1667 = vadd.f32 %v1292, %v1561
      %v1668 = vadd.f32 %v1297, %v1566
      %v1669 = vadd.f32 %v1300, %v1569
      %v1670 = vadd.f32 %v1305, %v1574
      %v1671 = vadd.f32 %v1308, %v1577
      %v1672 = vadd.f32 %v1313, %v1582
      %v1673 = vadd.f32 %v1316, %v1585
      %v1674 = vadd.f32 %v1321, %v1590
      %v1675 = vadd.f32 %v1324, %v1593
      %v1676 = vadd.f32 %v1329, %v1598
      %v1677 = vadd.f32 %v1332, %v1601
      %v1678 = vadd.f32 %v1337, %v1606
      %v1679 = vadd.f32 %v1340, %v1609
      %v1680 = vadd.f32 %v1345, %v1614
      %v1681 = vadd.f32 %v1348, %v1617
      %v1682 = vadd.f32 %v1353, %v1622
      %v1683 = vadd.f32 %v1356, %v1625
      %v1684 = vadd.f32 %v1361, %v1630
      %v1685 = vadd.f32 %v1364, %v1633
      %v1686 = vadd.f32 %v1369, %v1638
      %v1687 = vadd.f32 %v1372, %v1641
      %v1688 = vadd.f32 %v1377, %v1646
      %v1689 = vadd.f32 %v1380, %v1649
      %v1690 = vadd.f32 %v1385, %v1654
      %v1691 = vadd.f32 %v1388, %v1657
      %v1692 = vsel %vm324, %v1660, 0.0
      %v1693 = vsel %vm324, %v1661, 0.0
      %v1694 = vadd.f32 %v1692, %v1693
      %v1695 = vsel %vm324, %v1662, 0.0
      %v1696 = vadd.f32 %v1694, %v1695
      %v1697 = vsel %vm324, %v1663, 0.0
      %v1698 = vadd.f32 %v1696, %v1697
      %v1699 = vsel %vm324, %v1664, 0.0
      %v1700 = vadd.f32 %v1698, %v1699
      %v1701 = vsel %vm324, %v1665, 0.0
      %v1702 = vadd.f32 %v1700, %v1701
      %v1703 = vsel %vm324, %v1666, 0.0
      %v1704 = vadd.f32 %v1702, %v1703
      %v1705 = vsel %vm324, %v1667, 0.0
      %v1706 = vadd.f32 %v1704, %v1705
      %v1707 = vsel %vm324, %v1668, 0.0
      %v1708 = vadd.f32 %v1706, %v1707
      %v1709 = vsel %vm324, %v1669, 0.0
      %v1710 = vadd.f32 %v1708, %v1709
      %v1711 = vsel %vm324, %v1670, 0.0
      %v1712 = vadd.f32 %v1710, %v1711
      %v1713 = vsel %vm324, %v1671, 0.0
      %v1714 = vadd.f32 %v1712, %v1713
      %v1715 = vsel %vm324, %v1672, 0.0
      %v1716 = vadd.f32 %v1714, %v1715
      %v1717 = vsel %vm324, %v1673, 0.0
      %v1718 = vadd.f32 %v1716, %v1717
      %v1719 = vsel %vm324, %v1674, 0.0
      %v1720 = vadd.f32 %v1718, %v1719
      %v1721 = vsel %vm324, %v1675, 0.0
      %v1722 = vadd.f32 %v1720, %v1721
      %v1723 = vsel %vm324, %v1676, 0.0
      %v1724 = vadd.f32 %v1722, %v1723
      %v1725 = vsel %vm324, %v1677, 0.0
      %v1726 = vadd.f32 %v1724, %v1725
      %v1727 = vsel %vm324, %v1678, 0.0
      %v1728 = vadd.f32 %v1726, %v1727
      %v1729 = vsel %vm324, %v1679, 0.0
      %v1730 = vadd.f32 %v1728, %v1729
      %v1731 = vsel %vm324, %v1680, 0.0
      %v1732 = vadd.f32 %v1730, %v1731
      %v1733 = vsel %vm324, %v1681, 0.0
      %v1734 = vadd.f32 %v1732, %v1733
      %v1735 = vsel %vm324, %v1682, 0.0
      %v1736 = vadd.f32 %v1734, %v1735
      %v1737 = vsel %vm324, %v1683, 0.0
      %v1738 = vadd.f32 %v1736, %v1737
      %v1739 = vsel %vm324, %v1684, 0.0
      %v1740 = vadd.f32 %v1738, %v1739
      %v1741 = vsel %vm324, %v1685, 0.0
      %v1742 = vadd.f32 %v1740, %v1741
      %v1743 = vsel %vm324, %v1686, 0.0
      %v1744 = vadd.f32 %v1742, %v1743
      %v1745 = vsel %vm324, %v1687, 0.0
      %v1746 = vadd.f32 %v1744, %v1745
      %v1747 = vsel %vm324, %v1688, 0.0
      %v1748 = vadd.f32 %v1746, %v1747
      %v1749 = vsel %vm324, %v1689, 0.0
      %v1750 = vadd.f32 %v1748, %v1749
      %v1751 = vsel %vm324, %v1690, 0.0
      %v1752 = vadd.f32 %v1750, %v1751
      %v1753 = vsel %vm324, %v1691, 0.0
      %v1754 = vadd.f32 %v1752, %v1753
      %v1755 = vrot.slane %v1754, 4
      %v1756 = vadd.f32 %v1754, %v1755
      %v1757 = vrot.slane %v1756, 2
      %v1758 = vadd.f32 %v1756, %v1757
      %v1759 = vrot.slane %v1758, 1
      %v1760 = vadd.f32 %v1758, %v1759
      %vm1761 = vcmask 24576
      %1762 = vst.msk [vmem:[%s211] sm:$0x1] %vm1761, %v1760
      %v1763 = vmul.f32 %v1660, %v1660
      %v1764 = vmul.f32 %v1661, %v1661
      %v1765 = vmul.f32 %v1662, %v1662
      %v1766 = vmul.f32 %v1663, %v1663
      %v1767 = vmul.f32 %v1664, %v1664
      %v1768 = vmul.f32 %v1665, %v1665
      %v1769 = vmul.f32 %v1666, %v1666
      %v1770 = vmul.f32 %v1667, %v1667
      %v1771 = vmul.f32 %v1668, %v1668
      %v1772 = vmul.f32 %v1669, %v1669
      %v1773 = vmul.f32 %v1670, %v1670
      %v1774 = vmul.f32 %v1671, %v1671
      %v1775 = vmul.f32 %v1672, %v1672
      %v1776 = vmul.f32 %v1673, %v1673
      %v1777 = vmul.f32 %v1674, %v1674
      %v1778 = vmul.f32 %v1675, %v1675
      %v1779 = vmul.f32 %v1676, %v1676
      %v1780 = vmul.f32 %v1677, %v1677
      %v1781 = vmul.f32 %v1678, %v1678
      %v1782 = vmul.f32 %v1679, %v1679
      %v1783 = vmul.f32 %v1680, %v1680
      %v1784 = vmul.f32 %v1681, %v1681
      %v1785 = vmul.f32 %v1682, %v1682
      %v1786 = vmul.f32 %v1683, %v1683
      %v1787 = vmul.f32 %v1684, %v1684
      %v1788 = vmul.f32 %v1685, %v1685
      %v1789 = vmul.f32 %v1686, %v1686
      %v1790 = vmul.f32 %v1687, %v1687
      %v1791 = vmul.f32 %v1688, %v1688
      %v1792 = vmul.f32 %v1689, %v1689
      %v1793 = vmul.f32 %v1690, %v1690
      %v1794 = vmul.f32 %v1691, %v1691
      %v1795 = vsel %vm324, %v1763, 0.0
      %v1796 = vsel %vm324, %v1764, 0.0
      %v1797 = vadd.f32 %v1795, %v1796
      %v1798 = vsel %vm324, %v1765, 0.0
      %v1799 = vadd.f32 %v1797, %v1798
      %v1800 = vsel %vm324, %v1766, 0.0
      %v1801 = vadd.f32 %v1799, %v1800
      %v1802 = vsel %vm324, %v1767, 0.0
      %v1803 = vadd.f32 %v1801, %v1802
      %v1804 = vsel %vm324, %v1768, 0.0
      %v1805 = vadd.f32 %v1803, %v1804
      %v1806 = vsel %vm324, %v1769, 0.0
      %v1807 = vadd.f32 %v1805, %v1806
      %v1808 = vsel %vm324, %v1770, 0.0
      %v1809 = vadd.f32 %v1807, %v1808
      %v1810 = vsel %vm324, %v1771, 0.0
      %v1811 = vadd.f32 %v1809, %v1810
      %v1812 = vsel %vm324, %v1772, 0.0
      %v1813 = vadd.f32 %v1811, %v1812
      %v1814 = vsel %vm324, %v1773, 0.0
      %v1815 = vadd.f32 %v1813, %v1814
      %v1816 = vsel %vm324, %v1774, 0.0
      %v1817 = vadd.f32 %v1815, %v1816
      %v1818 = vsel %vm324, %v1775, 0.0
      %v1819 = vadd.f32 %v1817, %v1818
      %v1820 = vsel %vm324, %v1776, 0.0
      %v1821 = vadd.f32 %v1819, %v1820
      %v1822 = vsel %vm324, %v1777, 0.0
      %v1823 = vadd.f32 %v1821, %v1822
      %v1824 = vsel %vm324, %v1778, 0.0
      %v1825 = vadd.f32 %v1823, %v1824
      %v1826 = vsel %vm324, %v1779, 0.0
      %v1827 = vadd.f32 %v1825, %v1826
      %v1828 = vsel %vm324, %v1780, 0.0
      %v1829 = vadd.f32 %v1827, %v1828
      %v1830 = vsel %vm324, %v1781, 0.0
      %v1831 = vadd.f32 %v1829, %v1830
      %v1832 = vsel %vm324, %v1782, 0.0
      %v1833 = vadd.f32 %v1831, %v1832
      %v1834 = vsel %vm324, %v1783, 0.0
      %v1835 = vadd.f32 %v1833, %v1834
      %v1836 = vsel %vm324, %v1784, 0.0
      %v1837 = vadd.f32 %v1835, %v1836
      %v1838 = vsel %vm324, %v1785, 0.0
      %v1839 = vadd.f32 %v1837, %v1838
      %v1840 = vsel %vm324, %v1786, 0.0
      %v1841 = vadd.f32 %v1839, %v1840
      %v1842 = vsel %vm324, %v1787, 0.0
      %v1843 = vadd.f32 %v1841, %v1842
      %v1844 = vsel %vm324, %v1788, 0.0
      %v1845 = vadd.f32 %v1843, %v1844
      %v1846 = vsel %vm324, %v1789, 0.0
      %v1847 = vadd.f32 %v1845, %v1846
      %v1848 = vsel %vm324, %v1790, 0.0
      %v1849 = vadd.f32 %v1847, %v1848
      %v1850 = vsel %vm324, %v1791, 0.0
      %v1851 = vadd.f32 %v1849, %v1850
      %v1852 = vsel %vm324, %v1792, 0.0
      %v1853 = vadd.f32 %v1851, %v1852
      %v1854 = vsel %vm324, %v1793, 0.0
      %v1855 = vadd.f32 %v1853, %v1854
      %v1856 = vsel %vm324, %v1794, 0.0
      %v1857 = vadd.f32 %v1855, %v1856
      %v1858 = vrot.slane %v1857, 4
      %v1859 = vadd.f32 %v1857, %v1858
      %v1860 = vrot.slane %v1859, 2
      %v1861 = vadd.f32 %v1859, %v1860
      %v1862 = vrot.slane %v1861, 1
      %v1863 = vadd.f32 %v1861, %v1862
      %1864 = vst.msk [vmem:[%s214] sm:$0x1] %vm1761, %v1863
      %v1865 = vpack.c.bf16 %v1661, %v1660
      %v1866 = vpack.c.bf16 %v1663, %v1662
      %v1867 = vpack.c.bf16 %v1665, %v1664
      %v1868 = vpack.c.bf16 %v1667, %v1666
      %v1869 = vpack.c.bf16 %v1669, %v1668
      %v1870 = vpack.c.bf16 %v1671, %v1670
      %v1871 = vpack.c.bf16 %v1673, %v1672
      %v1872 = vpack.c.bf16 %v1675, %v1674
      %v1873 = vpack.c.bf16 %v1677, %v1676
      %v1874 = vpack.c.bf16 %v1679, %v1678
      %v1875 = vpack.c.bf16 %v1681, %v1680
      %v1876 = vpack.c.bf16 %v1683, %v1682
      %v1877 = vpack.c.bf16 %v1685, %v1684
      %v1878 = vpack.c.bf16 %v1687, %v1686
      %v1879 = vpack.c.bf16 %v1689, %v1688
      %v1880 = vpack.c.bf16 %v1691, %v1690
      %v1897 = vunpack.c.l.b16 %v1865
      %v1898 = vunpack.c.h.b16 %v1865
      %v1899 = vunpack.c.l.b16 %v1866
      %v1900 = vunpack.c.h.b16 %v1866
      %v1901 = vunpack.c.l.b16 %v1867
      %v1902 = vunpack.c.h.b16 %v1867
      %v1903 = vunpack.c.l.b16 %v1868
      %v1904 = vunpack.c.h.b16 %v1868
      %v1905 = vunpack.c.l.b16 %v1869
      %v1906 = vunpack.c.h.b16 %v1869
      %v1907 = vunpack.c.l.b16 %v1870
      %v1908 = vunpack.c.h.b16 %v1870
      %v1909 = vunpack.c.l.b16 %v1871
      %v1910 = vunpack.c.h.b16 %v1871
      %v1911 = vunpack.c.l.b16 %v1872
      %v1912 = vunpack.c.h.b16 %v1872
      %v1913 = vunpack.c.l.b16 %v1873
      %v1914 = vunpack.c.h.b16 %v1873
      %v1915 = vunpack.c.l.b16 %v1874
      %v1916 = vunpack.c.h.b16 %v1874
      %v1917 = vunpack.c.l.b16 %v1875
      %v1918 = vunpack.c.h.b16 %v1875
      %v1919 = vunpack.c.l.b16 %v1876
      %v1920 = vunpack.c.h.b16 %v1876
      %v1921 = vunpack.c.l.b16 %v1877
      %v1922 = vunpack.c.h.b16 %v1877
      %v1923 = vunpack.c.l.b16 %v1878
      %v1924 = vunpack.c.h.b16 %v1878
      %v1925 = vunpack.c.l.b16 %v1879
      %v1926 = vunpack.c.h.b16 %v1879
      %v1927 = vunpack.c.l.b16 %v1880
      %v1928 = vunpack.c.h.b16 %v1880
      %v1929 = vpack.c.b16 %v1897, %v1897
      %v1930 = vpack.c.b16 %v1898, %v1898
      %v1931 = vpack.c.b16 %v1899, %v1899
      %v1932 = vpack.c.b16 %v1900, %v1900
      %v1933 = vpack.c.b16 %v1901, %v1901
      %v1934 = vpack.c.b16 %v1902, %v1902
      %v1935 = vpack.c.b16 %v1903, %v1903
      %v1936 = vpack.c.b16 %v1904, %v1904
      %v1937 = vpack.c.b16 %v1905, %v1905
      %v1938 = vpack.c.b16 %v1906, %v1906
      %v1939 = vpack.c.b16 %v1907, %v1907
      %v1940 = vpack.c.b16 %v1908, %v1908
      %v1941 = vpack.c.b16 %v1909, %v1909
      %v1942 = vpack.c.b16 %v1910, %v1910
      %v1943 = vpack.c.b16 %v1911, %v1911
      %v1944 = vpack.c.b16 %v1912, %v1912
      %v1945 = vpack.c.b16 %v1913, %v1913
      %v1946 = vpack.c.b16 %v1914, %v1914
      %v1947 = vpack.c.b16 %v1915, %v1915
      %v1948 = vpack.c.b16 %v1916, %v1916
      %v1949 = vpack.c.b16 %v1917, %v1917
      %v1950 = vpack.c.b16 %v1918, %v1918
      %v1951 = vpack.c.b16 %v1919, %v1919
      %v1952 = vpack.c.b16 %v1920, %v1920
      %v1953 = vpack.c.b16 %v1921, %v1921
      %v1954 = vpack.c.b16 %v1922, %v1922
      %v1955 = vpack.c.b16 %v1923, %v1923
      %v1956 = vpack.c.b16 %v1924, %v1924
      %v1957 = vpack.c.b16 %v1925, %v1925
      %v1958 = vpack.c.b16 %v1926, %v1926
      %v1959 = vpack.c.b16 %v1927, %v1927
      %v1960 = vpack.c.b16 %v1928, %v1928
      %vm1993 = vcmask 27648
      %1994 = vst.msk [vmem:[%s208] sm:$0xf] %vm1993, %v1929
      %1995 = vst.msk [vmem:[%s208 + $0x4] sm:$0xf] %vm1993, %v1930
      %1996 = vst.msk [vmem:[%s208 + $0x8] sm:$0xf] %vm1993, %v1931
      %1997 = vst.msk [vmem:[%s208 + $0xc] sm:$0xf] %vm1993, %v1932
      %1998 = vst.msk [vmem:[%s208 + $0x10] sm:$0xf] %vm1993, %v1933
      %1999 = vst.msk [vmem:[%s208 + $0x14] sm:$0xf] %vm1993, %v1934
      %2000 = vst.msk [vmem:[%s208 + $0x18] sm:$0xf] %vm1993, %v1935
      %2001 = vst.msk [vmem:[%s208 + $0x1c] sm:$0xf] %vm1993, %v1936
      %2002 = vst.msk [vmem:[%s208 + $0x20] sm:$0xf] %vm1993, %v1937
      %2003 = vst.msk [vmem:[%s208 + $0x24] sm:$0xf] %vm1993, %v1938
      %2004 = vst.msk [vmem:[%s208 + $0x28] sm:$0xf] %vm1993, %v1939
      %2005 = vst.msk [vmem:[%s208 + $0x2c] sm:$0xf] %vm1993, %v1940
      %2006 = vst.msk [vmem:[%s208 + $0x30] sm:$0xf] %vm1993, %v1941
      %2007 = vst.msk [vmem:[%s208 + $0x34] sm:$0xf] %vm1993, %v1942
      %2008 = vst.msk [vmem:[%s208 + $0x38] sm:$0xf] %vm1993, %v1943
      %2009 = vst.msk [vmem:[%s208 + $0x3c] sm:$0xf] %vm1993, %v1944
      %2010 = vst.msk [vmem:[%s208 + $0x40] sm:$0xf] %vm1993, %v1945
      %2011 = vst.msk [vmem:[%s208 + $0x44] sm:$0xf] %vm1993, %v1946
      %2012 = vst.msk [vmem:[%s208 + $0x48] sm:$0xf] %vm1993, %v1947
      %2013 = vst.msk [vmem:[%s208 + $0x4c] sm:$0xf] %vm1993, %v1948
      %2014 = vst.msk [vmem:[%s208 + $0x50] sm:$0xf] %vm1993, %v1949
      %2015 = vst.msk [vmem:[%s208 + $0x54] sm:$0xf] %vm1993, %v1950
      %2016 = vst.msk [vmem:[%s208 + $0x58] sm:$0xf] %vm1993, %v1951
      %2017 = vst.msk [vmem:[%s208 + $0x5c] sm:$0xf] %vm1993, %v1952
      %2018 = vst.msk [vmem:[%s208 + $0x60] sm:$0xf] %vm1993, %v1953
      %2019 = vst.msk [vmem:[%s208 + $0x64] sm:$0xf] %vm1993, %v1954
      %2020 = vst.msk [vmem:[%s208 + $0x68] sm:$0xf] %vm1993, %v1955
      %2021 = vst.msk [vmem:[%s208 + $0x6c] sm:$0xf] %vm1993, %v1956
      %2022 = vst.msk [vmem:[%s208 + $0x70] sm:$0xf] %vm1993, %v1957
      %2023 = vst.msk [vmem:[%s208 + $0x74] sm:$0xf] %vm1993, %v1958
      %2024 = vst.msk [vmem:[%s208 + $0x78] sm:$0xf] %vm1993, %v1959
      %2025 = vst.msk [vmem:[%s208 + $0x7c] sm:$0xf] %vm1993, %v1960
      %p2026 = scmp.lt.s32.totalorder %s16, 1
      %s2027 = scalar_select %p2026, %s16, 1
      %s2028 = smul.addr %s2027, 32
      %s2029 = smul.addr %s2028, 4
      %s2030 = scalar_lea.vmem %s2, %s2029
      %p2031 = scmp.lt.s32.totalorder %s16, 1
      %s2032 = scalar_select %p2031, %s16, 1
      %s2033 = scalar_lea.vmem %s3, %s2032
      %p2034 = scmp.lt.s32.totalorder %s16, 1
      %s2035 = scalar_select %p2034, %s16, 1
      %s2036 = scalar_lea.vmem %s4, %s2035
      // Predicated region
      $region29: #{basic_block.3} parent=27 // pred_check
        %p2037 = pneg %p81
      $region30: #{basic_block.3} parent=27 // pred_check_branch
        %2039 = sbr.rel (%p2037) target = $region32
      $region31: #{basic_block.3} parent=27 // pred_region
        _
      $region32: #{basic_block.3} parent=27 // pred_fallthru
        _
      // Predicated region
      $region33: #{basic_block.3} parent=27 // pred_check
        %p2040 = pneg %p107
      $region34: #{basic_block.3} parent=27 // pred_check_branch
        %2042 = sbr.rel (%p2040) target = $region36
      $region35: #{basic_block.3} parent=27 // pred_region
        _
      $region36: #{basic_block.3} parent=27 // pred_fallthru
        _
      // Predicated region
      $region37: #{basic_block.3} parent=27 // pred_check
        %p2043 = pneg %p133
      $region38: #{basic_block.3} parent=27 // pred_check_branch
        %2045 = sbr.rel (%p2043) target = $region40
      $region39: #{basic_block.3} parent=27 // pred_region
        _
      $region40: #{basic_block.3} parent=27 // pred_fallthru
        _
    $region28: #{basic_block.3} parent=5 // pred_fallthru
      _
    %p2046 = scmp.le.s32.totalorder 2, %s11
    // Predicated region
    $region41: #{basic_block.3} parent=5 // pred_check
      %p2047 = pneg %p2046
    $region42: #{basic_block.3} parent=5 // pred_check_branch
      %2049 = sbr.rel (%p2047) target = $region44
    $region43: #{basic_block.3} parent=5 // pred_region
      %s2050 = ssub.s32 %s11, 2
      // Predicated region
      $region45: #{basic_block.3} parent=43 // pred_check
        %p2051 = pneg %p87
      $region46: #{basic_block.3} parent=43 // pred_check_branch
        %2053 = sbr.rel (%p2051) target = $region48
      $region47: #{basic_block.3} parent=43 // pred_region
        %p2054 = scmp.lt.s32.totalorder %s17, 1
        %s2055 = scalar_select %p2054, %s17, 1
        %s2056 = smul.addr %s2055, 32
        %s2057 = smul.addr %s2056, 4
        %s2058 = scalar_lea.vmem %s2, %s2057
      $region48: #{basic_block.3} parent=43 // pred_fallthru
        _
      // Predicated region
      $region49: #{basic_block.3} parent=43 // pred_check
        %p2059 = pneg %p113
      $region50: #{basic_block.3} parent=43 // pred_check_branch
        %2061 = sbr.rel (%p2059) target = $region52
      $region51: #{basic_block.3} parent=43 // pred_region
        %p2062 = scmp.lt.s32.totalorder %s17, 1
        %s2063 = scalar_select %p2062, %s17, 1
        %s2064 = scalar_lea.vmem %s3, %s2063
      $region52: #{basic_block.3} parent=43 // pred_fallthru
        _
      // Predicated region
      $region53: #{basic_block.3} parent=43 // pred_check
        %p2065 = pneg %p139
      $region54: #{basic_block.3} parent=43 // pred_check_branch
        %2067 = sbr.rel (%p2065) target = $region56
      $region55: #{basic_block.3} parent=43 // pred_region
        %p2068 = scmp.lt.s32.totalorder %s17, 1
        %s2069 = scalar_select %p2068, %s17, 1
        %s2070 = scalar_lea.vmem %s4, %s2069
      $region56: #{basic_block.3} parent=43 // pred_fallthru
        _
    $region44: #{basic_block.3} parent=5 // pred_fallthru
      _
  $region6: #{basic_block.3} parent=0 // loop_footer
    %s15 = sadd.s32 1, %s11
  $region7: #{basic_block.3} parent=0 // loop_footer_branch
    %10 = sbr.rel target = $region3
  $region8: #{basic_block.3} parent=0 // loop_exit
    _

// kernel: basic_block.4
$region0: #{basic_block.4}
  #allocation0 [shape = 'u32[]', space=smem, size = 0x4, offset = 0x4, fixed_abs, tag = 'smem constant byte address 0x4 - core index']
  #allocation1 [shape = 'u32[144,128]{1,0:T(1,128)}', space=vmem, size = 0x12000, scoped, tag = 'internal scratch']
  #allocation2 [shape = 'f32[18,18,4]{2,1,0:T(8,128)}', space=vmem, size = 0x36000, scoped, tag = 'scratch operand']
  #allocation3 [shape = 'f32[18,16,12]{2,1,0:T(8,128)}', space=vmem, size = 0x24000, scoped, tag = 'scratch operand']
  %s0 = inlined_call_operand.vmem [shape: bf16[2,16,16,4], index: 0, kind: input, shape index: {}]
  %s1 = inlined_call_operand.vmem [shape: f32[1,4], index: 1, kind: input, shape index: {}]
  %s2 = inlined_call_operand.vmem [shape: f32[1,4], index: 2, kind: input, shape index: {}]
  %s3 = inlined_call_operand.vmem [shape: bf16[3,12,4], index: 3, kind: input, shape index: {}]
  %s4 = inlined_call_operand.vmem [shape: bf16[2,16,16,4], index: 4, kind: output, shape index: {0}]
  %s5 = inlined_call_operand.vmem [shape: f32[2,1,4], index: 5, kind: output, shape index: {1}]
  %s6 = inlined_call_operand.vmem [shape: f32[2,1,4], index: 6, kind: output, shape index: {2}]
  %7 = xla_tuple %s4, %s5, %s6
  %s8 = sld [smem:[#allocation0]]
  $region65: #{basic_block.4} parent=0
    _
  %s10 = ssub.s32 1, %s8
  %s11 = scalar_select 0, %s10, %s8
  loop: start=0, step=1, limit=4
  $region2: #{basic_block.4} parent=0 // loop_pre_header
    _
  $region3: #{basic_block.4} parent=0 // loop_header
    %s13 = sphi 0, %s17
    %p14 = scmp.ge.s32.totalorder %s13, 4
    %s23 = sphi 0, %s25
    %s26 = sphi 0, %s23
    %s27 = sphi 0, %s26
    %s43 = sphi 0, %s27
    %s47 = sphi 0, %s47
    %s49 = sphi 0, %s47
    %s50 = sphi 0, %s49
    %s64 = sphi 0, %s50
    %s68 = sphi 0, %s68
    %s70 = sphi 0, %s68
    %s71 = sphi 0, %s70
    %s85 = sphi 0, %s71
    %s89 = sphi 0, %s89
    %s91 = sphi 0, %s89
    %s92 = sphi 0, %s91
    %s106 = sphi 0, %s92
    %s112 = sphi 0, %s114
    %s115 = sphi 0, %s112
    %s116 = sphi 0, %s115
    %s132 = sphi 0, %s116
    %s138 = sphi 0, %s140
    %s141 = sphi 0, %s138
    %s142 = sphi 0, %s141
    %s158 = sphi 0, %s142
    %s164 = sphi 0, %s166
    %s167 = sphi 0, %s164
    %s168 = sphi 0, %s167
    %s184 = sphi 0, %s168
  $region4: #{basic_block.4} parent=0 // loop_header_branch
    %16 = sbr.rel (%p14) target = $region8
  $region5: #{basic_block.4} parent=0 // loop_body
    %s18 = ssub.s32 %s13, 1
    %s19 = ssub.s32 %s13, 2
    %s20 = sadd.s32 %s13, 1
    %s21 = ssub.s32 %s13, %s20
    %p22 = scmp.eq.s32.totalorder %s21, 0
    %s24 = sadd.s32 %s23, 1
    %s25 = scalar_select %p22, %s23, %s24
    %p28 = pneg %p22
    %p29 = scmp.eq.s32.totalorder %s13, 1
    %p30 = por %p28, %p29
    %p31 = scmp.ne.s32.totalorder %s23, %s26
    %p32 = scmp.eq.s32.totalorder %s13, 0
    %p33 = por %p31, %p32
    %p34 = scmp.ne.s32.totalorder %s23, %s26
    %p35 = scmp.eq.s32.totalorder %s18, 1
    %p36 = por %p34, %p35
    %p37 = scmp.ne.s32.totalorder %s26, %s27
    %p38 = scmp.eq.s32.totalorder %s18, 0
    %p39 = por %p37, %p38
    %p40 = scmp.ne.s32.totalorder %s26, %s27
    %p41 = scmp.eq.s32.totalorder %s19, 1
    %p42 = por %p40, %p41
    %p44 = scmp.ne.s32.totalorder %s27, %s43
    %p45 = scmp.eq.s32.totalorder %s19, 0
    %p46 = por %p44, %p45
    %s48 = sadd.s32 %s47, 1
    %p51 = scmp.eq.s32.totalorder %s13, 1
    %p52 = scmp.ne.s32.totalorder %s47, %s49
    %p53 = scmp.eq.s32.totalorder %s13, 0
    %p54 = por %p52, %p53
    %p55 = scmp.ne.s32.totalorder %s47, %s49
    %p56 = scmp.eq.s32.totalorder %s18, 1
    %p57 = por %p55, %p56
    %p58 = scmp.ne.s32.totalorder %s49, %s50
    %p59 = scmp.eq.s32.totalorder %s18, 0
    %p60 = por %p58, %p59
    %p61 = scmp.ne.s32.totalorder %s49, %s50
    %p62 = scmp.eq.s32.totalorder %s19, 1
    %p63 = por %p61, %p62
    %p65 = scmp.ne.s32.totalorder %s50, %s64
    %p66 = scmp.eq.s32.totalorder %s19, 0
    %p67 = por %p65, %p66
    %s69 = sadd.s32 %s68, 1
    %p72 = scmp.eq.s32.totalorder %s13, 1
    %p73 = scmp.ne.s32.totalorder %s68, %s70
    %p74 = scmp.eq.s32.totalorder %s13, 0
    %p75 = por %p73, %p74
    %p76 = scmp.ne.s32.totalorder %s68, %s70
    %p77 = scmp.eq.s32.totalorder %s18, 1
    %p78 = por %p76, %p77
    %p79 = scmp.ne.s32.totalorder %s70, %s71
    %p80 = scmp.eq.s32.totalorder %s18, 0
    %p81 = por %p79, %p80
    %p82 = scmp.ne.s32.totalorder %s70, %s71
    %p83 = scmp.eq.s32.totalorder %s19, 1
    %p84 = por %p82, %p83
    %p86 = scmp.ne.s32.totalorder %s71, %s85
    %p87 = scmp.eq.s32.totalorder %s19, 0
    %p88 = por %p86, %p87
    %s90 = sadd.s32 %s89, 1
    %p93 = scmp.eq.s32.totalorder %s13, 1
    %p94 = scmp.ne.s32.totalorder %s89, %s91
    %p95 = scmp.eq.s32.totalorder %s13, 0
    %p96 = por %p94, %p95
    %p97 = scmp.ne.s32.totalorder %s89, %s91
    %p98 = scmp.eq.s32.totalorder %s18, 1
    %p99 = por %p97, %p98
    %p100 = scmp.ne.s32.totalorder %s91, %s92
    %p101 = scmp.eq.s32.totalorder %s18, 0
    %p102 = por %p100, %p101
    %p103 = scmp.ne.s32.totalorder %s91, %s92
    %p104 = scmp.eq.s32.totalorder %s19, 1
    %p105 = por %p103, %p104
    %p107 = scmp.ne.s32.totalorder %s92, %s106
    %p108 = scmp.eq.s32.totalorder %s19, 0
    %p109 = por %p107, %p108
    %s110 = ssub.s32 %s13, %s20
    %p111 = scmp.eq.s32.totalorder %s110, 0
    %s113 = sadd.s32 %s112, 1
    %s114 = scalar_select %p111, %s112, %s113
    %p117 = pneg %p111
    %p118 = scmp.eq.s32.totalorder %s13, 1
    %p119 = por %p117, %p118
    %p120 = scmp.ne.s32.totalorder %s112, %s115
    %p121 = scmp.eq.s32.totalorder %s13, 0
    %p122 = por %p120, %p121
    %p123 = scmp.ne.s32.totalorder %s112, %s115
    %p124 = scmp.eq.s32.totalorder %s18, 1
    %p125 = por %p123, %p124
    %p126 = scmp.ne.s32.totalorder %s115, %s116
    %p127 = scmp.eq.s32.totalorder %s18, 0
    %p128 = por %p126, %p127
    %p129 = scmp.ne.s32.totalorder %s115, %s116
    %p130 = scmp.eq.s32.totalorder %s19, 1
    %p131 = por %p129, %p130
    %p133 = scmp.ne.s32.totalorder %s116, %s132
    %p134 = scmp.eq.s32.totalorder %s19, 0
    %p135 = por %p133, %p134
    %s136 = ssub.s32 %s13, %s20
    %p137 = scmp.eq.s32.totalorder %s136, 0
    %s139 = sadd.s32 %s138, 1
    %s140 = scalar_select %p137, %s138, %s139
    %p143 = pneg %p137
    %p144 = scmp.eq.s32.totalorder %s13, 1
    %p145 = por %p143, %p144
    %p146 = scmp.ne.s32.totalorder %s138, %s141
    %p147 = scmp.eq.s32.totalorder %s13, 0
    %p148 = por %p146, %p147
    %p149 = scmp.ne.s32.totalorder %s138, %s141
    %p150 = scmp.eq.s32.totalorder %s18, 1
    %p151 = por %p149, %p150
    %p152 = scmp.ne.s32.totalorder %s141, %s142
    %p153 = scmp.eq.s32.totalorder %s18, 0
    %p154 = por %p152, %p153
    %p155 = scmp.ne.s32.totalorder %s141, %s142
    %p156 = scmp.eq.s32.totalorder %s19, 1
    %p157 = por %p155, %p156
    %p159 = scmp.ne.s32.totalorder %s142, %s158
    %p160 = scmp.eq.s32.totalorder %s19, 0
    %p161 = por %p159, %p160
    %s162 = ssub.s32 %s13, %s20
    %p163 = scmp.eq.s32.totalorder %s162, 0
    %s165 = sadd.s32 %s164, 1
    %s166 = scalar_select %p163, %s164, %s165
    %p169 = pneg %p163
    %p170 = scmp.eq.s32.totalorder %s13, 1
    %p171 = por %p169, %p170
    %p172 = scmp.ne.s32.totalorder %s164, %s167
    %p173 = scmp.eq.s32.totalorder %s13, 0
    %p174 = por %p172, %p173
    %p175 = scmp.ne.s32.totalorder %s164, %s167
    %p176 = scmp.eq.s32.totalorder %s18, 1
    %p177 = por %p175, %p176
    %p178 = scmp.ne.s32.totalorder %s167, %s168
    %p179 = scmp.eq.s32.totalorder %s18, 0
    %p180 = por %p178, %p179
    %p181 = scmp.ne.s32.totalorder %s167, %s168
    %p182 = scmp.eq.s32.totalorder %s19, 1
    %p183 = por %p181, %p182
    %p185 = scmp.ne.s32.totalorder %s168, %s184
    %p186 = scmp.eq.s32.totalorder %s19, 0
    %p187 = por %p185, %p186
    %p188 = scmp.le.s32.totalorder 1, %s13
    %p189 = scmp.lt.s32.totalorder %s13, 3
    %p190 = pnand %p188, %p189
    %p191 = pneg %p190
    // Predicated region
    $region9: #{basic_block.4} parent=5 // pred_check
      _
    $region10: #{basic_block.4} parent=5 // pred_check_branch
      %193 = sbr.rel (%p190) target = $region12
    $region11: #{basic_block.4} parent=5 // pred_region
      %s194 = ssub.s32 %s13, 1
      // Predicated region
      $region13: #{basic_block.4} parent=11 // pred_check
        %p195 = pneg %p60
      $region14: #{basic_block.4} parent=11 // pred_check_branch
        %197 = sbr.rel (%p195) target = $region16
      $region15: #{basic_block.4} parent=11 // pred_region
        _
      $region16: #{basic_block.4} parent=11 // pred_fallthru
        _
      // Predicated region
      $region17: #{basic_block.4} parent=11 // pred_check
        %p198 = pneg %p81
      $region18: #{basic_block.4} parent=11 // pred_check_branch
        %200 = sbr.rel (%p198) target = $region20
      $region19: #{basic_block.4} parent=11 // pred_region
        _
      $region20: #{basic_block.4} parent=11 // pred_fallthru
        _
      // Predicated region
      $region21: #{basic_block.4} parent=11 // pred_check
        %p201 = pneg %p102
      $region22: #{basic_block.4} parent=11 // pred_check_branch
        %203 = sbr.rel (%p201) target = $region24
      $region23: #{basic_block.4} parent=11 // pred_region
        _
      $region24: #{basic_block.4} parent=11 // pred_fallthru
        _
    $region12: #{basic_block.4} parent=5 // pred_fallthru
      _
    %p204 = scmp.lt.s32.totalorder %s13, 2
    // Predicated region
    $region25: #{basic_block.4} parent=5 // pred_check
      %p205 = pneg %p204
    $region26: #{basic_block.4} parent=5 // pred_check_branch
      %207 = sbr.rel (%p205) target = $region28
    $region27: #{basic_block.4} parent=5 // pred_region
      // Predicated region
      $region29: #{basic_block.4} parent=27 // pred_check
        %p208 = pneg %p33
      $region30: #{basic_block.4} parent=27 // pred_check_branch
        %210 = sbr.rel (%p208) target = $region32
      $region31: #{basic_block.4} parent=27 // pred_region
        %p211 = scmp.lt.s32.totalorder %s13, 1
        %s212 = scalar_select %p211, %s13, 1
        %s213 = smul.addr %s212, 32
        %s214 = smul.addr %s213, 4
        %s215 = scalar_lea.vmem %s0, %s214
      $region32: #{basic_block.4} parent=27 // pred_fallthru
        _
    $region28: #{basic_block.4} parent=5 // pred_fallthru
      _
    %p216 = scmp.le.s32.totalorder 1, %s13
    %p217 = scmp.lt.s32.totalorder %s13, 3
    %p218 = pnand %p216, %p217
    %p219 = pneg %p218
    // Predicated region
    $region33: #{basic_block.4} parent=5 // pred_check
      _
    $region34: #{basic_block.4} parent=5 // pred_check_branch
      %221 = sbr.rel (%p218) target = $region36
    $region35: #{basic_block.4} parent=5 // pred_region
      %s222 = ssub.s32 %s13, 1
      %p223 = scmp.lt.s32.totalorder %s18, 1
      %s224 = scalar_select %p223, %s18, 1
      %s225 = smul.addr %s224, 32
      %s226 = smul.addr %s225, 4
      %s227 = scalar_lea.vmem %s0, %s226
      %p228 = pneg %p39
      %p229 = pneg %p36
      %p230 = pneg %p60
      %p231 = pneg %p57
      %p232 = pneg %p81
      %p233 = pneg %p78
      %p234 = pneg %p102
      %p235 = pneg %p99
      %p236 = pneg %p128
      %p237 = pneg %p125
      %p238 = scmp.lt.s32.totalorder %s18, 1
      %s239 = scalar_select %p238, %s18, 1
      %s240 = smul.addr %s239, 32
      %s241 = smul.addr %s240, 4
      %s242 = scalar_lea.vmem %s4, %s241
      %p243 = pneg %p154
      %p244 = pneg %p151
      %p245 = scmp.lt.s32.totalorder %s18, 1
      %s246 = scalar_select %p245, %s18, 1
      %s247 = scalar_lea.vmem %s5, %s246
      %p248 = pneg %p180
      %p249 = pneg %p177
      %p250 = scmp.lt.s32.totalorder %s18, 1
      %s251 = scalar_select %p250, %s18, 1
      %s252 = scalar_lea.vmem %s6, %s251
      %p253 = scmp.lt.s32.totalorder %s18, 1
      %s254 = scalar_select %p253, %s18, 1
      %s255 = smul.addr %s254, 32
      %s256 = smul.addr %s255, 4
      %s257 = scalar_lea.vmem %s0, %s256
      %p258 = scmp.lt.s32.totalorder %s18, 1
      %s259 = scalar_select %p258, %s18, 1
      %s260 = smul.addr %s259, 32
      %s261 = smul.addr %s260, 4
      %s262 = scalar_lea.vmem %s4, %s261
      %p263 = scmp.lt.s32.totalorder %s18, 1
      %s264 = scalar_select %p263, %s18, 1
      %s265 = scalar_lea.vmem %s5, %s264
      %p266 = scmp.lt.s32.totalorder %s18, 1
      %s267 = scalar_select %p266, %s18, 1
      %s268 = scalar_lea.vmem %s6, %s267
      %v270 = vld [vmem:[%s257] sm:$0xf]
      %v271 = vld [vmem:[%s257 + $0x4] sm:$0xf]
      %v272 = vld [vmem:[%s257 + $0x8] sm:$0xf]
      %v273 = vld [vmem:[%s257 + $0xc] sm:$0xf]
      %v274 = vld [vmem:[%s257 + $0x10] sm:$0xf]
      %v275 = vld [vmem:[%s257 + $0x14] sm:$0xf]
      %v276 = vld [vmem:[%s257 + $0x18] sm:$0xf]
      %v277 = vld [vmem:[%s257 + $0x1c] sm:$0xf]
      %v278 = vld [vmem:[%s257 + $0x20] sm:$0xf]
      %v279 = vld [vmem:[%s257 + $0x24] sm:$0xf]
      %v280 = vld [vmem:[%s257 + $0x28] sm:$0xf]
      %v281 = vld [vmem:[%s257 + $0x2c] sm:$0xf]
      %v282 = vld [vmem:[%s257 + $0x30] sm:$0xf]
      %v283 = vld [vmem:[%s257 + $0x34] sm:$0xf]
      %v284 = vld [vmem:[%s257 + $0x38] sm:$0xf]
      %v285 = vld [vmem:[%s257 + $0x3c] sm:$0xf]
      %v286 = vld [vmem:[%s257 + $0x40] sm:$0xf]
      %v287 = vld [vmem:[%s257 + $0x44] sm:$0xf]
      %v288 = vld [vmem:[%s257 + $0x48] sm:$0xf]
      %v289 = vld [vmem:[%s257 + $0x4c] sm:$0xf]
      %v290 = vld [vmem:[%s257 + $0x50] sm:$0xf]
      %v291 = vld [vmem:[%s257 + $0x54] sm:$0xf]
      %v292 = vld [vmem:[%s257 + $0x58] sm:$0xf]
      %v293 = vld [vmem:[%s257 + $0x5c] sm:$0xf]
      %v294 = vld [vmem:[%s257 + $0x60] sm:$0xf]
      %v295 = vld [vmem:[%s257 + $0x64] sm:$0xf]
      %v296 = vld [vmem:[%s257 + $0x68] sm:$0xf]
      %v297 = vld [vmem:[%s257 + $0x6c] sm:$0xf]
      %v298 = vld [vmem:[%s257 + $0x70] sm:$0xf]
      %v299 = vld [vmem:[%s257 + $0x74] sm:$0xf]
      %v300 = vld [vmem:[%s257 + $0x78] sm:$0xf]
      %v301 = vld [vmem:[%s257 + $0x7c] sm:$0xf]
      %v302 = vunpack.c.l.bf16 %v270
      %v303 = vunpack.c.l.bf16 %v271
      %v304 = vunpack.c.l.bf16 %v272
      %v305 = vunpack.c.l.bf16 %v273
      %v306 = vunpack.c.l.bf16 %v274
      %v307 = vunpack.c.l.bf16 %v275
      %v308 = vunpack.c.l.bf16 %v276
      %v309 = vunpack.c.l.bf16 %v277
      %v310 = vunpack.c.l.bf16 %v278
      %v311 = vunpack.c.l.bf16 %v279
      %v312 = vunpack.c.l.bf16 %v280
      %v313 = vunpack.c.l.bf16 %v281
      %v314 = vunpack.c.l.bf16 %v282
      %v315 = vunpack.c.l.bf16 %v283
      %v316 = vunpack.c.l.bf16 %v284
      %v317 = vunpack.c.l.bf16 %v285
      %v318 = vunpack.c.l.bf16 %v286
      %v319 = vunpack.c.l.bf16 %v287
      %v320 = vunpack.c.l.bf16 %v288
      %v321 = vunpack.c.l.bf16 %v289
      %v322 = vunpack.c.l.bf16 %v290
      %v323 = vunpack.c.l.bf16 %v291
      %v324 = vunpack.c.l.bf16 %v292
      %v325 = vunpack.c.l.bf16 %v293
      %v326 = vunpack.c.l.bf16 %v294
      %v327 = vunpack.c.l.bf16 %v295
      %v328 = vunpack.c.l.bf16 %v296
      %v329 = vunpack.c.l.bf16 %v297
      %v330 = vunpack.c.l.bf16 %v298
      %v331 = vunpack.c.l.bf16 %v299
      %v332 = vunpack.c.l.bf16 %v300
      %v333 = vunpack.c.l.bf16 %v301
      %v334 = vld [vmem:[%s1] sm:$0x1]
      %v336 = vlaneseq
      %v337 = vshrl.u32 %v336, 7
      %v338 = vsub.s32 0, %v337
      %v339 = vrot.slane %v334, %v338
      %v341 = vmul.f32 %v302, %v339
      %v342 = vmul.f32 %v303, %v339
      %v343 = vmul.f32 %v304, %v339
      %v344 = vmul.f32 %v305, %v339
      %v345 = vmul.f32 %v306, %v339
      %v346 = vmul.f32 %v307, %v339
      %v347 = vmul.f32 %v308, %v339
      %v348 = vmul.f32 %v309, %v339
      %v349 = vmul.f32 %v310, %v339
      %v350 = vmul.f32 %v311, %v339
      %v351 = vmul.f32 %v312, %v339
      %v352 = vmul.f32 %v313, %v339
      %v353 = vmul.f32 %v314, %v339
      %v354 = vmul.f32 %v315, %v339
      %v355 = vmul.f32 %v316, %v339
      %v356 = vmul.f32 %v317, %v339
      %v357 = vmul.f32 %v318, %v339
      %v358 = vmul.f32 %v319, %v339
      %v359 = vmul.f32 %v320, %v339
      %v360 = vmul.f32 %v321, %v339
      %v361 = vmul.f32 %v322, %v339
      %v362 = vmul.f32 %v323, %v339
      %v363 = vmul.f32 %v324, %v339
      %v364 = vmul.f32 %v325, %v339
      %v365 = vmul.f32 %v326, %v339
      %v366 = vmul.f32 %v327, %v339
      %v367 = vmul.f32 %v328, %v339
      %v368 = vmul.f32 %v329, %v339
      %v369 = vmul.f32 %v330, %v339
      %v370 = vmul.f32 %v331, %v339
      %v371 = vmul.f32 %v332, %v339
      %v372 = vmul.f32 %v333, %v339
      %v373 = vld [vmem:[%s2] sm:$0x1]
      %v375 = vlaneseq
      %v376 = vshrl.u32 %v375, 7
      %v377 = vsub.s32 0, %v376
      %v378 = vrot.slane %v373, %v377
      %v380 = vadd.f32 %v341, %v378
      %v381 = vadd.f32 %v342, %v378
      %v382 = vadd.f32 %v343, %v378
      %v383 = vadd.f32 %v344, %v378
      %v384 = vadd.f32 %v345, %v378
      %v385 = vadd.f32 %v346, %v378
      %v386 = vadd.f32 %v347, %v378
      %v387 = vadd.f32 %v348, %v378
      %v388 = vadd.f32 %v349, %v378
      %v389 = vadd.f32 %v350, %v378
      %v390 = vadd.f32 %v351, %v378
      %v391 = vadd.f32 %v352, %v378
      %v392 = vadd.f32 %v353, %v378
      %v393 = vadd.f32 %v354, %v378
      %v394 = vadd.f32 %v355, %v378
      %v395 = vadd.f32 %v356, %v378
      %v396 = vadd.f32 %v357, %v378
      %v397 = vadd.f32 %v358, %v378
      %v398 = vadd.f32 %v359, %v378
      %v399 = vadd.f32 %v360, %v378
      %v400 = vadd.f32 %v361, %v378
      %v401 = vadd.f32 %v362, %v378
      %v402 = vadd.f32 %v363, %v378
      %v403 = vadd.f32 %v364, %v378
      %v404 = vadd.f32 %v365, %v378
      %v405 = vadd.f32 %v366, %v378
      %v406 = vadd.f32 %v367, %v378
      %v407 = vadd.f32 %v368, %v378
      %v408 = vadd.f32 %v369, %v378
      %v409 = vadd.f32 %v370, %v378
      %v410 = vadd.f32 %v371, %v378
      %v411 = vadd.f32 %v372, %v378
      %v412 = vmax.f32 %v380, 0.0
      %v413 = vmax.f32 %v381, 0.0
      %v414 = vmax.f32 %v382, 0.0
      %v415 = vmax.f32 %v383, 0.0
      %v416 = vmax.f32 %v384, 0.0
      %v417 = vmax.f32 %v385, 0.0
      %v418 = vmax.f32 %v386, 0.0
      %v419 = vmax.f32 %v387, 0.0
      %v420 = vmax.f32 %v388, 0.0
      %v421 = vmax.f32 %v389, 0.0
      %v422 = vmax.f32 %v390, 0.0
      %v423 = vmax.f32 %v391, 0.0
      %v424 = vmax.f32 %v392, 0.0
      %v425 = vmax.f32 %v393, 0.0
      %v426 = vmax.f32 %v394, 0.0
      %v427 = vmax.f32 %v395, 0.0
      %v428 = vmax.f32 %v396, 0.0
      %v429 = vmax.f32 %v397, 0.0
      %v430 = vmax.f32 %v398, 0.0
      %v431 = vmax.f32 %v399, 0.0
      %v432 = vmax.f32 %v400, 0.0
      %v433 = vmax.f32 %v401, 0.0
      %v434 = vmax.f32 %v402, 0.0
      %v435 = vmax.f32 %v403, 0.0
      %v436 = vmax.f32 %v404, 0.0
      %v437 = vmax.f32 %v405, 0.0
      %v438 = vmax.f32 %v406, 0.0
      %v439 = vmax.f32 %v407, 0.0
      %v440 = vmax.f32 %v408, 0.0
      %v441 = vmax.f32 %v409, 0.0
      %v442 = vmax.f32 %v410, 0.0
      %v443 = vmax.f32 %v411, 0.0
      %vm444 = vcmask 31744
      %445 = vst.msk [vmem:[#allocation2] sm:$0xff] %vm444, 0.0
      %446 = vst.msk [vmem:[#allocation2 + $0x8] sm:$0xff] %vm444, 0.0
      %vm447 = vcmask 25600
      %448 = vst.msk [vmem:[#allocation2 + $0x10] sm:$0x3] %vm447, 0.0
      %449 = vst.msk [vmem:[#allocation2 + $0x18] sm:$0xff] %vm444, 0.0
      %450 = vst.msk [vmem:[#allocation2 + $0x20] sm:$0xff] %vm444, 0.0
      %451 = vst.msk [vmem:[#allocation2 + $0x28] sm:$0x3] %vm447, 0.0
      %452 = vst.msk [vmem:[#allocation2 + $0x30] sm:$0xff] %vm444, 0.0
      %453 = vst.msk [vmem:[#allocation2 + $0x38] sm:$0xff] %vm444, 0.0
      %454 = vst.msk [vmem:[#allocation2 + $0x40] sm:$0x3] %vm447, 0.0
      %455 = vst.msk [vmem:[#allocation2 + $0x48] sm:$0xff] %vm444, 0.0
      %456 = vst.msk [vmem:[#allocation2 + $0x50] sm:$0xff] %vm444, 0.0
      %457 = vst.msk [vmem:[#allocation2 + $0x58] sm:$0x3] %vm447, 0.0
      %458 = vst.msk [vmem:[#allocation2 + $0x60] sm:$0xff] %vm444, 0.0
      %459 = vst.msk [vmem:[#allocation2 + $0x68] sm:$0xff] %vm444, 0.0
      %460 = vst.msk [vmem:[#allocation2 + $0x70] sm:$0x3] %vm447, 0.0
      %461 = vst.msk [vmem:[#allocation2 + $0x78] sm:$0xff] %vm444, 0.0
      %462 = vst.msk [vmem:[#allocation2 + $0x80] sm:$0xff] %vm444, 0.0
      %463 = vst.msk [vmem:[#allocation2 + $0x88] sm:$0x3] %vm447, 0.0
      %464 = vst.msk [vmem:[#allocation2 + $0x90] sm:$0xff] %vm444, 0.0
      %465 = vst.msk [vmem:[#allocation2 + $0x98] sm:$0xff] %vm444, 0.0
      %466 = vst.msk [vmem:[#allocation2 + $0xa0] sm:$0x3] %vm447, 0.0
      %467 = vst.msk [vmem:[#allocation2 + $0xa8] sm:$0xff] %vm444, 0.0
      %468 = vst.msk [vmem:[#allocation2 + $0xb0] sm:$0xff] %vm444, 0.0
      %469 = vst.msk [vmem:[#allocation2 + $0xb8] sm:$0x3] %vm447, 0.0
      %470 = vst.msk [vmem:[#allocation2 + $0xc0] sm:$0xff] %vm444, 0.0
      %471 = vst.msk [vmem:[#allocation2 + $0xc8] sm:$0xff] %vm444, 0.0
      %472 = vst.msk [vmem:[#allocation2 + $0xd0] sm:$0x3] %vm447, 0.0
      %473 = vst.msk [vmem:[#allocation2 + $0xd8] sm:$0xff] %vm444, 0.0
      %474 = vst.msk [vmem:[#allocation2 + $0xe0] sm:$0xff] %vm444, 0.0
      %475 = vst.msk [vmem:[#allocation2 + $0xe8] sm:$0x3] %vm447, 0.0
      %476 = vst.msk [vmem:[#allocation2 + $0xf0] sm:$0xff] %vm444, 0.0
      %477 = vst.msk [vmem:[#allocation2 + $0xf8] sm:$0xff] %vm444, 0.0
      %478 = vst.msk [vmem:[#allocation2 + $0x100] sm:$0x3] %vm447, 0.0
      %479 = vst.msk [vmem:[#allocation2 + $0x108] sm:$0xff] %vm444, 0.0
      %480 = vst.msk [vmem:[#allocation2 + $0x110] sm:$0xff] %vm444, 0.0
      %481 = vst.msk [vmem:[#allocation2 + $0x118] sm:$0x3] %vm447, 0.0
      %482 = vst.msk [vmem:[#allocation2 + $0x120] sm:$0xff] %vm444, 0.0
      %483 = vst.msk [vmem:[#allocation2 + $0x128] sm:$0xff] %vm444, 0.0
      %484 = vst.msk [vmem:[#allocation2 + $0x130] sm:$0x3] %vm447, 0.0
      %485 = vst.msk [vmem:[#allocation2 + $0x138] sm:$0xff] %vm444, 0.0
      %486 = vst.msk [vmem:[#allocation2 + $0x140] sm:$0xff] %vm444, 0.0
      %487 = vst.msk [vmem:[#allocation2 + $0x148] sm:$0x3] %vm447, 0.0
      %488 = vst.msk [vmem:[#allocation2 + $0x150] sm:$0xff] %vm444, 0.0
      %489 = vst.msk [vmem:[#allocation2 + $0x158] sm:$0xff] %vm444, 0.0
      %490 = vst.msk [vmem:[#allocation2 + $0x160] sm:$0x3] %vm447, 0.0
      %491 = vst.msk [vmem:[#allocation2 + $0x168] sm:$0xff] %vm444, 0.0
      %492 = vst.msk [vmem:[#allocation2 + $0x170] sm:$0xff] %vm444, 0.0
      %493 = vst.msk [vmem:[#allocation2 + $0x178] sm:$0x3] %vm447, 0.0
      %494 = vst.msk [vmem:[#allocation2 + $0x180] sm:$0xff] %vm444, 0.0
      %495 = vst.msk [vmem:[#allocation2 + $0x188] sm:$0xff] %vm444, 0.0
      %496 = vst.msk [vmem:[#allocation2 + $0x190] sm:$0x3] %vm447, 0.0
      %497 = vst.msk [vmem:[#allocation2 + $0x198] sm:$0xff] %vm444, 0.0
      %498 = vst.msk [vmem:[#allocation2 + $0x1a0] sm:$0xff] %vm444, 0.0
      %499 = vst.msk [vmem:[#allocation2 + $0x1a8] sm:$0x3] %vm447, 0.0
      %s500 = scalar_lea.vmem [#allocation2], 24
      %501 = vst.msk [vmem:[%s500 + $0x1] sm:$0xff] %vm444, %v412
      %502 = vst.msk [vmem:[%s500 + $0x9] sm:$0xff] %vm444, %v413
      %503 = vst.msk [vmem:[%s500 + $0x19] sm:$0xff] %vm444, %v414
      %504 = vst.msk [vmem:[%s500 + $0x21] sm:$0xff] %vm444, %v415
      %505 = vst.msk [vmem:[%s500 + $0x31] sm:$0xff] %vm444, %v416
      %506 = vst.msk [vmem:[%s500 + $0x39] sm:$0xff] %vm444, %v417
      %507 = vst.msk [vmem:[%s500 + $0x49] sm:$0xff] %vm444, %v418
      %508 = vst.msk [vmem:[%s500 + $0x51] sm:$0xff] %vm444, %v419
      %509 = vst.msk [vmem:[%s500 + $0x61] sm:$0xff] %vm444, %v420
      %510 = vst.msk [vmem:[%s500 + $0x69] sm:$0xff] %vm444, %v421
      %511 = vst.msk [vmem:[%s500 + $0x79] sm:$0xff] %vm444, %v422
      %512 = vst.msk [vmem:[%s500 + $0x81] sm:$0xff] %vm444, %v423
      %513 = vst.msk [vmem:[%s500 + $0x91] sm:$0xff] %vm444, %v424
      %514 = vst.msk [vmem:[%s500 + $0x99] sm:$0xff] %vm444, %v425
      %515 = vst.msk [vmem:[%s500 + $0xa9] sm:$0xff] %vm444, %v426
      %516 = vst.msk [vmem:[%s500 + $0xb1] sm:$0xff] %vm444, %v427
      %517 = vst.msk [vmem:[%s500 + $0xc1] sm:$0xff] %vm444, %v428
      %518 = vst.msk [vmem:[%s500 + $0xc9] sm:$0xff] %vm444, %v429
      %519 = vst.msk [vmem:[%s500 + $0xd9] sm:$0xff] %vm444, %v430
      %520 = vst.msk [vmem:[%s500 + $0xe1] sm:$0xff] %vm444, %v431
      %521 = vst.msk [vmem:[%s500 + $0xf1] sm:$0xff] %vm444, %v432
      %522 = vst.msk [vmem:[%s500 + $0xf9] sm:$0xff] %vm444, %v433
      %523 = vst.msk [vmem:[%s500 + $0x109] sm:$0xff] %vm444, %v434
      %524 = vst.msk [vmem:[%s500 + $0x111] sm:$0xff] %vm444, %v435
      %525 = vst.msk [vmem:[%s500 + $0x121] sm:$0xff] %vm444, %v436
      %526 = vst.msk [vmem:[%s500 + $0x129] sm:$0xff] %vm444, %v437
      %527 = vst.msk [vmem:[%s500 + $0x139] sm:$0xff] %vm444, %v438
      %528 = vst.msk [vmem:[%s500 + $0x141] sm:$0xff] %vm444, %v439
      %529 = vst.msk [vmem:[%s500 + $0x151] sm:$0xff] %vm444, %v440
      %530 = vst.msk [vmem:[%s500 + $0x159] sm:$0xff] %vm444, %v441
      %531 = vst.msk [vmem:[%s500 + $0x169] sm:$0xff] %vm444, %v442
      %532 = vst.msk [vmem:[%s500 + $0x171] sm:$0xff] %vm444, %v443
      %v533 = vld [vmem:[#allocation2] sm:$0xff]
      %v534 = vld [vmem:[#allocation2 + $0x8] sm:$0xff]
      %v535 = vld [vmem:[#allocation2 + $0x10] sm:$0x3]
      %v536 = vld [vmem:[#allocation2 + $0x18] sm:$0xff]
      %v537 = vld [vmem:[#allocation2 + $0x20] sm:$0xff]
      %v538 = vld [vmem:[#allocation2 + $0x28] sm:$0x3]
      %v539 = vld [vmem:[#allocation2 + $0x30] sm:$0xff]
      %v540 = vld [vmem:[#allocation2 + $0x38] sm:$0xff]
      %v541 = vld [vmem:[#allocation2 + $0x40] sm:$0x3]
      %v542 = vld [vmem:[#allocation2 + $0x48] sm:$0xff]
      %v543 = vld [vmem:[#allocation2 + $0x50] sm:$0xff]
      %v544 = vld [vmem:[#allocation2 + $0x58] sm:$0x3]
      %v545 = vld [vmem:[#allocation2 + $0x60] sm:$0xff]
      %v546 = vld [vmem:[#allocation2 + $0x68] sm:$0xff]
      %v547 = vld [vmem:[#allocation2 + $0x70] sm:$0x3]
      %v548 = vld [vmem:[#allocation2 + $0x78] sm:$0xff]
      %v549 = vld [vmem:[#allocation2 + $0x80] sm:$0xff]
      %v550 = vld [vmem:[#allocation2 + $0x88] sm:$0x3]
      %v551 = vld [vmem:[#allocation2 + $0x90] sm:$0xff]
      %v552 = vld [vmem:[#allocation2 + $0x98] sm:$0xff]
      %v553 = vld [vmem:[#allocation2 + $0xa0] sm:$0x3]
      %v554 = vld [vmem:[#allocation2 + $0xa8] sm:$0xff]
      %v555 = vld [vmem:[#allocation2 + $0xb0] sm:$0xff]
      %v556 = vld [vmem:[#allocation2 + $0xb8] sm:$0x3]
      %v557 = vld [vmem:[#allocation2 + $0xc0] sm:$0xff]
      %v558 = vld [vmem:[#allocation2 + $0xc8] sm:$0xff]
      %v559 = vld [vmem:[#allocation2 + $0xd0] sm:$0x3]
      %v560 = vld [vmem:[#allocation2 + $0xd8] sm:$0xff]
      %v561 = vld [vmem:[#allocation2 + $0xe0] sm:$0xff]
      %v562 = vld [vmem:[#allocation2 + $0xe8] sm:$0x3]
      %v563 = vld [vmem:[#allocation2 + $0xf0] sm:$0xff]
      %v564 = vld [vmem:[#allocation2 + $0xf8] sm:$0xff]
      %v565 = vld [vmem:[#allocation2 + $0x100] sm:$0x3]
      %v566 = vld [vmem:[#allocation2 + $0x108] sm:$0xff]
      %v567 = vld [vmem:[#allocation2 + $0x110] sm:$0xff]
      %v568 = vld [vmem:[#allocation2 + $0x118] sm:$0x3]
      %v569 = vld [vmem:[#allocation2 + $0x120] sm:$0xff]
      %v570 = vld [vmem:[#allocation2 + $0x128] sm:$0xff]
      %v571 = vld [vmem:[#allocation2 + $0x130] sm:$0x3]
      %v572 = vld [vmem:[#allocation2 + $0x138] sm:$0xff]
      %v573 = vld [vmem:[#allocation2 + $0x140] sm:$0xff]
      %v574 = vld [vmem:[#allocation2 + $0x148] sm:$0x3]
      %v575 = vld [vmem:[#allocation2 + $0x150] sm:$0xff]
      %v576 = vld [vmem:[#allocation2 + $0x158] sm:$0xff]
      %v577 = vld [vmem:[#allocation2 + $0x160] sm:$0x3]
      %v578 = vld [vmem:[#allocation2 + $0x168] sm:$0xff]
      %v579 = vld [vmem:[#allocation2 + $0x170] sm:$0xff]
      %v580 = vld [vmem:[#allocation2 + $0x178] sm:$0x3]
      %v581 = vld [vmem:[#allocation2 + $0x180] sm:$0xff]
      %v582 = vld [vmem:[#allocation2 + $0x188] sm:$0xff]
      %v583 = vld [vmem:[#allocation2 + $0x190] sm:$0x3]
      %v584 = vld [vmem:[#allocation2 + $0x198] sm:$0xff]
      %v585 = vld [vmem:[#allocation2 + $0x1a0] sm:$0xff]
      %v586 = vld [vmem:[#allocation2 + $0x1a8] sm:$0x3]
      %587 = vst.msk [vmem:[#allocation3] sm:$0xff] %vm444, %v533
      %588 = vst.msk [vmem:[#allocation3 + $0x8] sm:$0xff] %vm444, %v534
      %589 = vst.msk [vmem:[#allocation3 + $0x10] sm:$0xff] %vm444, %v536
      %590 = vst.msk [vmem:[#allocation3 + $0x18] sm:$0xff] %vm444, %v537
      %591 = vst.msk [vmem:[#allocation3 + $0x20] sm:$0xff] %vm444, %v539
      %592 = vst.msk [vmem:[#allocation3 + $0x28] sm:$0xff] %vm444, %v540
      %593 = vst.msk [vmem:[#allocation3 + $0x30] sm:$0xff] %vm444, %v542
      %594 = vst.msk [vmem:[#allocation3 + $0x38] sm:$0xff] %vm444, %v543
      %595 = vst.msk [vmem:[#allocation3 + $0x40] sm:$0xff] %vm444, %v545
      %596 = vst.msk [vmem:[#allocation3 + $0x48] sm:$0xff] %vm444, %v546
      %597 = vst.msk [vmem:[#allocation3 + $0x50] sm:$0xff] %vm444, %v548
      %598 = vst.msk [vmem:[#allocation3 + $0x58] sm:$0xff] %vm444, %v549
      %599 = vst.msk [vmem:[#allocation3 + $0x60] sm:$0xff] %vm444, %v551
      %600 = vst.msk [vmem:[#allocation3 + $0x68] sm:$0xff] %vm444, %v552
      %601 = vst.msk [vmem:[#allocation3 + $0x70] sm:$0xff] %vm444, %v554
      %602 = vst.msk [vmem:[#allocation3 + $0x78] sm:$0xff] %vm444, %v555
      %603 = vst.msk [vmem:[#allocation3 + $0x80] sm:$0xff] %vm444, %v557
      %604 = vst.msk [vmem:[#allocation3 + $0x88] sm:$0xff] %vm444, %v558
      %605 = vst.msk [vmem:[#allocation3 + $0x90] sm:$0xff] %vm444, %v560
      %606 = vst.msk [vmem:[#allocation3 + $0x98] sm:$0xff] %vm444, %v561
      %607 = vst.msk [vmem:[#allocation3 + $0xa0] sm:$0xff] %vm444, %v563
      %608 = vst.msk [vmem:[#allocation3 + $0xa8] sm:$0xff] %vm444, %v564
      %609 = vst.msk [vmem:[#allocation3 + $0xb0] sm:$0xff] %vm444, %v566
      %610 = vst.msk [vmem:[#allocation3 + $0xb8] sm:$0xff] %vm444, %v567
      %611 = vst.msk [vmem:[#allocation3 + $0xc0] sm:$0xff] %vm444, %v569
      %612 = vst.msk [vmem:[#allocation3 + $0xc8] sm:$0xff] %vm444, %v570
      %613 = vst.msk [vmem:[#allocation3 + $0xd0] sm:$0xff] %vm444, %v572
      %614 = vst.msk [vmem:[#allocation3 + $0xd8] sm:$0xff] %vm444, %v573
      %615 = vst.msk [vmem:[#allocation3 + $0xe0] sm:$0xff] %vm444, %v575
      %616 = vst.msk [vmem:[#allocation3 + $0xe8] sm:$0xff] %vm444, %v576
      %617 = vst.msk [vmem:[#allocation3 + $0xf0] sm:$0xff] %vm444, %v578
      %618 = vst.msk [vmem:[#allocation3 + $0xf8] sm:$0xff] %vm444, %v579
      %619 = vst.msk [vmem:[#allocation3 + $0x100] sm:$0xff] %vm444, %v581
      %620 = vst.msk [vmem:[#allocation3 + $0x108] sm:$0xff] %vm444, %v582
      %621 = vst.msk [vmem:[#allocation3 + $0x110] sm:$0xff] %vm444, %v584
      %622 = vst.msk [vmem:[#allocation3 + $0x118] sm:$0xff] %vm444, %v585
      %677 = vrot.lane.b32.xlu0 %v533, 4
      %v678 = vpop.permute.xlu0 %677
      %679 = vrot.lane.b32.xlu0 %v534, 4
      %v680 = vpop.permute.xlu0 %679
      %681 = vrot.lane.b32.xlu0 %v535, 4
      %v682 = vpop.permute.xlu0 %681
      %683 = vrot.lane.b32.xlu0 %v536, 4
      %v684 = vpop.permute.xlu0 %683
      %685 = vrot.lane.b32.xlu0 %v537, 4
      %v686 = vpop.permute.xlu0 %685
      %687 = vrot.lane.b32.xlu0 %v538, 4
      %v688 = vpop.permute.xlu0 %687
      %689 = vrot.lane.b32.xlu0 %v539, 4
      %v690 = vpop.permute.xlu0 %689
      %691 = vrot.lane.b32.xlu0 %v540, 4
      %v692 = vpop.permute.xlu0 %691
      %693 = vrot.lane.b32.xlu0 %v541, 4
      %v694 = vpop.permute.xlu0 %693
      %695 = vrot.lane.b32.xlu0 %v542, 4
      %v696 = vpop.permute.xlu0 %695
      %697 = vrot.lane.b32.xlu0 %v543, 4
      %v698 = vpop.permute.xlu0 %697
      %699 = vrot.lane.b32.xlu0 %v544, 4
      %v700 = vpop.permute.xlu0 %699
      %701 = vrot.lane.b32.xlu0 %v545, 4
      %v702 = vpop.permute.xlu0 %701
      %703 = vrot.lane.b32.xlu0 %v546, 4
      %v704 = vpop.permute.xlu0 %703
      %705 = vrot.lane.b32.xlu0 %v547, 4
      %v706 = vpop.permute.xlu0 %705
      %707 = vrot.lane.b32.xlu0 %v548, 4
      %v708 = vpop.permute.xlu0 %707
      %709 = vrot.lane.b32.xlu0 %v549, 4
      %v710 = vpop.permute.xlu0 %709
      %711 = vrot.lane.b32.xlu0 %v550, 4
      %v712 = vpop.permute.xlu0 %711
      %713 = vrot.lane.b32.xlu0 %v551, 4
      %v714 = vpop.permute.xlu0 %713
      %715 = vrot.lane.b32.xlu0 %v552, 4
      %v716 = vpop.permute.xlu0 %715
      %717 = vrot.lane.b32.xlu0 %v553, 4
      %v718 = vpop.permute.xlu0 %717
      %719 = vrot.lane.b32.xlu0 %v554, 4
      %v720 = vpop.permute.xlu0 %719
      %721 = vrot.lane.b32.xlu0 %v555, 4
      %v722 = vpop.permute.xlu0 %721
      %723 = vrot.lane.b32.xlu0 %v556, 4
      %v724 = vpop.permute.xlu0 %723
      %725 = vrot.lane.b32.xlu0 %v557, 4
      %v726 = vpop.permute.xlu0 %725
      %727 = vrot.lane.b32.xlu0 %v558, 4
      %v728 = vpop.permute.xlu0 %727
      %729 = vrot.lane.b32.xlu0 %v559, 4
      %v730 = vpop.permute.xlu0 %729
      %731 = vrot.lane.b32.xlu0 %v560, 4
      %v732 = vpop.permute.xlu0 %731
      %733 = vrot.lane.b32.xlu0 %v561, 4
      %v734 = vpop.permute.xlu0 %733
      %735 = vrot.lane.b32.xlu0 %v562, 4
      %v736 = vpop.permute.xlu0 %735
      %737 = vrot.lane.b32.xlu0 %v563, 4
      %v738 = vpop.permute.xlu0 %737
      %739 = vrot.lane.b32.xlu0 %v564, 4
      %v740 = vpop.permute.xlu0 %739
      %741 = vrot.lane.b32.xlu0 %v565, 4
      %v742 = vpop.permute.xlu0 %741
      %743 = vrot.lane.b32.xlu0 %v566, 4
      %v744 = vpop.permute.xlu0 %743
      %745 = vrot.lane.b32.xlu0 %v567, 4
      %v746 = vpop.permute.xlu0 %745
      %747 = vrot.lane.b32.xlu0 %v568, 4
      %v748 = vpop.permute.xlu0 %747
      %749 = vrot.lane.b32.xlu0 %v569, 4
      %v750 = vpop.permute.xlu0 %749
      %751 = vrot.lane.b32.xlu0 %v570, 4
      %v752 = vpop.permute.xlu0 %751
      %753 = vrot.lane.b32.xlu0 %v571, 4
      %v754 = vpop.permute.xlu0 %753
      %755 = vrot.lane.b32.xlu0 %v572, 4
      %v756 = vpop.permute.xlu0 %755
      %757 = vrot.lane.b32.xlu0 %v573, 4
      %v758 = vpop.permute.xlu0 %757
      %759 = vrot.lane.b32.xlu0 %v574, 4
      %v760 = vpop.permute.xlu0 %759
      %761 = vrot.lane.b32.xlu0 %v575, 4
      %v762 = vpop.permute.xlu0 %761
      %763 = vrot.lane.b32.xlu0 %v576, 4
      %v764 = vpop.permute.xlu0 %763
      %765 = vrot.lane.b32.xlu0 %v577, 4
      %v766 = vpop.permute.xlu0 %765
      %767 = vrot.lane.b32.xlu0 %v578, 4
      %v768 = vpop.permute.xlu0 %767
      %769 = vrot.lane.b32.xlu0 %v579, 4
      %v770 = vpop.permute.xlu0 %769
      %771 = vrot.lane.b32.xlu0 %v580, 4
      %v772 = vpop.permute.xlu0 %771
      %773 = vrot.lane.b32.xlu0 %v581, 4
      %v774 = vpop.permute.xlu0 %773
      %775 = vrot.lane.b32.xlu0 %v582, 4
      %v776 = vpop.permute.xlu0 %775
      %777 = vrot.lane.b32.xlu0 %v583, 4
      %v778 = vpop.permute.xlu0 %777
      %779 = vrot.lane.b32.xlu0 %v584, 4
      %v780 = vpop.permute.xlu0 %779
      %781 = vrot.lane.b32.xlu0 %v585, 4
      %v782 = vpop.permute.xlu0 %781
      %783 = vrot.lane.b32.xlu0 %v586, 4
      %v784 = vpop.permute.xlu0 %783
      %vm839 = vcmask 64545
      %840 = vst.msk [vmem:[#allocation3 - $0x1] sm:$0xfe] %vm839, %v678
      %vm841 = vcmask 64544
      %842 = vst.msk [vmem:[#allocation3 + $0x7] sm:$0xff] %vm841, %v680
      %vm843 = vcmask 57376
      %844 = vst.msk [vmem:[#allocation3 + $0xf] sm:$0x1] %vm843, %v682
      %845 = vst.msk [vmem:[#allocation3 + $0xf] sm:$0xfe] %vm839, %v684
      %846 = vst.msk [vmem:[#allocation3 + $0x17] sm:$0xff] %vm841, %v686
      %847 = vst.msk [vmem:[#allocation3 + $0x1f] sm:$0x1] %vm843, %v688
      %848 = vst.msk [vmem:[#allocation3 + $0x1f] sm:$0xfe] %vm839, %v690
      %849 = vst.msk [vmem:[#allocation3 + $0x27] sm:$0xff] %vm841, %v692
      %850 = vst.msk [vmem:[#allocation3 + $0x2f] sm:$0x1] %vm843, %v694
      %851 = vst.msk [vmem:[#allocation3 + $0x2f] sm:$0xfe] %vm839, %v696
      %852 = vst.msk [vmem:[#allocation3 + $0x37] sm:$0xff] %vm841, %v698
      %853 = vst.msk [vmem:[#allocation3 + $0x3f] sm:$0x1] %vm843, %v700
      %854 = vst.msk [vmem:[#allocation3 + $0x3f] sm:$0xfe] %vm839, %v702
      %855 = vst.msk [vmem:[#allocation3 + $0x47] sm:$0xff] %vm841, %v704
      %856 = vst.msk [vmem:[#allocation3 + $0x4f] sm:$0x1] %vm843, %v706
      %857 = vst.msk [vmem:[#allocation3 + $0x4f] sm:$0xfe] %vm839, %v708
      %858 = vst.msk [vmem:[#allocation3 + $0x57] sm:$0xff] %vm841, %v710
      %859 = vst.msk [vmem:[#allocation3 + $0x5f] sm:$0x1] %vm843, %v712
      %860 = vst.msk [vmem:[#allocation3 + $0x5f] sm:$0xfe] %vm839, %v714
      %861 = vst.msk [vmem:[#allocation3 + $0x67] sm:$0xff] %vm841, %v716
      %862 = vst.msk [vmem:[#allocation3 + $0x6f] sm:$0x1] %vm843, %v718
      %863 = vst.msk [vmem:[#allocation3 + $0x6f] sm:$0xfe] %vm839, %v720
      %864 = vst.msk [vmem:[#allocation3 + $0x77] sm:$0xff] %vm841, %v722
      %865 = vst.msk [vmem:[#allocation3 + $0x7f] sm:$0x1] %vm843, %v724
      %866 = vst.msk [vmem:[#allocation3 + $0x7f] sm:$0xfe] %vm839, %v726
      %867 = vst.msk [vmem:[#allocation3 + $0x87] sm:$0xff] %vm841, %v728
      %868 = vst.msk [vmem:[#allocation3 + $0x8f] sm:$0x1] %vm843, %v730
      %869 = vst.msk [vmem:[#allocation3 + $0x8f] sm:$0xfe] %vm839, %v732
      %870 = vst.msk [vmem:[#allocation3 + $0x97] sm:$0xff] %vm841, %v734
      %871 = vst.msk [vmem:[#allocation3 + $0x9f] sm:$0x1] %vm843, %v736
      %872 = vst.msk [vmem:[#allocation3 + $0x9f] sm:$0xfe] %vm839, %v738
      %873 = vst.msk [vmem:[#allocation3 + $0xa7] sm:$0xff] %vm841, %v740
      %874 = vst.msk [vmem:[#allocation3 + $0xaf] sm:$0x1] %vm843, %v742
      %875 = vst.msk [vmem:[#allocation3 + $0xaf] sm:$0xfe] %vm839, %v744
      %876 = vst.msk [vmem:[#allocation3 + $0xb7] sm:$0xff] %vm841, %v746
      %877 = vst.msk [vmem:[#allocation3 + $0xbf] sm:$0x1] %vm843, %v748
      %878 = vst.msk [vmem:[#allocation3 + $0xbf] sm:$0xfe] %vm839, %v750
      %879 = vst.msk [vmem:[#allocation3 + $0xc7] sm:$0xff] %vm841, %v752
      %880 = vst.msk [vmem:[#allocation3 + $0xcf] sm:$0x1] %vm843, %v754
      %881 = vst.msk [vmem:[#allocation3 + $0xcf] sm:$0xfe] %vm839, %v756
      %882 = vst.msk [vmem:[#allocation3 + $0xd7] sm:$0xff] %vm841, %v758
      %883 = vst.msk [vmem:[#allocation3 + $0xdf] sm:$0x1] %vm843, %v760
      %884 = vst.msk [vmem:[#allocation3 + $0xdf] sm:$0xfe] %vm839, %v762
      %885 = vst.msk [vmem:[#allocation3 + $0xe7] sm:$0xff] %vm841, %v764
      %886 = vst.msk [vmem:[#allocation3 + $0xef] sm:$0x1] %vm843, %v766
      %887 = vst.msk [vmem:[#allocation3 + $0xef] sm:$0xfe] %vm839, %v768
      %888 = vst.msk [vmem:[#allocation3 + $0xf7] sm:$0xff] %vm841, %v770
      %889 = vst.msk [vmem:[#allocation3 + $0xff] sm:$0x1] %vm843, %v772
      %890 = vst.msk [vmem:[#allocation3 + $0xff] sm:$0xfe] %vm839, %v774
      %891 = vst.msk [vmem:[#allocation3 + $0x107] sm:$0xff] %vm841, %v776
      %892 = vst.msk [vmem:[#allocation3 + $0x10f] sm:$0x1] %vm843, %v778
      %893 = vst.msk [vmem:[#allocation3 + $0x10f] sm:$0xfe] %vm839, %v780
      %894 = vst.msk [vmem:[#allocation3 + $0x117] sm:$0xff] %vm841, %v782
      %895 = vst.msk [vmem:[#allocation3 + $0x11f] sm:$0x1] %vm843, %v784
      %896 = vrot.lane.b32.xlu0 %v533, 8
      %v897 = vpop.permute.xlu0 %896
      %898 = vrot.lane.b32.xlu0 %v534, 8
      %v899 = vpop.permute.xlu0 %898
      %900 = vrot.lane.b32.xlu0 %v535, 8
      %v901 = vpop.permute.xlu0 %900
      %902 = vrot.lane.b32.xlu0 %v536, 8
      %v903 = vpop.permute.xlu0 %902
      %904 = vrot.lane.b32.xlu0 %v537, 8
      %v905 = vpop.permute.xlu0 %904
      %906 = vrot.lane.b32.xlu0 %v538, 8
      %v907 = vpop.permute.xlu0 %906
      %908 = vrot.lane.b32.xlu0 %v539, 8
      %v909 = vpop.permute.xlu0 %908
      %910 = vrot.lane.b32.xlu0 %v540, 8
      %v911 = vpop.permute.xlu0 %910
      %912 = vrot.lane.b32.xlu0 %v541, 8
      %v913 = vpop.permute.xlu0 %912
      %914 = vrot.lane.b32.xlu0 %v542, 8
      %v915 = vpop.permute.xlu0 %914
      %916 = vrot.lane.b32.xlu0 %v543, 8
      %v917 = vpop.permute.xlu0 %916
      %918 = vrot.lane.b32.xlu0 %v544, 8
      %v919 = vpop.permute.xlu0 %918
      %920 = vrot.lane.b32.xlu0 %v545, 8
      %v921 = vpop.permute.xlu0 %920
      %922 = vrot.lane.b32.xlu0 %v546, 8
      %v923 = vpop.permute.xlu0 %922
      %924 = vrot.lane.b32.xlu0 %v547, 8
      %v925 = vpop.permute.xlu0 %924
      %926 = vrot.lane.b32.xlu0 %v548, 8
      %v927 = vpop.permute.xlu0 %926
      %928 = vrot.lane.b32.xlu0 %v549, 8
      %v929 = vpop.permute.xlu0 %928
      %930 = vrot.lane.b32.xlu0 %v550, 8
      %v931 = vpop.permute.xlu0 %930
      %932 = vrot.lane.b32.xlu0 %v551, 8
      %v933 = vpop.permute.xlu0 %932
      %934 = vrot.lane.b32.xlu0 %v552, 8
      %v935 = vpop.permute.xlu0 %934
      %936 = vrot.lane.b32.xlu0 %v553, 8
      %v937 = vpop.permute.xlu0 %936
      %938 = vrot.lane.b32.xlu0 %v554, 8
      %v939 = vpop.permute.xlu0 %938
      %940 = vrot.lane.b32.xlu0 %v555, 8
      %v941 = vpop.permute.xlu0 %940
      %942 = vrot.lane.b32.xlu0 %v556, 8
      %v943 = vpop.permute.xlu0 %942
      %944 = vrot.lane.b32.xlu0 %v557, 8
      %v945 = vpop.permute.xlu0 %944
      %946 = vrot.lane.b32.xlu0 %v558, 8
      %v947 = vpop.permute.xlu0 %946
      %948 = vrot.lane.b32.xlu0 %v559, 8
      %v949 = vpop.permute.xlu0 %948
      %950 = vrot.lane.b32.xlu0 %v560, 8
      %v951 = vpop.permute.xlu0 %950
      %952 = vrot.lane.b32.xlu0 %v561, 8
      %v953 = vpop.permute.xlu0 %952
      %954 = vrot.lane.b32.xlu0 %v562, 8
      %v955 = vpop.permute.xlu0 %954
      %956 = vrot.lane.b32.xlu0 %v563, 8
      %v957 = vpop.permute.xlu0 %956
      %958 = vrot.lane.b32.xlu0 %v564, 8
      %v959 = vpop.permute.xlu0 %958
      %960 = vrot.lane.b32.xlu0 %v565, 8
      %v961 = vpop.permute.xlu0 %960
      %962 = vrot.lane.b32.xlu0 %v566, 8
      %v963 = vpop.permute.xlu0 %962
      %964 = vrot.lane.b32.xlu0 %v567, 8
      %v965 = vpop.permute.xlu0 %964
      %966 = vrot.lane.b32.xlu0 %v568, 8
      %v967 = vpop.permute.xlu0 %966
      %968 = vrot.lane.b32.xlu0 %v569, 8
      %v969 = vpop.permute.xlu0 %968
      %970 = vrot.lane.b32.xlu0 %v570, 8
      %v971 = vpop.permute.xlu0 %970
      %972 = vrot.lane.b32.xlu0 %v571, 8
      %v973 = vpop.permute.xlu0 %972
      %974 = vrot.lane.b32.xlu0 %v572, 8
      %v975 = vpop.permute.xlu0 %974
      %976 = vrot.lane.b32.xlu0 %v573, 8
      %v977 = vpop.permute.xlu0 %976
      %978 = vrot.lane.b32.xlu0 %v574, 8
      %v979 = vpop.permute.xlu0 %978
      %980 = vrot.lane.b32.xlu0 %v575, 8
      %v981 = vpop.permute.xlu0 %980
      %982 = vrot.lane.b32.xlu0 %v576, 8
      %v983 = vpop.permute.xlu0 %982
      %984 = vrot.lane.b32.xlu0 %v577, 8
      %v985 = vpop.permute.xlu0 %984
      %986 = vrot.lane.b32.xlu0 %v578, 8
      %v987 = vpop.permute.xlu0 %986
      %988 = vrot.lane.b32.xlu0 %v579, 8
      %v989 = vpop.permute.xlu0 %988
      %990 = vrot.lane.b32.xlu0 %v580, 8
      %v991 = vpop.permute.xlu0 %990
      %992 = vrot.lane.b32.xlu0 %v581, 8
      %v993 = vpop.permute.xlu0 %992
      %994 = vrot.lane.b32.xlu0 %v582, 8
      %v995 = vpop.permute.xlu0 %994
      %996 = vrot.lane.b32.xlu0 %v583, 8
      %v997 = vpop.permute.xlu0 %996
      %998 = vrot.lane.b32.xlu0 %v584, 8
      %v999 = vpop.permute.xlu0 %998
      %1000 = vrot.lane.b32.xlu0 %v585, 8
      %v1001 = vpop.permute.xlu0 %1000
      %1002 = vrot.lane.b32.xlu0 %v586, 8
      %v1003 = vpop.permute.xlu0 %1002
      %vm1058 = vcmask 97346
      %1059 = vst.msk [vmem:[#allocation3 - $0x2] sm:$0xfc] %vm1058, %v897
      %vm1060 = vcmask 97344
      %1061 = vst.msk [vmem:[#allocation3 + $0x6] sm:$0xff] %vm1060, %v899
      %vm1062 = vcmask 91200
      %1063 = vst.msk [vmem:[#allocation3 + $0xe] sm:$0x3] %vm1062, %v901
      %1064 = vst.msk [vmem:[#allocation3 + $0xe] sm:$0xfc] %vm1058, %v903
      %1065 = vst.msk [vmem:[#allocation3 + $0x16] sm:$0xff] %vm1060, %v905
      %1066 = vst.msk [vmem:[#allocation3 + $0x1e] sm:$0x3] %vm1062, %v907
      %1067 = vst.msk [vmem:[#allocation3 + $0x1e] sm:$0xfc] %vm1058, %v909
      %1068 = vst.msk [vmem:[#allocation3 + $0x26] sm:$0xff] %vm1060, %v911
      %1069 = vst.msk [vmem:[#allocation3 + $0x2e] sm:$0x3] %vm1062, %v913
      %1070 = vst.msk [vmem:[#allocation3 + $0x2e] sm:$0xfc] %vm1058, %v915
      %1071 = vst.msk [vmem:[#allocation3 + $0x36] sm:$0xff] %vm1060, %v917
      %1072 = vst.msk [vmem:[#allocation3 + $0x3e] sm:$0x3] %vm1062, %v919
      %1073 = vst.msk [vmem:[#allocation3 + $0x3e] sm:$0xfc] %vm1058, %v921
      %1074 = vst.msk [vmem:[#allocation3 + $0x46] sm:$0xff] %vm1060, %v923
      %1075 = vst.msk [vmem:[#allocation3 + $0x4e] sm:$0x3] %vm1062, %v925
      %1076 = vst.msk [vmem:[#allocation3 + $0x4e] sm:$0xfc] %vm1058, %v927
      %1077 = vst.msk [vmem:[#allocation3 + $0x56] sm:$0xff] %vm1060, %v929
      %1078 = vst.msk [vmem:[#allocation3 + $0x5e] sm:$0x3] %vm1062, %v931
      %1079 = vst.msk [vmem:[#allocation3 + $0x5e] sm:$0xfc] %vm1058, %v933
      %1080 = vst.msk [vmem:[#allocation3 + $0x66] sm:$0xff] %vm1060, %v935
      %1081 = vst.msk [vmem:[#allocation3 + $0x6e] sm:$0x3] %vm1062, %v937
      %1082 = vst.msk [vmem:[#allocation3 + $0x6e] sm:$0xfc] %vm1058, %v939
      %1083 = vst.msk [vmem:[#allocation3 + $0x76] sm:$0xff] %vm1060, %v941
      %1084 = vst.msk [vmem:[#allocation3 + $0x7e] sm:$0x3] %vm1062, %v943
      %1085 = vst.msk [vmem:[#allocation3 + $0x7e] sm:$0xfc] %vm1058, %v945
      %1086 = vst.msk [vmem:[#allocation3 + $0x86] sm:$0xff] %vm1060, %v947
      %1087 = vst.msk [vmem:[#allocation3 + $0x8e] sm:$0x3] %vm1062, %v949
      %1088 = vst.msk [vmem:[#allocation3 + $0x8e] sm:$0xfc] %vm1058, %v951
      %1089 = vst.msk [vmem:[#allocation3 + $0x96] sm:$0xff] %vm1060, %v953
      %1090 = vst.msk [vmem:[#allocation3 + $0x9e] sm:$0x3] %vm1062, %v955
      %1091 = vst.msk [vmem:[#allocation3 + $0x9e] sm:$0xfc] %vm1058, %v957
      %1092 = vst.msk [vmem:[#allocation3 + $0xa6] sm:$0xff] %vm1060, %v959
      %1093 = vst.msk [vmem:[#allocation3 + $0xae] sm:$0x3] %vm1062, %v961
      %1094 = vst.msk [vmem:[#allocation3 + $0xae] sm:$0xfc] %vm1058, %v963
      %1095 = vst.msk [vmem:[#allocation3 + $0xb6] sm:$0xff] %vm1060, %v965
      %1096 = vst.msk [vmem:[#allocation3 + $0xbe] sm:$0x3] %vm1062, %v967
      %1097 = vst.msk [vmem:[#allocation3 + $0xbe] sm:$0xfc] %vm1058, %v969
      %1098 = vst.msk [vmem:[#allocation3 + $0xc6] sm:$0xff] %vm1060, %v971
      %1099 = vst.msk [vmem:[#allocation3 + $0xce] sm:$0x3] %vm1062, %v973
      %1100 = vst.msk [vmem:[#allocation3 + $0xce] sm:$0xfc] %vm1058, %v975
      %1101 = vst.msk [vmem:[#allocation3 + $0xd6] sm:$0xff] %vm1060, %v977
      %1102 = vst.msk [vmem:[#allocation3 + $0xde] sm:$0x3] %vm1062, %v979
      %1103 = vst.msk [vmem:[#allocation3 + $0xde] sm:$0xfc] %vm1058, %v981
      %1104 = vst.msk [vmem:[#allocation3 + $0xe6] sm:$0xff] %vm1060, %v983
      %1105 = vst.msk [vmem:[#allocation3 + $0xee] sm:$0x3] %vm1062, %v985
      %1106 = vst.msk [vmem:[#allocation3 + $0xee] sm:$0xfc] %vm1058, %v987
      %1107 = vst.msk [vmem:[#allocation3 + $0xf6] sm:$0xff] %vm1060, %v989
      %1108 = vst.msk [vmem:[#allocation3 + $0xfe] sm:$0x3] %vm1062, %v991
      %1109 = vst.msk [vmem:[#allocation3 + $0xfe] sm:$0xfc] %vm1058, %v993
      %1110 = vst.msk [vmem:[#allocation3 + $0x106] sm:$0xff] %vm1060, %v995
      %1111 = vst.msk [vmem:[#allocation3 + $0x10e] sm:$0x3] %vm1062, %v997
      %1112 = vst.msk [vmem:[#allocation3 + $0x10e] sm:$0xfc] %vm1058, %v999
      %1113 = vst.msk [vmem:[#allocation3 + $0x116] sm:$0xff] %vm1060, %v1001
      %1114 = vst.msk [vmem:[#allocation3 + $0x11e] sm:$0x3] %vm1062, %v1003
      %v1115 = vld [vmem:[#allocation3] sm:$0xff]
      %v1116 = vld [vmem:[#allocation3 + $0x8] sm:$0xff]
      %v1117 = vld [vmem:[#allocation3 + $0x10] sm:$0xff]
      %v1118 = vld [vmem:[#allocation3 + $0x18] sm:$0xff]
      %v1119 = vld [vmem:[#allocation3 + $0x20] sm:$0xff]
      %v1120 = vld [vmem:[#allocation3 + $0x28] sm:$0xff]
      %v1121 = vld [vmem:[#allocation3 + $0x30] sm:$0xff]
      %v1122 = vld [vmem:[#allocation3 + $0x38] sm:$0xff]
      %v1123 = vld [vmem:[#allocation3 + $0x40] sm:$0xff]
      %v1124 = vld [vmem:[#allocation3 + $0x48] sm:$0xff]
      %v1125 = vld [vmem:[#allocation3 + $0x50] sm:$0xff]
      %v1126 = vld [vmem:[#allocation3 + $0x58] sm:$0xff]
      %v1127 = vld [vmem:[#allocation3 + $0x60] sm:$0xff]
      %v1128 = vld [vmem:[#allocation3 + $0x68] sm:$0xff]
      %v1129 = vld [vmem:[#allocation3 + $0x70] sm:$0xff]
      %v1130 = vld [vmem:[#allocation3 + $0x78] sm:$0xff]
      %v1131 = vld [vmem:[#allocation3 + $0x80] sm:$0xff]
      %v1132 = vld [vmem:[#allocation3 + $0x88] sm:$0xff]
      %v1133 = vld [vmem:[#allocation3 + $0x90] sm:$0xff]
      %v1134 = vld [vmem:[#allocation3 + $0x98] sm:$0xff]
      %v1135 = vld [vmem:[#allocation3 + $0xa0] sm:$0xff]
      %v1136 = vld [vmem:[#allocation3 + $0xa8] sm:$0xff]
      %v1137 = vld [vmem:[#allocation3 + $0xb0] sm:$0xff]
      %v1138 = vld [vmem:[#allocation3 + $0xb8] sm:$0xff]
      %v1139 = vld [vmem:[#allocation3 + $0xc0] sm:$0xff]
      %v1140 = vld [vmem:[#allocation3 + $0xc8] sm:$0xff]
      %v1141 = vld [vmem:[#allocation3 + $0xd0] sm:$0xff]
      %v1142 = vld [vmem:[#allocation3 + $0xd8] sm:$0xff]
      %v1143 = vld [vmem:[#allocation3 + $0xe0] sm:$0xff]
      %v1144 = vld [vmem:[#allocation3 + $0xe8] sm:$0xff]
      %v1145 = vld [vmem:[#allocation3 + $0xf0] sm:$0xff]
      %v1146 = vld [vmem:[#allocation3 + $0xf8] sm:$0xff]
      %v1147 = vpack.c.bf16 %v1116, %v1115
      %v1148 = vpack.c.bf16 %v1118, %v1117
      %v1149 = vpack.c.bf16 %v1120, %v1119
      %v1150 = vpack.c.bf16 %v1122, %v1121
      %v1151 = vpack.c.bf16 %v1124, %v1123
      %v1152 = vpack.c.bf16 %v1126, %v1125
      %v1153 = vpack.c.bf16 %v1128, %v1127
      %v1154 = vpack.c.bf16 %v1130, %v1129
      %v1155 = vpack.c.bf16 %v1132, %v1131
      %v1156 = vpack.c.bf16 %v1134, %v1133
      %v1157 = vpack.c.bf16 %v1136, %v1135
      %v1158 = vpack.c.bf16 %v1138, %v1137
      %v1159 = vpack.c.bf16 %v1140, %v1139
      %v1160 = vpack.c.bf16 %v1142, %v1141
      %v1161 = vpack.c.bf16 %v1144, %v1143
      %v1162 = vpack.c.bf16 %v1146, %v1145
      %v1163 = vld [vmem:[%s3] sm:$0xf]
      %v1164 = vld [vmem:[%s3 + $0x4] sm:$0x3]
      %s1165 = scalar_lea.vmem [#allocation3], 16
      %v1166 = vld [vmem:[%s1165] sm:$0xff]
      %v1167 = vld [vmem:[%s1165 + $0x8] sm:$0xff]
      %v1168 = vld [vmem:[%s1165 + $0x10] sm:$0xff]
      %v1169 = vld [vmem:[%s1165 + $0x18] sm:$0xff]
      %v1170 = vld [vmem:[%s1165 + $0x20] sm:$0xff]
      %v1171 = vld [vmem:[%s1165 + $0x28] sm:$0xff]
      %v1172 = vld [vmem:[%s1165 + $0x30] sm:$0xff]
      %v1173 = vld [vmem:[%s1165 + $0x38] sm:$0xff]
      %v1174 = vld [vmem:[%s1165 + $0x40] sm:$0xff]
      %v1175 = vld [vmem:[%s1165 + $0x48] sm:$0xff]
      %v1176 = vld [vmem:[%s1165 + $0x50] sm:$0xff]
      %v1177 = vld [vmem:[%s1165 + $0x58] sm:$0xff]
      %v1178 = vld [vmem:[%s1165 + $0x60] sm:$0xff]
      %v1179 = vld [vmem:[%s1165 + $0x68] sm:$0xff]
      %v1180 = vld [vmem:[%s1165 + $0x70] sm:$0xff]
      %v1181 = vld [vmem:[%s1165 + $0x78] sm:$0xff]
      %v1182 = vld [vmem:[%s1165 + $0x80] sm:$0xff]
      %v1183 = vld [vmem:[%s1165 + $0x88] sm:$0xff]
      %v1184 = vld [vmem:[%s1165 + $0x90] sm:$0xff]
      %v1185 = vld [vmem:[%s1165 + $0x98] sm:$0xff]
      %v1186 = vld [vmem:[%s1165 + $0xa0] sm:$0xff]
      %v1187 = vld [vmem:[%s1165 + $0xa8] sm:$0xff]
      %v1188 = vld [vmem:[%s1165 + $0xb0] sm:$0xff]
      %v1189 = vld [vmem:[%s1165 + $0xb8] sm:$0xff]
      %v1190 = vld [vmem:[%s1165 + $0xc0] sm:$0xff]
      %v1191 = vld [vmem:[%s1165 + $0xc8] sm:$0xff]
      %v1192 = vld [vmem:[%s1165 + $0xd0] sm:$0xff]
      %v1193 = vld [vmem:[%s1165 + $0xd8] sm:$0xff]
      %v1194 = vld [vmem:[%s1165 + $0xe0] sm:$0xff]
      %v1195 = vld [vmem:[%s1165 + $0xe8] sm:$0xff]
      %v1196 = vld [vmem:[%s1165 + $0xf0] sm:$0xff]
      %v1197 = vld [vmem:[%s1165 + $0xf8] sm:$0xff]
      %v1198 = vpack.c.bf16 %v1167, %v1166
      %v1199 = vpack.c.bf16 %v1169, %v1168
      %v1200 = vpack.c.bf16 %v1171, %v1170
      %v1201 = vpack.c.bf16 %v1173, %v1172
      %v1202 = vpack.c.bf16 %v1175, %v1174
      %v1203 = vpack.c.bf16 %v1177, %v1176
      %v1204 = vpack.c.bf16 %v1179, %v1178
      %v1205 = vpack.c.bf16 %v1181, %v1180
      %v1206 = vpack.c.bf16 %v1183, %v1182
      %v1207 = vpack.c.bf16 %v1185, %v1184
      %v1208 = vpack.c.bf16 %v1187, %v1186
      %v1209 = vpack.c.bf16 %v1189, %v1188
      %v1210 = vpack.c.bf16 %v1191, %v1190
      %v1211 = vpack.c.bf16 %v1193, %v1192
      %v1212 = vpack.c.bf16 %v1195, %v1194
      %v1213 = vpack.c.bf16 %v1197, %v1196
      %s1214 = scalar_lea.vmem %s3, 8
      %v1215 = vld [vmem:[%s1214] sm:$0xf]
      %v1216 = vld [vmem:[%s1214 + $0x4] sm:$0x3]
      %v1219 = vunpack.c.l.b16 %v1215
      %v1220 = vunpack.c.l.b16 %v1216
      %v1221 = vpack.c.b16 %v1220, %v1219
      %vm1222 = vcmask 97280
      %v1224 = vsel %vm1222, %v1198, 0
      %v1227 = vsel %vm1222, %v1199, 0
      %v1230 = vsel %vm1222, %v1200, 0
      %v1233 = vsel %vm1222, %v1201, 0
      %v1236 = vsel %vm1222, %v1202, 0
      %v1239 = vsel %vm1222, %v1203, 0
      %v1242 = vsel %vm1222, %v1204, 0
      %v1245 = vsel %vm1222, %v1205, 0
      %v1248 = vsel %vm1222, %v1206, 0
      %v1251 = vsel %vm1222, %v1207, 0
      %v1254 = vsel %vm1222, %v1208, 0
      %v1257 = vsel %vm1222, %v1209, 0
      %v1260 = vsel %vm1222, %v1210, 0
      %v1263 = vsel %vm1222, %v1211, 0
      %v1266 = vsel %vm1222, %v1212, 0
      %v1269 = vsel %vm1222, %v1213, 0
      %vm1271 = vcmask 1045504
      %v1273 = vsel %vm1271, %v1221, 0
      %1275 = vmatprep.subr.bf16.mxu0 0
      %1276 = vmatpush1.bf16.msra.mxu0 0
      %1277 = vmatprep.subr.bf16.mxu0 0
      %1278 = vmatpush1.bf16.msra.mxu0 0
      %1279 = vmatprep.subr.bf16.mxu0 0
      %1280 = vmatpush1.bf16.msra.mxu0 0
      %1281 = vmatprep.subr.bf16.mxu0 0
      %1282 = vmatpush1.bf16.msra.mxu0 0
      %1283 = vmatprep.subr.bf16.mxu0 0
      %1284 = vmatpush1.bf16.msra.mxu0 0
      %1285 = vmatprep.subr.bf16.mxu0 0
      %1286 = vmatpush1.bf16.msra.mxu0 0
      %1287 = vmatprep.subr.bf16.mxu0 0
      %1288 = vmatpush1.bf16.msra.mxu0 0
      %1289 = vmatprep.subr.bf16.mxu0 0
      %1290 = vmatpush1.bf16.msra.mxu0 %v1273
      %1291 = vmatprep.subr.bf16.mxu0 0
      %1292 = vmatpush2.bf16.msra.mxu0 0
      %1293 = vmatprep.subr.bf16.mxu0 0
      %1294 = vmatpush2.bf16.msra.mxu0 0
      %1295 = vmatprep.subr.bf16.mxu0 0
      %1296 = vmatpush2.bf16.msra.mxu0 0
      %1297 = vmatprep.subr.bf16.mxu0 0
      %1298 = vmatpush2.bf16.msra.mxu0 0
      %1299 = vmatprep.subr.bf16.mxu0 0
      %1300 = vmatpush2.bf16.msra.mxu0 0
      %1301 = vmatprep.subr.bf16.mxu0 0
      %1302 = vmatpush2.bf16.msra.mxu0 0
      %1303 = vmatprep.subr.bf16.mxu0 0
      %1304 = vmatpush2.bf16.msra.mxu0 0
      %1305 = vmatprep.subr.bf16.mxu0 0
      %1306 = vmatpush2.bf16.msra.mxu0 0
      %1307 = vmatprep.mubr.bf16.mxu0 0
      %1308 = vmatmul.mubr.bf16.gmra.mxu0 %v1224
      %v1309 = vpop.f32.mrf.mxu0
      %v1310 = vadd.f32 0.0, %v1309
      %v1311 = vpop.f32.mrf.mxu0
      %v1312 = vpop.f32.mrf.mxu0
      %v1313 = vadd.f32 0.0, %v1312
      %v1314 = vpop.f32.mrf.mxu0
      %1315 = vmatprep.mubr.bf16.mxu0 0
      %1316 = vmatmul.mubr.bf16.gmra.mxu0 %v1227
      %v1317 = vpop.f32.mrf.mxu0
      %v1318 = vadd.f32 0.0, %v1317
      %v1319 = vpop.f32.mrf.mxu0
      %v1320 = vpop.f32.mrf.mxu0
      %v1321 = vadd.f32 0.0, %v1320
      %v1322 = vpop.f32.mrf.mxu0
      %1323 = vmatprep.mubr.bf16.mxu0 0
      %1324 = vmatmul.mubr.bf16.gmra.mxu0 %v1230
      %v1325 = vpop.f32.mrf.mxu0
      %v1326 = vadd.f32 0.0, %v1325
      %v1327 = vpop.f32.mrf.mxu0
      %v1328 = vpop.f32.mrf.mxu0
      %v1329 = vadd.f32 0.0, %v1328
      %v1330 = vpop.f32.mrf.mxu0
      %1331 = vmatprep.mubr.bf16.mxu0 0
      %1332 = vmatmul.mubr.bf16.gmra.mxu0 %v1233
      %v1333 = vpop.f32.mrf.mxu0
      %v1334 = vadd.f32 0.0, %v1333
      %v1335 = vpop.f32.mrf.mxu0
      %v1336 = vpop.f32.mrf.mxu0
      %v1337 = vadd.f32 0.0, %v1336
      %v1338 = vpop.f32.mrf.mxu0
      %1339 = vmatprep.mubr.bf16.mxu0 0
      %1340 = vmatmul.mubr.bf16.gmra.mxu0 %v1236
      %v1341 = vpop.f32.mrf.mxu0
      %v1342 = vadd.f32 0.0, %v1341
      %v1343 = vpop.f32.mrf.mxu0
      %v1344 = vpop.f32.mrf.mxu0
      %v1345 = vadd.f32 0.0, %v1344
      %v1346 = vpop.f32.mrf.mxu0
      %1347 = vmatprep.mubr.bf16.mxu0 0
      %1348 = vmatmul.mubr.bf16.gmra.mxu0 %v1239
      %v1349 = vpop.f32.mrf.mxu0
      %v1350 = vadd.f32 0.0, %v1349
      %v1351 = vpop.f32.mrf.mxu0
      %v1352 = vpop.f32.mrf.mxu0
      %v1353 = vadd.f32 0.0, %v1352
      %v1354 = vpop.f32.mrf.mxu0
      %1355 = vmatprep.mubr.bf16.mxu0 0
      %1356 = vmatmul.mubr.bf16.gmra.mxu0 %v1242
      %v1357 = vpop.f32.mrf.mxu0
      %v1358 = vadd.f32 0.0, %v1357
      %v1359 = vpop.f32.mrf.mxu0
      %v1360 = vpop.f32.mrf.mxu0
      %v1361 = vadd.f32 0.0, %v1360
      %v1362 = vpop.f32.mrf.mxu0
      %1363 = vmatprep.mubr.bf16.mxu0 0
      %1364 = vmatmul.mubr.bf16.gmra.mxu0 %v1245
      %v1365 = vpop.f32.mrf.mxu0
      %v1366 = vadd.f32 0.0, %v1365
      %v1367 = vpop.f32.mrf.mxu0
      %v1368 = vpop.f32.mrf.mxu0
      %v1369 = vadd.f32 0.0, %v1368
      %v1370 = vpop.f32.mrf.mxu0
      %1371 = vmatprep.mubr.bf16.mxu0 0
      %1372 = vmatmul.mubr.bf16.gmra.mxu0 %v1248
      %v1373 = vpop.f32.mrf.mxu0
      %v1374 = vadd.f32 0.0, %v1373
      %v1375 = vpop.f32.mrf.mxu0
      %v1376 = vpop.f32.mrf.mxu0
      %v1377 = vadd.f32 0.0, %v1376
      %v1378 = vpop.f32.mrf.mxu0
      %1379 = vmatprep.mubr.bf16.mxu0 0
      %1380 = vmatmul.mubr.bf16.gmra.mxu0 %v1251
      %v1381 = vpop.f32.mrf.mxu0
      %v1382 = vadd.f32 0.0, %v1381
      %v1383 = vpop.f32.mrf.mxu0
      %v1384 = vpop.f32.mrf.mxu0
      %v1385 = vadd.f32 0.0, %v1384
      %v1386 = vpop.f32.mrf.mxu0
      %1387 = vmatprep.mubr.bf16.mxu0 0
      %1388 = vmatmul.mubr.bf16.gmra.mxu0 %v1254
      %v1389 = vpop.f32.mrf.mxu0
      %v1390 = vadd.f32 0.0, %v1389
      %v1391 = vpop.f32.mrf.mxu0
      %v1392 = vpop.f32.mrf.mxu0
      %v1393 = vadd.f32 0.0, %v1392
      %v1394 = vpop.f32.mrf.mxu0
      %1395 = vmatprep.mubr.bf16.mxu0 0
      %1396 = vmatmul.mubr.bf16.gmra.mxu0 %v1257
      %v1397 = vpop.f32.mrf.mxu0
      %v1398 = vadd.f32 0.0, %v1397
      %v1399 = vpop.f32.mrf.mxu0
      %v1400 = vpop.f32.mrf.mxu0
      %v1401 = vadd.f32 0.0, %v1400
      %v1402 = vpop.f32.mrf.mxu0
      %1403 = vmatprep.mubr.bf16.mxu0 0
      %1404 = vmatmul.mubr.bf16.gmra.mxu0 %v1260
      %v1405 = vpop.f32.mrf.mxu0
      %v1406 = vadd.f32 0.0, %v1405
      %v1407 = vpop.f32.mrf.mxu0
      %v1408 = vpop.f32.mrf.mxu0
      %v1409 = vadd.f32 0.0, %v1408
      %v1410 = vpop.f32.mrf.mxu0
      %1411 = vmatprep.mubr.bf16.mxu0 0
      %1412 = vmatmul.mubr.bf16.gmra.mxu0 %v1263
      %v1413 = vpop.f32.mrf.mxu0
      %v1414 = vadd.f32 0.0, %v1413
      %v1415 = vpop.f32.mrf.mxu0
      %v1416 = vpop.f32.mrf.mxu0
      %v1417 = vadd.f32 0.0, %v1416
      %v1418 = vpop.f32.mrf.mxu0
      %1419 = vmatprep.mubr.bf16.mxu0 0
      %1420 = vmatmul.mubr.bf16.gmra.mxu0 %v1266
      %v1421 = vpop.f32.mrf.mxu0
      %v1422 = vadd.f32 0.0, %v1421
      %v1423 = vpop.f32.mrf.mxu0
      %v1424 = vpop.f32.mrf.mxu0
      %v1425 = vadd.f32 0.0, %v1424
      %v1426 = vpop.f32.mrf.mxu0
      %1427 = vmatprep.mubr.bf16.mxu0 0
      %1428 = vmatmul.mubr.bf16.gmra.mxu0 %v1269
      %v1429 = vpop.f32.mrf.mxu0
      %v1430 = vadd.f32 0.0, %v1429
      %v1431 = vpop.f32.mrf.mxu0
      %v1432 = vpop.f32.mrf.mxu0
      %v1433 = vadd.f32 0.0, %v1432
      %v1434 = vpop.f32.mrf.mxu0
      %1435 = vdwg.mxu0
      %v1438 = vunpack.c.l.b16 %v1163
      %v1439 = vunpack.c.l.b16 %v1164
      %v1440 = vpack.c.b16 %v1439, %v1438
      %v1442 = vsel %vm1222, %v1147, 0
      %v1445 = vsel %vm1222, %v1148, 0
      %v1448 = vsel %vm1222, %v1149, 0
      %v1451 = vsel %vm1222, %v1150, 0
      %v1454 = vsel %vm1222, %v1151, 0
      %v1457 = vsel %vm1222, %v1152, 0
      %v1460 = vsel %vm1222, %v1153, 0
      %v1463 = vsel %vm1222, %v1154, 0
      %v1466 = vsel %vm1222, %v1155, 0
      %v1469 = vsel %vm1222, %v1156, 0
      %v1472 = vsel %vm1222, %v1157, 0
      %v1475 = vsel %vm1222, %v1158, 0
      %v1478 = vsel %vm1222, %v1159, 0
      %v1481 = vsel %vm1222, %v1160, 0
      %v1484 = vsel %vm1222, %v1161, 0
      %v1487 = vsel %vm1222, %v1162, 0
      %v1490 = vsel %vm1271, %v1440, 0
      %1492 = vmatprep.subr.bf16.mxu0 0
      %1493 = vmatpush1.bf16.msra.mxu0 0
      %1494 = vmatprep.subr.bf16.mxu0 0
      %1495 = vmatpush1.bf16.msra.mxu0 0
      %1496 = vmatprep.subr.bf16.mxu0 0
      %1497 = vmatpush1.bf16.msra.mxu0 0
      %1498 = vmatprep.subr.bf16.mxu0 0
      %1499 = vmatpush1.bf16.msra.mxu0 0
      %1500 = vmatprep.subr.bf16.mxu0 0
      %1501 = vmatpush1.bf16.msra.mxu0 0
      %1502 = vmatprep.subr.bf16.mxu0 0
      %1503 = vmatpush1.bf16.msra.mxu0 0
      %1504 = vmatprep.subr.bf16.mxu0 0
      %1505 = vmatpush1.bf16.msra.mxu0 0
      %1506 = vmatprep.subr.bf16.mxu0 0
      %1507 = vmatpush1.bf16.msra.mxu0 %v1490
      %1508 = vmatprep.subr.bf16.mxu0 0
      %1509 = vmatpush2.bf16.msra.mxu0 0
      %1510 = vmatprep.subr.bf16.mxu0 0
      %1511 = vmatpush2.bf16.msra.mxu0 0
      %1512 = vmatprep.subr.bf16.mxu0 0
      %1513 = vmatpush2.bf16.msra.mxu0 0
      %1514 = vmatprep.subr.bf16.mxu0 0
      %1515 = vmatpush2.bf16.msra.mxu0 0
      %1516 = vmatprep.subr.bf16.mxu0 0
      %1517 = vmatpush2.bf16.msra.mxu0 0
      %1518 = vmatprep.subr.bf16.mxu0 0
      %1519 = vmatpush2.bf16.msra.mxu0 0
      %1520 = vmatprep.subr.bf16.mxu0 0
      %1521 = vmatpush2.bf16.msra.mxu0 0
      %1522 = vmatprep.subr.bf16.mxu0 0
      %1523 = vmatpush2.bf16.msra.mxu0 0
      %1524 = vmatprep.mubr.bf16.mxu0 0
      %1525 = vmatmul.mubr.bf16.gmra.mxu0 %v1442
      %v1526 = vpop.f32.mrf.mxu0
      %v1527 = vadd.f32 %v1310, %v1526
      %v1528 = vpop.f32.mrf.mxu0
      %v1529 = vpop.f32.mrf.mxu0
      %v1530 = vadd.f32 %v1313, %v1529
      %v1531 = vpop.f32.mrf.mxu0
      %1532 = vmatprep.mubr.bf16.mxu0 0
      %1533 = vmatmul.mubr.bf16.gmra.mxu0 %v1445
      %v1534 = vpop.f32.mrf.mxu0
      %v1535 = vadd.f32 %v1318, %v1534
      %v1536 = vpop.f32.mrf.mxu0
      %v1537 = vpop.f32.mrf.mxu0
      %v1538 = vadd.f32 %v1321, %v1537
      %v1539 = vpop.f32.mrf.mxu0
      %1540 = vmatprep.mubr.bf16.mxu0 0
      %1541 = vmatmul.mubr.bf16.gmra.mxu0 %v1448
      %v1542 = vpop.f32.mrf.mxu0
      %v1543 = vadd.f32 %v1326, %v1542
      %v1544 = vpop.f32.mrf.mxu0
      %v1545 = vpop.f32.mrf.mxu0
      %v1546 = vadd.f32 %v1329, %v1545
      %v1547 = vpop.f32.mrf.mxu0
      %1548 = vmatprep.mubr.bf16.mxu0 0
      %1549 = vmatmul.mubr.bf16.gmra.mxu0 %v1451
      %v1550 = vpop.f32.mrf.mxu0
      %v1551 = vadd.f32 %v1334, %v1550
      %v1552 = vpop.f32.mrf.mxu0
      %v1553 = vpop.f32.mrf.mxu0
      %v1554 = vadd.f32 %v1337, %v1553
      %v1555 = vpop.f32.mrf.mxu0
      %1556 = vmatprep.mubr.bf16.mxu0 0
      %1557 = vmatmul.mubr.bf16.gmra.mxu0 %v1454
      %v1558 = vpop.f32.mrf.mxu0
      %v1559 = vadd.f32 %v1342, %v1558
      %v1560 = vpop.f32.mrf.mxu0
      %v1561 = vpop.f32.mrf.mxu0
      %v1562 = vadd.f32 %v1345, %v1561
      %v1563 = vpop.f32.mrf.mxu0
      %1564 = vmatprep.mubr.bf16.mxu0 0
      %1565 = vmatmul.mubr.bf16.gmra.mxu0 %v1457
      %v1566 = vpop.f32.mrf.mxu0
      %v1567 = vadd.f32 %v1350, %v1566
      %v1568 = vpop.f32.mrf.mxu0
      %v1569 = vpop.f32.mrf.mxu0
      %v1570 = vadd.f32 %v1353, %v1569
      %v1571 = vpop.f32.mrf.mxu0
      %1572 = vmatprep.mubr.bf16.mxu0 0
      %1573 = vmatmul.mubr.bf16.gmra.mxu0 %v1460
      %v1574 = vpop.f32.mrf.mxu0
      %v1575 = vadd.f32 %v1358, %v1574
      %v1576 = vpop.f32.mrf.mxu0
      %v1577 = vpop.f32.mrf.mxu0
      %v1578 = vadd.f32 %v1361, %v1577
      %v1579 = vpop.f32.mrf.mxu0
      %1580 = vmatprep.mubr.bf16.mxu0 0
      %1581 = vmatmul.mubr.bf16.gmra.mxu0 %v1463
      %v1582 = vpop.f32.mrf.mxu0
      %v1583 = vadd.f32 %v1366, %v1582
      %v1584 = vpop.f32.mrf.mxu0
      %v1585 = vpop.f32.mrf.mxu0
      %v1586 = vadd.f32 %v1369, %v1585
      %v1587 = vpop.f32.mrf.mxu0
      %1588 = vmatprep.mubr.bf16.mxu0 0
      %1589 = vmatmul.mubr.bf16.gmra.mxu0 %v1466
      %v1590 = vpop.f32.mrf.mxu0
      %v1591 = vadd.f32 %v1374, %v1590
      %v1592 = vpop.f32.mrf.mxu0
      %v1593 = vpop.f32.mrf.mxu0
      %v1594 = vadd.f32 %v1377, %v1593
      %v1595 = vpop.f32.mrf.mxu0
      %1596 = vmatprep.mubr.bf16.mxu0 0
      %1597 = vmatmul.mubr.bf16.gmra.mxu0 %v1469
      %v1598 = vpop.f32.mrf.mxu0
      %v1599 = vadd.f32 %v1382, %v1598
      %v1600 = vpop.f32.mrf.mxu0
      %v1601 = vpop.f32.mrf.mxu0
      %v1602 = vadd.f32 %v1385, %v1601
      %v1603 = vpop.f32.mrf.mxu0
      %1604 = vmatprep.mubr.bf16.mxu0 0
      %1605 = vmatmul.mubr.bf16.gmra.mxu0 %v1472
      %v1606 = vpop.f32.mrf.mxu0
      %v1607 = vadd.f32 %v1390, %v1606
      %v1608 = vpop.f32.mrf.mxu0
      %v1609 = vpop.f32.mrf.mxu0
      %v1610 = vadd.f32 %v1393, %v1609
      %v1611 = vpop.f32.mrf.mxu0
      %1612 = vmatprep.mubr.bf16.mxu0 0
      %1613 = vmatmul.mubr.bf16.gmra.mxu0 %v1475
      %v1614 = vpop.f32.mrf.mxu0
      %v1615 = vadd.f32 %v1398, %v1614
      %v1616 = vpop.f32.mrf.mxu0
      %v1617 = vpop.f32.mrf.mxu0
      %v1618 = vadd.f32 %v1401, %v1617
      %v1619 = vpop.f32.mrf.mxu0
      %1620 = vmatprep.mubr.bf16.mxu0 0
      %1621 = vmatmul.mubr.bf16.gmra.mxu0 %v1478
      %v1622 = vpop.f32.mrf.mxu0
      %v1623 = vadd.f32 %v1406, %v1622
      %v1624 = vpop.f32.mrf.mxu0
      %v1625 = vpop.f32.mrf.mxu0
      %v1626 = vadd.f32 %v1409, %v1625
      %v1627 = vpop.f32.mrf.mxu0
      %1628 = vmatprep.mubr.bf16.mxu0 0
      %1629 = vmatmul.mubr.bf16.gmra.mxu0 %v1481
      %v1630 = vpop.f32.mrf.mxu0
      %v1631 = vadd.f32 %v1414, %v1630
      %v1632 = vpop.f32.mrf.mxu0
      %v1633 = vpop.f32.mrf.mxu0
      %v1634 = vadd.f32 %v1417, %v1633
      %v1635 = vpop.f32.mrf.mxu0
      %1636 = vmatprep.mubr.bf16.mxu0 0
      %1637 = vmatmul.mubr.bf16.gmra.mxu0 %v1484
      %v1638 = vpop.f32.mrf.mxu0
      %v1639 = vadd.f32 %v1422, %v1638
      %v1640 = vpop.f32.mrf.mxu0
      %v1641 = vpop.f32.mrf.mxu0
      %v1642 = vadd.f32 %v1425, %v1641
      %v1643 = vpop.f32.mrf.mxu0
      %1644 = vmatprep.mubr.bf16.mxu0 0
      %1645 = vmatmul.mubr.bf16.gmra.mxu0 %v1487
      %v1646 = vpop.f32.mrf.mxu0
      %v1647 = vadd.f32 %v1430, %v1646
      %v1648 = vpop.f32.mrf.mxu0
      %v1649 = vpop.f32.mrf.mxu0
      %v1650 = vadd.f32 %v1433, %v1649
      %v1651 = vpop.f32.mrf.mxu0
      %1652 = vdwg.mxu0
      %s1653 = scalar_lea.vmem [#allocation3], 32
      %v1654 = vld [vmem:[%s1653] sm:$0xff]
      %v1655 = vld [vmem:[%s1653 + $0x8] sm:$0xff]
      %v1656 = vld [vmem:[%s1653 + $0x10] sm:$0xff]
      %v1657 = vld [vmem:[%s1653 + $0x18] sm:$0xff]
      %v1658 = vld [vmem:[%s1653 + $0x20] sm:$0xff]
      %v1659 = vld [vmem:[%s1653 + $0x28] sm:$0xff]
      %v1660 = vld [vmem:[%s1653 + $0x30] sm:$0xff]
      %v1661 = vld [vmem:[%s1653 + $0x38] sm:$0xff]
      %v1662 = vld [vmem:[%s1653 + $0x40] sm:$0xff]
      %v1663 = vld [vmem:[%s1653 + $0x48] sm:$0xff]
      %v1664 = vld [vmem:[%s1653 + $0x50] sm:$0xff]
      %v1665 = vld [vmem:[%s1653 + $0x58] sm:$0xff]
      %v1666 = vld [vmem:[%s1653 + $0x60] sm:$0xff]
      %v1667 = vld [vmem:[%s1653 + $0x68] sm:$0xff]
      %v1668 = vld [vmem:[%s1653 + $0x70] sm:$0xff]
      %v1669 = vld [vmem:[%s1653 + $0x78] sm:$0xff]
      %v1670 = vld [vmem:[%s1653 + $0x80] sm:$0xff]
      %v1671 = vld [vmem:[%s1653 + $0x88] sm:$0xff]
      %v1672 = vld [vmem:[%s1653 + $0x90] sm:$0xff]
      %v1673 = vld [vmem:[%s1653 + $0x98] sm:$0xff]
      %v1674 = vld [vmem:[%s1653 + $0xa0] sm:$0xff]
      %v1675 = vld [vmem:[%s1653 + $0xa8] sm:$0xff]
      %v1676 = vld [vmem:[%s1653 + $0xb0] sm:$0xff]
      %v1677 = vld [vmem:[%s1653 + $0xb8] sm:$0xff]
      %v1678 = vld [vmem:[%s1653 + $0xc0] sm:$0xff]
      %v1679 = vld [vmem:[%s1653 + $0xc8] sm:$0xff]
      %v1680 = vld [vmem:[%s1653 + $0xd0] sm:$0xff]
      %v1681 = vld [vmem:[%s1653 + $0xd8] sm:$0xff]
      %v1682 = vld [vmem:[%s1653 + $0xe0] sm:$0xff]
      %v1683 = vld [vmem:[%s1653 + $0xe8] sm:$0xff]
      %v1684 = vld [vmem:[%s1653 + $0xf0] sm:$0xff]
      %v1685 = vld [vmem:[%s1653 + $0xf8] sm:$0xff]
      %v1686 = vpack.c.bf16 %v1655, %v1654
      %v1687 = vpack.c.bf16 %v1657, %v1656
      %v1688 = vpack.c.bf16 %v1659, %v1658
      %v1689 = vpack.c.bf16 %v1661, %v1660
      %v1690 = vpack.c.bf16 %v1663, %v1662
      %v1691 = vpack.c.bf16 %v1665, %v1664
      %v1692 = vpack.c.bf16 %v1667, %v1666
      %v1693 = vpack.c.bf16 %v1669, %v1668
      %v1694 = vpack.c.bf16 %v1671, %v1670
      %v1695 = vpack.c.bf16 %v1673, %v1672
      %v1696 = vpack.c.bf16 %v1675, %v1674
      %v1697 = vpack.c.bf16 %v1677, %v1676
      %v1698 = vpack.c.bf16 %v1679, %v1678
      %v1699 = vpack.c.bf16 %v1681, %v1680
      %v1700 = vpack.c.bf16 %v1683, %v1682
      %v1701 = vpack.c.bf16 %v1685, %v1684
      %s1702 = scalar_lea.vmem %s3, 16
      %v1703 = vld [vmem:[%s1702] sm:$0xf]
      %v1704 = vld [vmem:[%s1702 + $0x4] sm:$0x3]
      %v1707 = vunpack.c.l.b16 %v1703
      %v1708 = vunpack.c.l.b16 %v1704
      %v1709 = vpack.c.b16 %v1708, %v1707
      %v1711 = vsel %vm1222, %v1686, 0
      %v1714 = vsel %vm1222, %v1687, 0
      %v1717 = vsel %vm1222, %v1688, 0
      %v1720 = vsel %vm1222, %v1689, 0
      %v1723 = vsel %vm1222, %v1690, 0
      %v1726 = vsel %vm1222, %v1691, 0
      %v1729 = vsel %vm1222, %v1692, 0
      %v1732 = vsel %vm1222, %v1693, 0
      %v1735 = vsel %vm1222, %v1694, 0
      %v1738 = vsel %vm1222, %v1695, 0
      %v1741 = vsel %vm1222, %v1696, 0
      %v1744 = vsel %vm1222, %v1697, 0
      %v1747 = vsel %vm1222, %v1698, 0
      %v1750 = vsel %vm1222, %v1699, 0
      %v1753 = vsel %vm1222, %v1700, 0
      %v1756 = vsel %vm1222, %v1701, 0
      %v1759 = vsel %vm1271, %v1709, 0
      %1761 = vmatprep.subr.bf16.mxu0 0
      %1762 = vmatpush1.bf16.msra.mxu0 0
      %1763 = vmatprep.subr.bf16.mxu0 0
      %1764 = vmatpush1.bf16.msra.mxu0 0
      %1765 = vmatprep.subr.bf16.mxu0 0
      %1766 = vmatpush1.bf16.msra.mxu0 0
      %1767 = vmatprep.subr.bf16.mxu0 0
      %1768 = vmatpush1.bf16.msra.mxu0 0
      %1769 = vmatprep.subr.bf16.mxu0 0
      %1770 = vmatpush1.bf16.msra.mxu0 0
      %1771 = vmatprep.subr.bf16.mxu0 0
      %1772 = vmatpush1.bf16.msra.mxu0 0
      %1773 = vmatprep.subr.bf16.mxu0 0
      %1774 = vmatpush1.bf16.msra.mxu0 0
      %1775 = vmatprep.subr.bf16.mxu0 0
      %1776 = vmatpush1.bf16.msra.mxu0 %v1759
      %1777 = vmatprep.subr.bf16.mxu0 0
      %1778 = vmatpush2.bf16.msra.mxu0 0
      %1779 = vmatprep.subr.bf16.mxu0 0
      %1780 = vmatpush2.bf16.msra.mxu0 0
      %1781 = vmatprep.subr.bf16.mxu0 0
      %1782 = vmatpush2.bf16.msra.mxu0 0
      %1783 = vmatprep.subr.bf16.mxu0 0
      %1784 = vmatpush2.bf16.msra.mxu0 0
      %1785 = vmatprep.subr.bf16.mxu0 0
      %1786 = vmatpush2.bf16.msra.mxu0 0
      %1787 = vmatprep.subr.bf16.mxu0 0
      %1788 = vmatpush2.bf16.msra.mxu0 0
      %1789 = vmatprep.subr.bf16.mxu0 0
      %1790 = vmatpush2.bf16.msra.mxu0 0
      %1791 = vmatprep.subr.bf16.mxu0 0
      %1792 = vmatpush2.bf16.msra.mxu0 0
      %1793 = vmatprep.mubr.bf16.mxu0 0
      %1794 = vmatmul.mubr.bf16.gmra.mxu0 %v1711
      %v1795 = vpop.f32.mrf.mxu0
      %v1796 = vadd.f32 0.0, %v1795
      %v1797 = vpop.f32.mrf.mxu0
      %v1798 = vpop.f32.mrf.mxu0
      %v1799 = vadd.f32 0.0, %v1798
      %v1800 = vpop.f32.mrf.mxu0
      %1801 = vmatprep.mubr.bf16.mxu0 0
      %1802 = vmatmul.mubr.bf16.gmra.mxu0 %v1714
      %v1803 = vpop.f32.mrf.mxu0
      %v1804 = vadd.f32 0.0, %v1803
      %v1805 = vpop.f32.mrf.mxu0
      %v1806 = vpop.f32.mrf.mxu0
      %v1807 = vadd.f32 0.0, %v1806
      %v1808 = vpop.f32.mrf.mxu0
      %1809 = vmatprep.mubr.bf16.mxu0 0
      %1810 = vmatmul.mubr.bf16.gmra.mxu0 %v1717
      %v1811 = vpop.f32.mrf.mxu0
      %v1812 = vadd.f32 0.0, %v1811
      %v1813 = vpop.f32.mrf.mxu0
      %v1814 = vpop.f32.mrf.mxu0
      %v1815 = vadd.f32 0.0, %v1814
      %v1816 = vpop.f32.mrf.mxu0
      %1817 = vmatprep.mubr.bf16.mxu0 0
      %1818 = vmatmul.mubr.bf16.gmra.mxu0 %v1720
      %v1819 = vpop.f32.mrf.mxu0
      %v1820 = vadd.f32 0.0, %v1819
      %v1821 = vpop.f32.mrf.mxu0
      %v1822 = vpop.f32.mrf.mxu0
      %v1823 = vadd.f32 0.0, %v1822
      %v1824 = vpop.f32.mrf.mxu0
      %1825 = vmatprep.mubr.bf16.mxu0 0
      %1826 = vmatmul.mubr.bf16.gmra.mxu0 %v1723
      %v1827 = vpop.f32.mrf.mxu0
      %v1828 = vadd.f32 0.0, %v1827
      %v1829 = vpop.f32.mrf.mxu0
      %v1830 = vpop.f32.mrf.mxu0
      %v1831 = vadd.f32 0.0, %v1830
      %v1832 = vpop.f32.mrf.mxu0
      %1833 = vmatprep.mubr.bf16.mxu0 0
      %1834 = vmatmul.mubr.bf16.gmra.mxu0 %v1726
      %v1835 = vpop.f32.mrf.mxu0
      %v1836 = vadd.f32 0.0, %v1835
      %v1837 = vpop.f32.mrf.mxu0
      %v1838 = vpop.f32.mrf.mxu0
      %v1839 = vadd.f32 0.0, %v1838
      %v1840 = vpop.f32.mrf.mxu0
      %1841 = vmatprep.mubr.bf16.mxu0 0
      %1842 = vmatmul.mubr.bf16.gmra.mxu0 %v1729
      %v1843 = vpop.f32.mrf.mxu0
      %v1844 = vadd.f32 0.0, %v1843
      %v1845 = vpop.f32.mrf.mxu0
      %v1846 = vpop.f32.mrf.mxu0
      %v1847 = vadd.f32 0.0, %v1846
      %v1848 = vpop.f32.mrf.mxu0
      %1849 = vmatprep.mubr.bf16.mxu0 0
      %1850 = vmatmul.mubr.bf16.gmra.mxu0 %v1732
      %v1851 = vpop.f32.mrf.mxu0
      %v1852 = vadd.f32 0.0, %v1851
      %v1853 = vpop.f32.mrf.mxu0
      %v1854 = vpop.f32.mrf.mxu0
      %v1855 = vadd.f32 0.0, %v1854
      %v1856 = vpop.f32.mrf.mxu0
      %1857 = vmatprep.mubr.bf16.mxu0 0
      %1858 = vmatmul.mubr.bf16.gmra.mxu0 %v1735
      %v1859 = vpop.f32.mrf.mxu0
      %v1860 = vadd.f32 0.0, %v1859
      %v1861 = vpop.f32.mrf.mxu0
      %v1862 = vpop.f32.mrf.mxu0
      %v1863 = vadd.f32 0.0, %v1862
      %v1864 = vpop.f32.mrf.mxu0
      %1865 = vmatprep.mubr.bf16.mxu0 0
      %1866 = vmatmul.mubr.bf16.gmra.mxu0 %v1738
      %v1867 = vpop.f32.mrf.mxu0
      %v1868 = vadd.f32 0.0, %v1867
      %v1869 = vpop.f32.mrf.mxu0
      %v1870 = vpop.f32.mrf.mxu0
      %v1871 = vadd.f32 0.0, %v1870
      %v1872 = vpop.f32.mrf.mxu0
      %1873 = vmatprep.mubr.bf16.mxu0 0
      %1874 = vmatmul.mubr.bf16.gmra.mxu0 %v1741
      %v1875 = vpop.f32.mrf.mxu0
      %v1876 = vadd.f32 0.0, %v1875
      %v1877 = vpop.f32.mrf.mxu0
      %v1878 = vpop.f32.mrf.mxu0
      %v1879 = vadd.f32 0.0, %v1878
      %v1880 = vpop.f32.mrf.mxu0
      %1881 = vmatprep.mubr.bf16.mxu0 0
      %1882 = vmatmul.mubr.bf16.gmra.mxu0 %v1744
      %v1883 = vpop.f32.mrf.mxu0
      %v1884 = vadd.f32 0.0, %v1883
      %v1885 = vpop.f32.mrf.mxu0
      %v1886 = vpop.f32.mrf.mxu0
      %v1887 = vadd.f32 0.0, %v1886
      %v1888 = vpop.f32.mrf.mxu0
      %1889 = vmatprep.mubr.bf16.mxu0 0
      %1890 = vmatmul.mubr.bf16.gmra.mxu0 %v1747
      %v1891 = vpop.f32.mrf.mxu0
      %v1892 = vadd.f32 0.0, %v1891
      %v1893 = vpop.f32.mrf.mxu0
      %v1894 = vpop.f32.mrf.mxu0
      %v1895 = vadd.f32 0.0, %v1894
      %v1896 = vpop.f32.mrf.mxu0
      %1897 = vmatprep.mubr.bf16.mxu0 0
      %1898 = vmatmul.mubr.bf16.gmra.mxu0 %v1750
      %v1899 = vpop.f32.mrf.mxu0
      %v1900 = vadd.f32 0.0, %v1899
      %v1901 = vpop.f32.mrf.mxu0
      %v1902 = vpop.f32.mrf.mxu0
      %v1903 = vadd.f32 0.0, %v1902
      %v1904 = vpop.f32.mrf.mxu0
      %1905 = vmatprep.mubr.bf16.mxu0 0
      %1906 = vmatmul.mubr.bf16.gmra.mxu0 %v1753
      %v1907 = vpop.f32.mrf.mxu0
      %v1908 = vadd.f32 0.0, %v1907
      %v1909 = vpop.f32.mrf.mxu0
      %v1910 = vpop.f32.mrf.mxu0
      %v1911 = vadd.f32 0.0, %v1910
      %v1912 = vpop.f32.mrf.mxu0
      %1913 = vmatprep.mubr.bf16.mxu0 0
      %1914 = vmatmul.mubr.bf16.gmra.mxu0 %v1756
      %v1915 = vpop.f32.mrf.mxu0
      %v1916 = vadd.f32 0.0, %v1915
      %v1917 = vpop.f32.mrf.mxu0
      %v1918 = vpop.f32.mrf.mxu0
      %v1919 = vadd.f32 0.0, %v1918
      %v1920 = vpop.f32.mrf.mxu0
      %1921 = vdwg.mxu0
      %v1922 = vadd.f32 %v1527, %v1796
      %v1923 = vadd.f32 %v1530, %v1799
      %v1924 = vadd.f32 %v1535, %v1804
      %v1925 = vadd.f32 %v1538, %v1807
      %v1926 = vadd.f32 %v1543, %v1812
      %v1927 = vadd.f32 %v1546, %v1815
      %v1928 = vadd.f32 %v1551, %v1820
      %v1929 = vadd.f32 %v1554, %v1823
      %v1930 = vadd.f32 %v1559, %v1828
      %v1931 = vadd.f32 %v1562, %v1831
      %v1932 = vadd.f32 %v1567, %v1836
      %v1933 = vadd.f32 %v1570, %v1839
      %v1934 = vadd.f32 %v1575, %v1844
      %v1935 = vadd.f32 %v1578, %v1847
      %v1936 = vadd.f32 %v1583, %v1852
      %v1937 = vadd.f32 %v1586, %v1855
      %v1938 = vadd.f32 %v1591, %v1860
      %v1939 = vadd.f32 %v1594, %v1863
      %v1940 = vadd.f32 %v1599, %v1868
      %v1941 = vadd.f32 %v1602, %v1871
      %v1942 = vadd.f32 %v1607, %v1876
      %v1943 = vadd.f32 %v1610, %v1879
      %v1944 = vadd.f32 %v1615, %v1884
      %v1945 = vadd.f32 %v1618, %v1887
      %v1946 = vadd.f32 %v1623, %v1892
      %v1947 = vadd.f32 %v1626, %v1895
      %v1948 = vadd.f32 %v1631, %v1900
      %v1949 = vadd.f32 %v1634, %v1903
      %v1950 = vadd.f32 %v1639, %v1908
      %v1951 = vadd.f32 %v1642, %v1911
      %v1952 = vadd.f32 %v1647, %v1916
      %v1953 = vadd.f32 %v1650, %v1919
      %v1954 = vsel %vm444, %v1922, 0.0
      %v1955 = vsel %vm444, %v1923, 0.0
      %v1956 = vadd.f32 %v1954, %v1955
      %v1957 = vsel %vm444, %v1924, 0.0
      %v1958 = vadd.f32 %v1956, %v1957
      %v1959 = vsel %vm444, %v1925, 0.0
      %v1960 = vadd.f32 %v1958, %v1959
      %v1961 = vsel %vm444, %v1926, 0.0
      %v1962 = vadd.f32 %v1960, %v1961
      %v1963 = vsel %vm444, %v1927, 0.0
      %v1964 = vadd.f32 %v1962, %v1963
      %v1965 = vsel %vm444, %v1928, 0.0
      %v1966 = vadd.f32 %v1964, %v1965
      %v1967 = vsel %vm444, %v1929, 0.0
      %v1968 = vadd.f32 %v1966, %v1967
      %v1969 = vsel %vm444, %v1930, 0.0
      %v1970 = vadd.f32 %v1968, %v1969
      %v1971 = vsel %vm444, %v1931, 0.0
      %v1972 = vadd.f32 %v1970, %v1971
      %v1973 = vsel %vm444, %v1932, 0.0
      %v1974 = vadd.f32 %v1972, %v1973
      %v1975 = vsel %vm444, %v1933, 0.0
      %v1976 = vadd.f32 %v1974, %v1975
      %v1977 = vsel %vm444, %v1934, 0.0
      %v1978 = vadd.f32 %v1976, %v1977
      %v1979 = vsel %vm444, %v1935, 0.0
      %v1980 = vadd.f32 %v1978, %v1979
      %v1981 = vsel %vm444, %v1936, 0.0
      %v1982 = vadd.f32 %v1980, %v1981
      %v1983 = vsel %vm444, %v1937, 0.0
      %v1984 = vadd.f32 %v1982, %v1983
      %v1985 = vsel %vm444, %v1938, 0.0
      %v1986 = vadd.f32 %v1984, %v1985
      %v1987 = vsel %vm444, %v1939, 0.0
      %v1988 = vadd.f32 %v1986, %v1987
      %v1989 = vsel %vm444, %v1940, 0.0
      %v1990 = vadd.f32 %v1988, %v1989
      %v1991 = vsel %vm444, %v1941, 0.0
      %v1992 = vadd.f32 %v1990, %v1991
      %v1993 = vsel %vm444, %v1942, 0.0
      %v1994 = vadd.f32 %v1992, %v1993
      %v1995 = vsel %vm444, %v1943, 0.0
      %v1996 = vadd.f32 %v1994, %v1995
      %v1997 = vsel %vm444, %v1944, 0.0
      %v1998 = vadd.f32 %v1996, %v1997
      %v1999 = vsel %vm444, %v1945, 0.0
      %v2000 = vadd.f32 %v1998, %v1999
      %v2001 = vsel %vm444, %v1946, 0.0
      %v2002 = vadd.f32 %v2000, %v2001
      %v2003 = vsel %vm444, %v1947, 0.0
      %v2004 = vadd.f32 %v2002, %v2003
      %v2005 = vsel %vm444, %v1948, 0.0
      %v2006 = vadd.f32 %v2004, %v2005
      %v2007 = vsel %vm444, %v1949, 0.0
      %v2008 = vadd.f32 %v2006, %v2007
      %v2009 = vsel %vm444, %v1950, 0.0
      %v2010 = vadd.f32 %v2008, %v2009
      %v2011 = vsel %vm444, %v1951, 0.0
      %v2012 = vadd.f32 %v2010, %v2011
      %v2013 = vsel %vm444, %v1952, 0.0
      %v2014 = vadd.f32 %v2012, %v2013
      %v2015 = vsel %vm444, %v1953, 0.0
      %v2016 = vadd.f32 %v2014, %v2015
      %v2017 = vrot.slane %v2016, 4
      %v2018 = vadd.f32 %v2016, %v2017
      %v2019 = vrot.slane %v2018, 2
      %v2020 = vadd.f32 %v2018, %v2019
      %v2021 = vrot.slane %v2020, 1
      %v2022 = vadd.f32 %v2020, %v2021
      %vm2023 = vcmask 24576
      %2024 = vst.msk [vmem:[%s265] sm:$0x1] %vm2023, %v2022
      %v2025 = vmul.f32 %v1922, %v1922
      %v2026 = vmul.f32 %v1923, %v1923
      %v2027 = vmul.f32 %v1924, %v1924
      %v2028 = vmul.f32 %v1925, %v1925
      %v2029 = vmul.f32 %v1926, %v1926
      %v2030 = vmul.f32 %v1927, %v1927
      %v2031 = vmul.f32 %v1928, %v1928
      %v2032 = vmul.f32 %v1929, %v1929
      %v2033 = vmul.f32 %v1930, %v1930
      %v2034 = vmul.f32 %v1931, %v1931
      %v2035 = vmul.f32 %v1932, %v1932
      %v2036 = vmul.f32 %v1933, %v1933
      %v2037 = vmul.f32 %v1934, %v1934
      %v2038 = vmul.f32 %v1935, %v1935
      %v2039 = vmul.f32 %v1936, %v1936
      %v2040 = vmul.f32 %v1937, %v1937
      %v2041 = vmul.f32 %v1938, %v1938
      %v2042 = vmul.f32 %v1939, %v1939
      %v2043 = vmul.f32 %v1940, %v1940
      %v2044 = vmul.f32 %v1941, %v1941
      %v2045 = vmul.f32 %v1942, %v1942
      %v2046 = vmul.f32 %v1943, %v1943
      %v2047 = vmul.f32 %v1944, %v1944
      %v2048 = vmul.f32 %v1945, %v1945
      %v2049 = vmul.f32 %v1946, %v1946
      %v2050 = vmul.f32 %v1947, %v1947
      %v2051 = vmul.f32 %v1948, %v1948
      %v2052 = vmul.f32 %v1949, %v1949
      %v2053 = vmul.f32 %v1950, %v1950
      %v2054 = vmul.f32 %v1951, %v1951
      %v2055 = vmul.f32 %v1952, %v1952
      %v2056 = vmul.f32 %v1953, %v1953
      %v2057 = vsel %vm444, %v2025, 0.0
      %v2058 = vsel %vm444, %v2026, 0.0
      %v2059 = vadd.f32 %v2057, %v2058
      %v2060 = vsel %vm444, %v2027, 0.0
      %v2061 = vadd.f32 %v2059, %v2060
      %v2062 = vsel %vm444, %v2028, 0.0
      %v2063 = vadd.f32 %v2061, %v2062
      %v2064 = vsel %vm444, %v2029, 0.0
      %v2065 = vadd.f32 %v2063, %v2064
      %v2066 = vsel %vm444, %v2030, 0.0
      %v2067 = vadd.f32 %v2065, %v2066
      %v2068 = vsel %vm444, %v2031, 0.0
      %v2069 = vadd.f32 %v2067, %v2068
      %v2070 = vsel %vm444, %v2032, 0.0
      %v2071 = vadd.f32 %v2069, %v2070
      %v2072 = vsel %vm444, %v2033, 0.0
      %v2073 = vadd.f32 %v2071, %v2072
      %v2074 = vsel %vm444, %v2034, 0.0
      %v2075 = vadd.f32 %v2073, %v2074
      %v2076 = vsel %vm444, %v2035, 0.0
      %v2077 = vadd.f32 %v2075, %v2076
      %v2078 = vsel %vm444, %v2036, 0.0
      %v2079 = vadd.f32 %v2077, %v2078
      %v2080 = vsel %vm444, %v2037, 0.0
      %v2081 = vadd.f32 %v2079, %v2080
      %v2082 = vsel %vm444, %v2038, 0.0
      %v2083 = vadd.f32 %v2081, %v2082
      %v2084 = vsel %vm444, %v2039, 0.0
      %v2085 = vadd.f32 %v2083, %v2084
      %v2086 = vsel %vm444, %v2040, 0.0
      %v2087 = vadd.f32 %v2085, %v2086
      %v2088 = vsel %vm444, %v2041, 0.0
      %v2089 = vadd.f32 %v2087, %v2088
      %v2090 = vsel %vm444, %v2042, 0.0
      %v2091 = vadd.f32 %v2089, %v2090
      %v2092 = vsel %vm444, %v2043, 0.0
      %v2093 = vadd.f32 %v2091, %v2092
      %v2094 = vsel %vm444, %v2044, 0.0
      %v2095 = vadd.f32 %v2093, %v2094
      %v2096 = vsel %vm444, %v2045, 0.0
      %v2097 = vadd.f32 %v2095, %v2096
      %v2098 = vsel %vm444, %v2046, 0.0
      %v2099 = vadd.f32 %v2097, %v2098
      %v2100 = vsel %vm444, %v2047, 0.0
      %v2101 = vadd.f32 %v2099, %v2100
      %v2102 = vsel %vm444, %v2048, 0.0
      %v2103 = vadd.f32 %v2101, %v2102
      %v2104 = vsel %vm444, %v2049, 0.0
      %v2105 = vadd.f32 %v2103, %v2104
      %v2106 = vsel %vm444, %v2050, 0.0
      %v2107 = vadd.f32 %v2105, %v2106
      %v2108 = vsel %vm444, %v2051, 0.0
      %v2109 = vadd.f32 %v2107, %v2108
      %v2110 = vsel %vm444, %v2052, 0.0
      %v2111 = vadd.f32 %v2109, %v2110
      %v2112 = vsel %vm444, %v2053, 0.0
      %v2113 = vadd.f32 %v2111, %v2112
      %v2114 = vsel %vm444, %v2054, 0.0
      %v2115 = vadd.f32 %v2113, %v2114
      %v2116 = vsel %vm444, %v2055, 0.0
      %v2117 = vadd.f32 %v2115, %v2116
      %v2118 = vsel %vm444, %v2056, 0.0
      %v2119 = vadd.f32 %v2117, %v2118
      %v2120 = vrot.slane %v2119, 4
      %v2121 = vadd.f32 %v2119, %v2120
      %v2122 = vrot.slane %v2121, 2
      %v2123 = vadd.f32 %v2121, %v2122
      %v2124 = vrot.slane %v2123, 1
      %v2125 = vadd.f32 %v2123, %v2124
      %2126 = vst.msk [vmem:[%s268] sm:$0x1] %vm2023, %v2125
      %v2127 = vpack.c.bf16 %v1923, %v1922
      %v2128 = vpack.c.bf16 %v1925, %v1924
      %v2129 = vpack.c.bf16 %v1927, %v1926
      %v2130 = vpack.c.bf16 %v1929, %v1928
      %v2131 = vpack.c.bf16 %v1931, %v1930
      %v2132 = vpack.c.bf16 %v1933, %v1932
      %v2133 = vpack.c.bf16 %v1935, %v1934
      %v2134 = vpack.c.bf16 %v1937, %v1936
      %v2135 = vpack.c.bf16 %v1939, %v1938
      %v2136 = vpack.c.bf16 %v1941, %v1940
      %v2137 = vpack.c.bf16 %v1943, %v1942
      %v2138 = vpack.c.bf16 %v1945, %v1944
      %v2139 = vpack.c.bf16 %v1947, %v1946
      %v2140 = vpack.c.bf16 %v1949, %v1948
      %v2141 = vpack.c.bf16 %v1951, %v1950
      %v2142 = vpack.c.bf16 %v1953, %v1952
      %v2159 = vunpack.c.l.b16 %v2127
      %v2160 = vunpack.c.h.b16 %v2127
      %v2161 = vunpack.c.l.b16 %v2128
      %v2162 = vunpack.c.h.b16 %v2128
      %v2163 = vunpack.c.l.b16 %v2129
      %v2164 = vunpack.c.h.b16 %v2129
      %v2165 = vunpack.c.l.b16 %v2130
      %v2166 = vunpack.c.h.b16 %v2130
      %v2167 = vunpack.c.l.b16 %v2131
      %v2168 = vunpack.c.h.b16 %v2131
      %v2169 = vunpack.c.l.b16 %v2132
      %v2170 = vunpack.c.h.b16 %v2132
      %v2171 = vunpack.c.l.b16 %v2133
      %v2172 = vunpack.c.h.b16 %v2133
      %v2173 = vunpack.c.l.b16 %v2134
      %v2174 = vunpack.c.h.b16 %v2134
      %v2175 = vunpack.c.l.b16 %v2135
      %v2176 = vunpack.c.h.b16 %v2135
      %v2177 = vunpack.c.l.b16 %v2136
      %v2178 = vunpack.c.h.b16 %v2136
      %v2179 = vunpack.c.l.b16 %v2137
      %v2180 = vunpack.c.h.b16 %v2137
      %v2181 = vunpack.c.l.b16 %v2138
      %v2182 = vunpack.c.h.b16 %v2138
      %v2183 = vunpack.c.l.b16 %v2139
      %v2184 = vunpack.c.h.b16 %v2139
      %v2185 = vunpack.c.l.b16 %v2140
      %v2186 = vunpack.c.h.b16 %v2140
      %v2187 = vunpack.c.l.b16 %v2141
      %v2188 = vunpack.c.h.b16 %v2141
      %v2189 = vunpack.c.l.b16 %v2142
      %v2190 = vunpack.c.h.b16 %v2142
      %v2191 = vpack.c.b16 %v2159, %v2159
      %v2192 = vpack.c.b16 %v2160, %v2160
      %v2193 = vpack.c.b16 %v2161, %v2161
      %v2194 = vpack.c.b16 %v2162, %v2162
      %v2195 = vpack.c.b16 %v2163, %v2163
      %v2196 = vpack.c.b16 %v2164, %v2164
      %v2197 = vpack.c.b16 %v2165, %v2165
      %v2198 = vpack.c.b16 %v2166, %v2166
      %v2199 = vpack.c.b16 %v2167, %v2167
      %v2200 = vpack.c.b16 %v2168, %v2168
      %v2201 = vpack.c.b16 %v2169, %v2169
      %v2202 = vpack.c.b16 %v2170, %v2170
      %v2203 = vpack.c.b16 %v2171, %v2171
      %v2204 = vpack.c.b16 %v2172, %v2172
      %v2205 = vpack.c.b16 %v2173, %v2173
      %v2206 = vpack.c.b16 %v2174, %v2174
      %v2207 = vpack.c.b16 %v2175, %v2175
      %v2208 = vpack.c.b16 %v2176, %v2176
      %v2209 = vpack.c.b16 %v2177, %v2177
      %v2210 = vpack.c.b16 %v2178, %v2178
      %v2211 = vpack.c.b16 %v2179, %v2179
      %v2212 = vpack.c.b16 %v2180, %v2180
      %v2213 = vpack.c.b16 %v2181, %v2181
      %v2214 = vpack.c.b16 %v2182, %v2182
      %v2215 = vpack.c.b16 %v2183, %v2183
      %v2216 = vpack.c.b16 %v2184, %v2184
      %v2217 = vpack.c.b16 %v2185, %v2185
      %v2218 = vpack.c.b16 %v2186, %v2186
      %v2219 = vpack.c.b16 %v2187, %v2187
      %v2220 = vpack.c.b16 %v2188, %v2188
      %v2221 = vpack.c.b16 %v2189, %v2189
      %v2222 = vpack.c.b16 %v2190, %v2190
      %vm2255 = vcmask 27648
      %2256 = vst.msk [vmem:[%s262] sm:$0xf] %vm2255, %v2191
      %2257 = vst.msk [vmem:[%s262 + $0x4] sm:$0xf] %vm2255, %v2192
      %2258 = vst.msk [vmem:[%s262 + $0x8] sm:$0xf] %vm2255, %v2193
      %2259 = vst.msk [vmem:[%s262 + $0xc] sm:$0xf] %vm2255, %v2194
      %2260 = vst.msk [vmem:[%s262 + $0x10] sm:$0xf] %vm2255, %v2195
      %2261 = vst.msk [vmem:[%s262 + $0x14] sm:$0xf] %vm2255, %v2196
      %2262 = vst.msk [vmem:[%s262 + $0x18] sm:$0xf] %vm2255, %v2197
      %2263 = vst.msk [vmem:[%s262 + $0x1c] sm:$0xf] %vm2255, %v2198
      %2264 = vst.msk [vmem:[%s262 + $0x20] sm:$0xf] %vm2255, %v2199
      %2265 = vst.msk [vmem:[%s262 + $0x24] sm:$0xf] %vm2255, %v2200
      %2266 = vst.msk [vmem:[%s262 + $0x28] sm:$0xf] %vm2255, %v2201
      %2267 = vst.msk [vmem:[%s262 + $0x2c] sm:$0xf] %vm2255, %v2202
      %2268 = vst.msk [vmem:[%s262 + $0x30] sm:$0xf] %vm2255, %v2203
      %2269 = vst.msk [vmem:[%s262 + $0x34] sm:$0xf] %vm2255, %v2204
      %2270 = vst.msk [vmem:[%s262 + $0x38] sm:$0xf] %vm2255, %v2205
      %2271 = vst.msk [vmem:[%s262 + $0x3c] sm:$0xf] %vm2255, %v2206
      %2272 = vst.msk [vmem:[%s262 + $0x40] sm:$0xf] %vm2255, %v2207
      %2273 = vst.msk [vmem:[%s262 + $0x44] sm:$0xf] %vm2255, %v2208
      %2274 = vst.msk [vmem:[%s262 + $0x48] sm:$0xf] %vm2255, %v2209
      %2275 = vst.msk [vmem:[%s262 + $0x4c] sm:$0xf] %vm2255, %v2210
      %2276 = vst.msk [vmem:[%s262 + $0x50] sm:$0xf] %vm2255, %v2211
      %2277 = vst.msk [vmem:[%s262 + $0x54] sm:$0xf] %vm2255, %v2212
      %2278 = vst.msk [vmem:[%s262 + $0x58] sm:$0xf] %vm2255, %v2213
      %2279 = vst.msk [vmem:[%s262 + $0x5c] sm:$0xf] %vm2255, %v2214
      %2280 = vst.msk [vmem:[%s262 + $0x60] sm:$0xf] %vm2255, %v2215
      %2281 = vst.msk [vmem:[%s262 + $0x64] sm:$0xf] %vm2255, %v2216
      %2282 = vst.msk [vmem:[%s262 + $0x68] sm:$0xf] %vm2255, %v2217
      %2283 = vst.msk [vmem:[%s262 + $0x6c] sm:$0xf] %vm2255, %v2218
      %2284 = vst.msk [vmem:[%s262 + $0x70] sm:$0xf] %vm2255, %v2219
      %2285 = vst.msk [vmem:[%s262 + $0x74] sm:$0xf] %vm2255, %v2220
      %2286 = vst.msk [vmem:[%s262 + $0x78] sm:$0xf] %vm2255, %v2221
      %2287 = vst.msk [vmem:[%s262 + $0x7c] sm:$0xf] %vm2255, %v2222
      %p2288 = scmp.lt.s32.totalorder %s18, 1
      %s2289 = scalar_select %p2288, %s18, 1
      %s2290 = smul.addr %s2289, 32
      %s2291 = smul.addr %s2290, 4
      %s2292 = scalar_lea.vmem %s4, %s2291
      %p2293 = scmp.lt.s32.totalorder %s18, 1
      %s2294 = scalar_select %p2293, %s18, 1
      %s2295 = scalar_lea.vmem %s5, %s2294
      %p2296 = scmp.lt.s32.totalorder %s18, 1
      %s2297 = scalar_select %p2296, %s18, 1
      %s2298 = scalar_lea.vmem %s6, %s2297
      // Predicated region
      $region37: #{basic_block.4} parent=35 // pred_check
        %p2299 = pneg %p125
      $region38: #{basic_block.4} parent=35 // pred_check_branch
        %2301 = sbr.rel (%p2299) target = $region40
      $region39: #{basic_block.4} parent=35 // pred_region
        _
      $region40: #{basic_block.4} parent=35 // pred_fallthru
        _
      // Predicated region
      $region41: #{basic_block.4} parent=35 // pred_check
        %p2302 = pneg %p151
      $region42: #{basic_block.4} parent=35 // pred_check_branch
        %2304 = sbr.rel (%p2302) target = $region44
      $region43: #{basic_block.4} parent=35 // pred_region
        _
      $region44: #{basic_block.4} parent=35 // pred_fallthru
        _
      // Predicated region
      $region45: #{basic_block.4} parent=35 // pred_check
        %p2305 = pneg %p177
      $region46: #{basic_block.4} parent=35 // pred_check_branch
        %2307 = sbr.rel (%p2305) target = $region48
      $region47: #{basic_block.4} parent=35 // pred_region
        _
      $region48: #{basic_block.4} parent=35 // pred_fallthru
        _
    $region36: #{basic_block.4} parent=5 // pred_fallthru
      _
    %p2308 = scmp.le.s32.totalorder 2, %s13
    // Predicated region
    $region49: #{basic_block.4} parent=5 // pred_check
      %p2309 = pneg %p2308
    $region50: #{basic_block.4} parent=5 // pred_check_branch
      %2311 = sbr.rel (%p2309) target = $region52
    $region51: #{basic_block.4} parent=5 // pred_region
      %s2312 = ssub.s32 %s13, 2
      // Predicated region
      $region53: #{basic_block.4} parent=51 // pred_check
        %p2313 = pneg %p131
      $region54: #{basic_block.4} parent=51 // pred_check_branch
        %2315 = sbr.rel (%p2313) target = $region56
      $region55: #{basic_block.4} parent=51 // pred_region
        %p2316 = scmp.lt.s32.totalorder %s19, 1
        %s2317 = scalar_select %p2316, %s19, 1
        %s2318 = smul.addr %s2317, 32
        %s2319 = smul.addr %s2318, 4
        %s2320 = scalar_lea.vmem %s4, %s2319
      $region56: #{basic_block.4} parent=51 // pred_fallthru
        _
      // Predicated region
      $region57: #{basic_block.4} parent=51 // pred_check
        %p2321 = pneg %p157
      $region58: #{basic_block.4} parent=51 // pred_check_branch
        %2323 = sbr.rel (%p2321) target = $region60
      $region59: #{basic_block.4} parent=51 // pred_region
        %p2324 = scmp.lt.s32.totalorder %s19, 1
        %s2325 = scalar_select %p2324, %s19, 1
        %s2326 = scalar_lea.vmem %s5, %s2325
      $region60: #{basic_block.4} parent=51 // pred_fallthru
        _
      // Predicated region
      $region61: #{basic_block.4} parent=51 // pred_check
        %p2327 = pneg %p183
      $region62: #{basic_block.4} parent=51 // pred_check_branch
        %2329 = sbr.rel (%p2327) target = $region64
      $region63: #{basic_block.4} parent=51 // pred_region
        %p2330 = scmp.lt.s32.totalorder %s19, 1
        %s2331 = scalar_select %p2330, %s19, 1
        %s2332 = scalar_lea.vmem %s6, %s2331
      $region64: #{basic_block.4} parent=51 // pred_fallthru
        _
    $region52: #{basic_block.4} parent=5 // pred_fallthru
      _
  $region6: #{basic_block.4} parent=0 // loop_footer
    %s17 = sadd.s32 1, %s13
  $region7: #{basic_block.4} parent=0 // loop_footer_branch
    %12 = sbr.rel target = $region3
  $region8: #{basic_block.4} parent=0 // loop_exit
    _

</llo_original>
